<compile_context>
chip_gen: v7x
topology: tpu7x:2x2x1
jax: 0.10.0
libtpu: 0.0.40
codegen_flags: <defaults>
</compile_context>

<pallas_src>
import functools

import jax
import jax.numpy as jnp
from jax import lax
from jax.experimental import pallas as pl
from jax.experimental.pallas import tpu as pltpu

EPS = 1e-5
LANE = 128


def _round_up(x, m):
  return (x + m - 1) // m * m


def _vmem_capacity_bytes():
  try:
    info = pltpu.get_tpu_info()
    cap = getattr(info, "vmem_capacity_bytes", None)
    if cap:
      return int(cap)
  except Exception:
    pass
  return 64 * 1024 * 1024  # conservative (v7x-sized) fallback


def _mxu_target():
  """Target matmul tile edge: 256 on v6e/v7x (256x256 MXU), 128 otherwise."""
  try:
    kind = jax.devices()[0].device_kind.lower()
  except Exception:
    kind = ""
  if "v6" in kind or "v7" in kind:
    return 256
  return 128


def _select_tiles(h_out, w_out, c_out_p):
  target = _mxu_target()
  t_co = 256 if (target >= 256 and c_out_p % 256 == 0) else 128
  cap = min(max(1, target // max(w_out, 1)), h_out)
  tr = 1
  for t in range(cap, 0, -1):
    if h_out % t == 0:
      tr = t
      break
  return tr, t_co


def _phase_split(act, stride, h_out, w_out):
  """Zero-pad (conv padding=1) and split into stride*stride phase planes.

  Returns an array of shape (n * stride**2, h_ph, w_ph, c) where tap (dy, dx)
  of a stride-`stride` 3x3 convolution reads phase plane
  (dy % stride) * stride + (dx % stride) at contiguous spatial offset
  (dy // stride, dx // stride).  For stride == 1 this is just the padded
  activation with a size-1 phase group.
  """
  s = stride
  n, h, w, c = act.shape
  h_ph = h_out + 2 // s
  w_ph = w_out + 2 // s
  a = jnp.pad(act, ((0, 0), (1, s * h_ph - h - 1), (1, s * w_ph - w - 1),
                    (0, 0)))
  a = a.reshape(n, h_ph, s, w_ph, s, c)
  a = jnp.transpose(a, (0, 2, 4, 1, 3, 5))          # (n, py, px, i, j, c)
  return a.reshape(n * s * s, h_ph, w_ph, c)


# ---------------------------------------------------------------------------
# Kernel bodies: 3x3 conv (9 tap matmuls) + fused epilogue
# ---------------------------------------------------------------------------
def _make_kernel(*, tr, w_out, c_in, c_sc, t_co, stride, mode):
  s = stride
  m = tr * w_out

  def conv_taps(xp_ref, w_ref):
    r = pl.program_id(2)
    row0 = pl.multiple_of(r * tr, tr)
    acc = jnp.zeros((m, t_co), jnp.float32)
    if s == 1:
      # Hoist the (sublane-misaligned) dx column shift out of the dy loop.
      for dx in range(3):
        xcol = xp_ref[0, pl.ds(row0, tr + 2), pl.ds(dx, w_out), :]
        for dy in range(3):
          acc = acc + lax.dot_general(
              xcol[dy:dy + tr].reshape(m, c_in), w_ref[dy, dx],
              (((1,), (0,)), ((), ())), preferred_element_type=jnp.float32)
    else:
      # Stride > 1: every tap lives in its own phase plane -> contiguous load.
      for dy in range(3):
        for dx in range(3):
          ph = (dy % s) * s + (dx % s)
          patch = xp_ref[ph, pl.ds(row0 + dy // s, tr), pl.ds(dx // s, w_out),
                         :]
          acc = acc + lax.dot_general(
              patch.reshape(m, c_in), w_ref[dy, dx],
              (((1,), (0,)), ((), ())), preferred_element_type=jnp.float32)
    return acc

  if mode == "bn_act":        # stage 1: conv1 + b1, then bn2 + relu fused
    def kernel(xp_ref, w_ref, b_ref, scale_ref, shift_ref, o_ref):
      acc = conv_taps(xp_ref, w_ref)
      res = (acc + b_ref[0]) * scale_ref[0] + shift_ref[0]
      res = jnp.maximum(res, 0.0)
      o_ref[0] = res.reshape(tr, w_out, t_co).astype(o_ref.dtype)
  elif mode == "identity":    # stage 2: conv2 + b2 + x
    def kernel(xp_ref, xs_ref, w_ref, b_ref, o_ref):
      acc = conv_taps(xp_ref, w_ref)
      res = acc + b_ref[0] + xs_ref[0].reshape(m, t_co).astype(jnp.float32)
      o_ref[0] = res.reshape(tr, w_out, t_co).astype(o_ref.dtype)
  elif mode == "proj":        # stage 2: conv2 + b2 + (x @ ws + bs)
    def kernel(xp_ref, xs_ref, w_ref, ws_ref, b_ref, bs_ref, o_ref):
      acc = conv_taps(xp_ref, w_ref)
      sc = lax.dot_general(
          xs_ref[0].reshape(m, c_sc), ws_ref[...],
          (((1,), (0,)), ((), ())), preferred_element_type=jnp.float32)
      res = acc + b_ref[0] + sc + bs_ref[0]
      o_ref[0] = res.reshape(tr, w_out, t_co).astype(o_ref.dtype)
  else:
    raise ValueError(mode)
  return kernel


# ---------------------------------------------------------------------------
# pallas_call wrapper for one fused conv stage
# ---------------------------------------------------------------------------
def _conv3x3(xp, w_hwio, bias, *, stride, h_out, w_out, mode,
             bn_scale=None, bn_shift=None, xs=None, ws=None, bs=None,
             out_dtype=jnp.float32):
  s = stride
  n_phase_batch, h_ph, w_ph, c_in = xp.shape
  n = n_phase_batch // (s * s)
  c_out_p = w_hwio.shape[-1]
  assert c_in % LANE == 0 and c_out_p % LANE == 0
  tr, t_co = _select_tiles(h_out, w_out, c_out_p)
  c_sc = xs.shape[-1] if xs is not None else 0

  kernel = _make_kernel(tr=tr, w_out=w_out, c_in=c_in, c_sc=c_sc, t_co=t_co,
                        stride=s, mode=mode)

  # Row tile innermost: the weight tile (depends only on ci) and the phase
  # slab (depends only on ni) stay resident across the inner loop.
  grid = (n, c_out_p // t_co, h_out // tr)

  in_specs = [pl.BlockSpec((s * s, h_ph, w_ph, c_in),
                           lambda ni, ci, ri: (ni, 0, 0, 0))]
  args = [xp]
  if mode == "identity":
    in_specs.append(pl.BlockSpec((1, tr, w_out, t_co),
                                 lambda ni, ci, ri: (ni, ri, 0, ci)))
    args.append(xs)
  elif mode == "proj":
    in_specs.append(pl.BlockSpec((1, tr, w_out, c_sc),
                                 lambda ni, ci, ri: (ni, ri, 0, 0)))
    args.append(xs)
  in_specs.append(pl.BlockSpec((3, 3, c_in, t_co),
                               lambda ni, ci, ri: (0, 0, 0, ci)))
  args.append(w_hwio)
  if mode == "proj":
    in_specs.append(pl.BlockSpec((c_sc, t_co), lambda ni, ci, ri: (0, ci)))
    args.append(ws)
  in_specs.append(pl.BlockSpec((1, t_co), lambda ni, ci, ri: (0, ci)))
  args.append(bias)
  if mode == "bn_act":
    in_specs.append(pl.BlockSpec((1, t_co), lambda ni, ci, ri: (0, ci)))
    in_specs.append(pl.BlockSpec((1, t_co), lambda ni, ci, ri: (0, ci)))
    args += [bn_scale, bn_shift]
  if mode == "proj":
    in_specs.append(pl.BlockSpec((1, t_co), lambda ni, ci, ri: (0, ci)))
    args.append(bs)

  out_specs = pl.BlockSpec((1, tr, w_out, t_co),
                           lambda ni, ci, ri: (ni, ri, 0, ci))

  # VMEM budget: every input/output block is double-buffered by the pipeline.
  slab = s * s * h_ph * w_ph * c_in * 2                       # bf16 phase slab
  wtile = 9 * c_in * t_co * 2                                 # bf16 weights
  xstile = tr * w_out * max(c_sc, t_co) * 2 if xs is not None else 0
  otile = tr * w_out * t_co * jnp.dtype(out_dtype).itemsize
  vecs = 4 * t_co * 4
  est = 2 * (slab + wtile + xstile + otile + vecs) + (8 << 20)
  cap = (_vmem_capacity_bytes() * 3) // 4                     # ~48MB on v7x
  vmem_limit = int(min(max(est, 32 << 20), cap))

  return pl.pallas_call(
      kernel,
      out_shape=jax.ShapeDtypeStruct((n, h_out, w_out, c_out_p), out_dtype),
      grid=grid,
      in_specs=in_specs,
      out_specs=out_specs,
      compiler_params=pltpu.CompilerParams(
          dimension_semantics=("parallel", "parallel", "parallel"),
          vmem_limit_bytes=vmem_limit),
  )(*args)


# ---------------------------------------------------------------------------
# wide_basic forward (eval mode)
# ---------------------------------------------------------------------------
def _fold_bn(gamma, beta, mean, var):
  scale = gamma / jnp.sqrt(var + EPS)
  shift = beta - mean * scale
  return scale, shift


def _pad_vec(v, cp):
  return jnp.pad(v, (0, cp - v.shape[0])).reshape(1, cp).astype(jnp.float32)


def _pad_w(wt, ci_p, co_p):
  _, _, ci, co = wt.shape
  return jnp.pad(wt, ((0, 0), (0, 0), (0, ci_p - ci),
                      (0, co_p - co))).astype(jnp.bfloat16)


def wide_basic_forward(x_nchw, params, stride):
  x = jnp.transpose(x_nchw, (0, 2, 3, 1)).astype(jnp.float32)  # NCHW -> NHWC
  n, h, w, c_in = x.shape
  c_mid = params["w1"].shape[-1]
  c_out = params["w2"].shape[-1]
  has_proj = "ws" in params

  c_in_p = _round_up(c_in, LANE)
  c_mid_p = _round_up(c_mid, LANE)
  c_out_p = _round_up(c_out, LANE)

  s1, sh1 = _fold_bn(params["bn1_g"], params["bn1_b"], params["bn1_m"],
                     params["bn1_v"])
  s2, sh2 = _fold_bn(params["bn2_g"], params["bn2_b"], params["bn2_m"],
                     params["bn2_v"])

  # ---- stage 1: bn1+relu in the wrapper (fused with pad/cast), then
  #      conv1 + b1 + bn2 + relu fused in kernel A; bf16 output -------------
  act1 = jnp.maximum(x * s1 + sh1, 0.0)
  act1 = jnp.pad(act1, ((0, 0), (0, 0), (0, 0),
                        (0, c_in_p - c_in))).astype(jnp.bfloat16)
  xp1 = _phase_split(act1, 1, h, w)
  h1act = _conv3x3(
      xp1, _pad_w(params["w1"], c_in_p, c_mid_p), _pad_vec(params["b1"], c_mid_p),
      stride=1, h_out=h, w_out=w, mode="bn_act",
      bn_scale=_pad_vec(s2, c_mid_p), bn_shift=_pad_vec(sh2, c_mid_p),
      out_dtype=jnp.bfloat16)
  # TODO(synk): training-mode dropout (scaled Bernoulli mask) would go here.

  # ---- stage 2: conv2(stride) + b2 + shortcut, fused in kernel B -----------
  h_out = (h - 1) // stride + 1
  w_out = (w - 1) // stride + 1
  xp2 = _phase_split(h1act, stride, h_out, w_out)
  w2p = _pad_w(params["w2"], c_mid_p, c_out_p)
  b2p = _pad_vec(params["b2"], c_out_p)

  if has_proj:
    xs = x[:, ::stride, ::stride, :]
    xs = jnp.pad(xs, ((0, 0), (0, 0), (0, 0),
                      (0, c_in_p - c_in))).astype(jnp.bfloat16)
    wsp = jnp.pad(params["ws"], ((0, c_in_p - c_in),
                                 (0, c_out_p - c_out))).astype(jnp.bfloat16)
    out = _conv3x3(xp2, w2p, b2p, stride=stride, h_out=h_out, w_out=w_out,
                   mode="proj", xs=xs, ws=wsp, bs=_pad_vec(params["bs"], c_out_p),
                   out_dtype=jnp.float32)
  else:
    xs = jnp.pad(x, ((0, 0), (0, 0), (0, 0),
                     (0, c_out_p - c_in))).astype(jnp.bfloat16)
    out = _conv3x3(xp2, w2p, b2p, stride=stride, h_out=h_out, w_out=w_out,
                   mode="identity", xs=xs, out_dtype=jnp.float32)

  if c_out != c_out_p:
    out = out[..., :c_out]
  return jnp.transpose(out, (0, 3, 1, 2))  # NHWC -> NCHW


# ---------------------------------------------------------------------------
# Pure-JAX reference (correctness check)
# ---------------------------------------------------------------------------
def _ref_forward(x_nchw, params, stride):
  dn = ("NHWC", "HWIO", "NHWC")
  x = jnp.transpose(x_nchw, (0, 2, 3, 1)).astype(jnp.float32)

  def bnr(v, g, b, m, var):
    return jnp.maximum((v - m) / jnp.sqrt(var + EPS) * g + b, 0.0)

  h = bnr(x, params["bn1_g"], params["bn1_b"], params["bn1_m"], params["bn1_v"])
  h = lax.conv_general_dilated(h, params["w1"], (1, 1), ((1, 1), (1, 1)),
                               dimension_numbers=dn) + params["b1"]
  h = bnr(h, params["bn2_g"], params["bn2_b"], params["bn2_m"], params["bn2_v"])
  h = lax.conv_general_dilated(h, params["w2"], (stride, stride),
                               ((1, 1), (1, 1)),
                               dimension_numbers=dn) + params["b2"]
  if "ws" in params:
    cin, cout = params["ws"].shape
    sc = lax.conv_general_dilated(x, params["ws"].reshape(1, 1, cin, cout),
                                  (stride, stride), "VALID",
                                  dimension_numbers=dn) + params["bs"]
  else:
    sc = x[:, ::stride, ::stride, :]
  return jnp.transpose(h + sc, (0, 3, 1, 2))


# ---------------------------------------------------------------------------
# Deterministic parameter construction
# ---------------------------------------------------------------------------
def make_params(key, in_planes, planes, stride):
  ks = jax.random.split(key, 16)
  p = {
      "bn1_g": jax.random.uniform(ks[0], (in_planes,), minval=0.5, maxval=1.5),
      "bn1_b": 0.1 * jax.random.normal(ks[1], (in_planes,)),
      "bn1_m": 0.1 * jax.random.normal(ks[2], (in_planes,)),
      "bn1_v": jax.random.uniform(ks[3], (in_planes,), minval=0.5, maxval=1.5),
      "w1": 0.1 * jax.random.normal(ks[4], (3, 3, in_planes, planes)),
      "b1": 0.1 * jax.random.normal(ks[5], (planes,)),
      "bn2_g": jax.random.uniform(ks[6], (planes,), minval=0.5, maxval=1.5),
      "bn2_b": 0.1 * jax.random.normal(ks[7], (planes,)),
      "bn2_m": 0.1 * jax.random.normal(ks[8], (planes,)),
      "bn2_v": jax.random.uniform(ks[9], (planes,), minval=0.5, maxval=1.5),
      "w2": 0.05 * jax.random.normal(ks[10], (3, 3, planes, planes)),
      "b2": 0.1 * jax.random.normal(ks[11], (planes,)),
  }
  if stride != 1 or in_planes != planes:
    p["ws"] = 0.1 * jax.random.normal(ks[12], (in_planes, planes))
    p["bs"] = 0.1 * jax.random.normal(ks[13], (planes,))
  return {k: v.astype(jnp.float32) for k, v in p.items()}


if __name__ == "__main__":
  key = jax.random.PRNGKey(0)
  N, H, W = 2, 16, 16

  configs = [
      (4, 8, 1),    # projection shortcut (channel change), stride 1
      (8, 8, 1),    # identity shortcut
      (8, 16, 2),   # projection shortcut + stride-2 downsample
  ]
  for idx, (in_planes, planes, stride) in enumerate(configs):
    kx, kp, key = jax.random.split(key, 3)
    x = jax.random.normal(kx, (N, in_planes, H, W), dtype=jnp.float32)
    params = make_params(kp, in_planes, planes, stride)

    fwd = jax.jit(functools.partial(wide_basic_forward, stride=stride))
    out = jax.block_until_ready(fwd(x, params))
    ref = jax.block_until_ready(_ref_forward(x, params, stride))

    assert out.shape == ref.shape, (idx, out.shape, ref.shape)
    # bf16 MXU operands / bf16 intermediates (f32 accumulation) vs f32 ref.
    assert jnp.allclose(out, ref, rtol=5e-2, atol=5e-2), (
        idx, float(jnp.max(jnp.abs(out - ref))))

  print("KERNEL_OK")
</pallas_src>

<mosaic_0001>
module attributes {stable_mosaic.version = 11 : i64} {
  func.func @kernel(%arg0: i32, %arg1: i32, %arg2: i32, %arg3: memref<1x18x18x128xbf16, #tpu.memory_space<vmem>>, %arg4: memref<3x3x128x128xbf16, #tpu.memory_space<vmem>>, %arg5: memref<1x128xf32, #tpu.memory_space<vmem>>, %arg6: memref<1x128xf32, #tpu.memory_space<vmem>>, %arg7: memref<1x128xf32, #tpu.memory_space<vmem>>, %arg8: memref<1x8x16x128xbf16, #tpu.memory_space<vmem>>) attributes {dimension_semantics = [#tpu.dimension_semantics<parallel>, #tpu.dimension_semantics<parallel>, #tpu.dimension_semantics<parallel>], iteration_bounds = array<i64: 2, 1, 2>, scalar_prefetch = 0 : i64, scratch_operands = 0 : i64, tpu.core_type = #tpu.core_type<tc>, window_params = [{transform_indices = @transform_0, window_bounds = array<i64: 1, 18, 18, 128>}, {transform_indices = @transform_1, window_bounds = array<i64: 3, 3, 128, 128>}, {transform_indices = @transform_2, window_bounds = array<i64: 1, 128>}, {transform_indices = @transform_3, window_bounds = array<i64: 1, 128>}, {transform_indices = @transform_4, window_bounds = array<i64: 1, 128>}, {transform_indices = @transform_5, window_bounds = array<i64: 1, 8, 16, 128>}]} {
    %c8_i32 = arith.constant 8 : i32
    %0 = arith.muli %arg2, %c8_i32 : i32
    %1 = tpu.assume_multiple %0, 8 : i32
    %cst = arith.constant 0.000000e+00 : f32
    %2 = vector.broadcast %cst : f32 to vector<128x128xf32>
    %c0 = arith.constant 0 : index
    %3 = arith.index_cast %1 : i32 to index
    %c0_0 = arith.constant 0 : index
    %c0_1 = arith.constant 0 : index
    %4 = vector.load %arg3[%c0, %3, %c0_0, %c0_1] : memref<1x18x18x128xbf16, #tpu.memory_space<vmem>>, vector<1x10x16x128xbf16>
    %5 = vector.shape_cast %4 : vector<1x10x16x128xbf16> to vector<10x16x128xbf16>
    %6 = vector.extract_strided_slice %5 {offsets = [0, 0, 0], sizes = [8, 16, 128], strides = [1, 1, 1]} : vector<10x16x128xbf16> to vector<8x16x128xbf16>
    %7 = vector.shape_cast %6 : vector<8x16x128xbf16> to vector<128x128xbf16>
    %c0_2 = arith.constant 0 : index
    %c0_3 = arith.constant 0 : index
    %c0_4 = arith.constant 0 : index
    %c0_5 = arith.constant 0 : index
    %8 = vector.load %arg4[%c0_2, %c0_3, %c0_4, %c0_5] : memref<3x3x128x128xbf16, #tpu.memory_space<vmem>>, vector<1x1x128x128xbf16>
    %9 = vector.shape_cast %8 : vector<1x1x128x128xbf16> to vector<128x128xbf16>
    %cst_6 = arith.constant dense<0.000000e+00> : vector<128x128xf32>
    %10 = tpu.matmul %7, %9, %cst_6 {dimension_numbers = #tpu.dot_dimension_numbers<[1], [0], [0], [1], [0, 0, 1, 1], [], []>} : vector<128x128xbf16>, vector<128x128xbf16>, vector<128x128xf32> -> vector<128x128xf32>
    %11 = arith.addf %2, %10 : vector<128x128xf32>
    %12 = vector.extract_strided_slice %5 {offsets = [1, 0, 0], sizes = [8, 16, 128], strides = [1, 1, 1]} : vector<10x16x128xbf16> to vector<8x16x128xbf16>
    %13 = vector.shape_cast %12 : vector<8x16x128xbf16> to vector<128x128xbf16>
    %c1 = arith.constant 1 : index
    %c0_7 = arith.constant 0 : index
    %c0_8 = arith.constant 0 : index
    %c0_9 = arith.constant 0 : index
    %14 = vector.load %arg4[%c1, %c0_7, %c0_8, %c0_9] : memref<3x3x128x128xbf16, #tpu.memory_space<vmem>>, vector<1x1x128x128xbf16>
    %15 = vector.shape_cast %14 : vector<1x1x128x128xbf16> to vector<128x128xbf16>
    %cst_10 = arith.constant dense<0.000000e+00> : vector<128x128xf32>
    %16 = tpu.matmul %13, %15, %cst_10 {dimension_numbers = #tpu.dot_dimension_numbers<[1], [0], [0], [1], [0, 0, 1, 1], [], []>} : vector<128x128xbf16>, vector<128x128xbf16>, vector<128x128xf32> -> vector<128x128xf32>
    %17 = arith.addf %11, %16 : vector<128x128xf32>
    %18 = vector.extract_strided_slice %5 {offsets = [2, 0, 0], sizes = [8, 16, 128], strides = [1, 1, 1]} : vector<10x16x128xbf16> to vector<8x16x128xbf16>
    %19 = vector.shape_cast %18 : vector<8x16x128xbf16> to vector<128x128xbf16>
    %c2 = arith.constant 2 : index
    %c0_11 = arith.constant 0 : index
    %c0_12 = arith.constant 0 : index
    %c0_13 = arith.constant 0 : index
    %20 = vector.load %arg4[%c2, %c0_11, %c0_12, %c0_13] : memref<3x3x128x128xbf16, #tpu.memory_space<vmem>>, vector<1x1x128x128xbf16>
    %21 = vector.shape_cast %20 : vector<1x1x128x128xbf16> to vector<128x128xbf16>
    %cst_14 = arith.constant dense<0.000000e+00> : vector<128x128xf32>
    %22 = tpu.matmul %19, %21, %cst_14 {dimension_numbers = #tpu.dot_dimension_numbers<[1], [0], [0], [1], [0, 0, 1, 1], [], []>} : vector<128x128xbf16>, vector<128x128xbf16>, vector<128x128xf32> -> vector<128x128xf32>
    %23 = arith.addf %17, %22 : vector<128x128xf32>
    %c0_15 = arith.constant 0 : index
    %24 = arith.index_cast %1 : i32 to index
    %c1_16 = arith.constant 1 : index
    %c0_17 = arith.constant 0 : index
    %25 = vector.load %arg3[%c0_15, %24, %c1_16, %c0_17] : memref<1x18x18x128xbf16, #tpu.memory_space<vmem>>, vector<1x10x16x128xbf16>
    %26 = vector.shape_cast %25 : vector<1x10x16x128xbf16> to vector<10x16x128xbf16>
    %27 = vector.extract_strided_slice %26 {offsets = [0, 0, 0], sizes = [8, 16, 128], strides = [1, 1, 1]} : vector<10x16x128xbf16> to vector<8x16x128xbf16>
    %28 = vector.shape_cast %27 : vector<8x16x128xbf16> to vector<128x128xbf16>
    %c0_18 = arith.constant 0 : index
    %c1_19 = arith.constant 1 : index
    %c0_20 = arith.constant 0 : index
    %c0_21 = arith.constant 0 : index
    %29 = vector.load %arg4[%c0_18, %c1_19, %c0_20, %c0_21] : memref<3x3x128x128xbf16, #tpu.memory_space<vmem>>, vector<1x1x128x128xbf16>
    %30 = vector.shape_cast %29 : vector<1x1x128x128xbf16> to vector<128x128xbf16>
    %cst_22 = arith.constant dense<0.000000e+00> : vector<128x128xf32>
    %31 = tpu.matmul %28, %30, %cst_22 {dimension_numbers = #tpu.dot_dimension_numbers<[1], [0], [0], [1], [0, 0, 1, 1], [], []>} : vector<128x128xbf16>, vector<128x128xbf16>, vector<128x128xf32> -> vector<128x128xf32>
    %32 = arith.addf %23, %31 : vector<128x128xf32>
    %33 = vector.extract_strided_slice %26 {offsets = [1, 0, 0], sizes = [8, 16, 128], strides = [1, 1, 1]} : vector<10x16x128xbf16> to vector<8x16x128xbf16>
    %34 = vector.shape_cast %33 : vector<8x16x128xbf16> to vector<128x128xbf16>
    %c1_23 = arith.constant 1 : index
    %c1_24 = arith.constant 1 : index
    %c0_25 = arith.constant 0 : index
    %c0_26 = arith.constant 0 : index
    %35 = vector.load %arg4[%c1_23, %c1_24, %c0_25, %c0_26] : memref<3x3x128x128xbf16, #tpu.memory_space<vmem>>, vector<1x1x128x128xbf16>
    %36 = vector.shape_cast %35 : vector<1x1x128x128xbf16> to vector<128x128xbf16>
    %cst_27 = arith.constant dense<0.000000e+00> : vector<128x128xf32>
    %37 = tpu.matmul %34, %36, %cst_27 {dimension_numbers = #tpu.dot_dimension_numbers<[1], [0], [0], [1], [0, 0, 1, 1], [], []>} : vector<128x128xbf16>, vector<128x128xbf16>, vector<128x128xf32> -> vector<128x128xf32>
    %38 = arith.addf %32, %37 : vector<128x128xf32>
    %39 = vector.extract_strided_slice %26 {offsets = [2, 0, 0], sizes = [8, 16, 128], strides = [1, 1, 1]} : vector<10x16x128xbf16> to vector<8x16x128xbf16>
    %40 = vector.shape_cast %39 : vector<8x16x128xbf16> to vector<128x128xbf16>
    %c2_28 = arith.constant 2 : index
    %c1_29 = arith.constant 1 : index
    %c0_30 = arith.constant 0 : index
    %c0_31 = arith.constant 0 : index
    %41 = vector.load %arg4[%c2_28, %c1_29, %c0_30, %c0_31] : memref<3x3x128x128xbf16, #tpu.memory_space<vmem>>, vector<1x1x128x128xbf16>
    %42 = vector.shape_cast %41 : vector<1x1x128x128xbf16> to vector<128x128xbf16>
    %cst_32 = arith.constant dense<0.000000e+00> : vector<128x128xf32>
    %43 = tpu.matmul %40, %42, %cst_32 {dimension_numbers = #tpu.dot_dimension_numbers<[1], [0], [0], [1], [0, 0, 1, 1], [], []>} : vector<128x128xbf16>, vector<128x128xbf16>, vector<128x128xf32> -> vector<128x128xf32>
    %44 = arith.addf %38, %43 : vector<128x128xf32>
    %c0_33 = arith.constant 0 : index
    %45 = arith.index_cast %1 : i32 to index
    %c2_34 = arith.constant 2 : index
    %c0_35 = arith.constant 0 : index
    %46 = vector.load %arg3[%c0_33, %45, %c2_34, %c0_35] : memref<1x18x18x128xbf16, #tpu.memory_space<vmem>>, vector<1x10x16x128xbf16>
    %47 = vector.shape_cast %46 : vector<1x10x16x128xbf16> to vector<10x16x128xbf16>
    %48 = vector.extract_strided_slice %47 {offsets = [0, 0, 0], sizes = [8, 16, 128], strides = [1, 1, 1]} : vector<10x16x128xbf16> to vector<8x16x128xbf16>
    %49 = vector.shape_cast %48 : vector<8x16x128xbf16> to vector<128x128xbf16>
    %c0_36 = arith.constant 0 : index
    %c2_37 = arith.constant 2 : index
    %c0_38 = arith.constant 0 : index
    %c0_39 = arith.constant 0 : index
    %50 = vector.load %arg4[%c0_36, %c2_37, %c0_38, %c0_39] : memref<3x3x128x128xbf16, #tpu.memory_space<vmem>>, vector<1x1x128x128xbf16>
    %51 = vector.shape_cast %50 : vector<1x1x128x128xbf16> to vector<128x128xbf16>
    %cst_40 = arith.constant dense<0.000000e+00> : vector<128x128xf32>
    %52 = tpu.matmul %49, %51, %cst_40 {dimension_numbers = #tpu.dot_dimension_numbers<[1], [0], [0], [1], [0, 0, 1, 1], [], []>} : vector<128x128xbf16>, vector<128x128xbf16>, vector<128x128xf32> -> vector<128x128xf32>
    %53 = arith.addf %44, %52 : vector<128x128xf32>
    %54 = vector.extract_strided_slice %47 {offsets = [1, 0, 0], sizes = [8, 16, 128], strides = [1, 1, 1]} : vector<10x16x128xbf16> to vector<8x16x128xbf16>
    %55 = vector.shape_cast %54 : vector<8x16x128xbf16> to vector<128x128xbf16>
    %c1_41 = arith.constant 1 : index
    %c2_42 = arith.constant 2 : index
    %c0_43 = arith.constant 0 : index
    %c0_44 = arith.constant 0 : index
    %56 = vector.load %arg4[%c1_41, %c2_42, %c0_43, %c0_44] : memref<3x3x128x128xbf16, #tpu.memory_space<vmem>>, vector<1x1x128x128xbf16>
    %57 = vector.shape_cast %56 : vector<1x1x128x128xbf16> to vector<128x128xbf16>
    %cst_45 = arith.constant dense<0.000000e+00> : vector<128x128xf32>
    %58 = tpu.matmul %55, %57, %cst_45 {dimension_numbers = #tpu.dot_dimension_numbers<[1], [0], [0], [1], [0, 0, 1, 1], [], []>} : vector<128x128xbf16>, vector<128x128xbf16>, vector<128x128xf32> -> vector<128x128xf32>
    %59 = arith.addf %53, %58 : vector<128x128xf32>
    %60 = vector.extract_strided_slice %47 {offsets = [2, 0, 0], sizes = [8, 16, 128], strides = [1, 1, 1]} : vector<10x16x128xbf16> to vector<8x16x128xbf16>
    %61 = vector.shape_cast %60 : vector<8x16x128xbf16> to vector<128x128xbf16>
    %c2_46 = arith.constant 2 : index
    %c2_47 = arith.constant 2 : index
    %c0_48 = arith.constant 0 : index
    %c0_49 = arith.constant 0 : index
    %62 = vector.load %arg4[%c2_46, %c2_47, %c0_48, %c0_49] : memref<3x3x128x128xbf16, #tpu.memory_space<vmem>>, vector<1x1x128x128xbf16>
    %63 = vector.shape_cast %62 : vector<1x1x128x128xbf16> to vector<128x128xbf16>
    %cst_50 = arith.constant dense<0.000000e+00> : vector<128x128xf32>
    %64 = tpu.matmul %61, %63, %cst_50 {dimension_numbers = #tpu.dot_dimension_numbers<[1], [0], [0], [1], [0, 0, 1, 1], [], []>} : vector<128x128xbf16>, vector<128x128xbf16>, vector<128x128xf32> -> vector<128x128xf32>
    %65 = arith.addf %59, %64 : vector<128x128xf32>
    %c0_51 = arith.constant 0 : index
    %c0_52 = arith.constant 0 : index
    %66 = vector.load %arg5[%c0_51, %c0_52] : memref<1x128xf32, #tpu.memory_space<vmem>>, vector<1x128xf32>
    %67 = vector.shape_cast %66 : vector<1x128xf32> to vector<128xf32>
    %68 = vector.shape_cast %67 : vector<128xf32> to vector<1x128xf32>
    %69 = vector.broadcast %68 : vector<1x128xf32> to vector<128x128xf32>
    %70 = arith.addf %65, %69 : vector<128x128xf32>
    %c0_53 = arith.constant 0 : index
    %c0_54 = arith.constant 0 : index
    %71 = vector.load %arg6[%c0_53, %c0_54] : memref<1x128xf32, #tpu.memory_space<vmem>>, vector<1x128xf32>
    %72 = vector.shape_cast %71 : vector<1x128xf32> to vector<128xf32>
    %73 = vector.shape_cast %72 : vector<128xf32> to vector<1x128xf32>
    %74 = vector.broadcast %73 : vector<1x128xf32> to vector<128x128xf32>
    %75 = arith.mulf %70, %74 : vector<128x128xf32>
    %c0_55 = arith.constant 0 : index
    %c0_56 = arith.constant 0 : index
    %76 = vector.load %arg7[%c0_55, %c0_56] : memref<1x128xf32, #tpu.memory_space<vmem>>, vector<1x128xf32>
    %77 = vector.shape_cast %76 : vector<1x128xf32> to vector<128xf32>
    %78 = vector.shape_cast %77 : vector<128xf32> to vector<1x128xf32>
    %79 = vector.broadcast %78 : vector<1x128xf32> to vector<128x128xf32>
    %80 = arith.addf %75, %79 : vector<128x128xf32>
    %cst_57 = arith.constant 0.000000e+00 : f32
    %81 = vector.broadcast %cst_57 : f32 to vector<128x128xf32>
    %82 = arith.maximumf %80, %81 : vector<128x128xf32>
    %83 = vector.shape_cast %82 : vector<128x128xf32> to vector<8x16x128xf32>
    %84 = arith.truncf %83 : vector<8x16x128xf32> to vector<8x16x128xbf16>
    %c0_58 = arith.constant 0 : index
    %c0_59 = arith.constant 0 : index
    %c0_60 = arith.constant 0 : index
    %c0_61 = arith.constant 0 : index
    %85 = vector.load %arg8[%c0_58, %c0_59, %c0_60, %c0_61] : memref<1x8x16x128xbf16, #tpu.memory_space<vmem>>, vector<1x8x16x128xbf16>
    %86 = vector.shape_cast %85 : vector<1x8x16x128xbf16> to vector<8x16x128xbf16>
    %87 = vector.shape_cast %84 : vector<8x16x128xbf16> to vector<1x8x16x128xbf16>
    tpu.vector_store %arg8[%c0_58, %c0_59, %c0_60, %c0_61], %87 {strides = array<i32>} : memref<1x8x16x128xbf16, #tpu.memory_space<vmem>>, vector<1x8x16x128xbf16>,
    return
  }
  func.func @transform_0(%arg0: i32, %arg1: i32, %arg2: i32) -> (i32, i32, i32, i32) {
    %c0_i32 = arith.constant 0 : i32
    %c0_i32_0 = arith.constant 0 : i32
    %c0_i32_1 = arith.constant 0 : i32
    %c0_i32_2 = arith.constant 0 : i32
    return %arg0, %c0_i32, %c0_i32_0, %c0_i32_1 : i32, i32, i32, i32
  }
  func.func @transform_1(%arg0: i32, %arg1: i32, %arg2: i32) -> (i32, i32, i32, i32) {
    %c0_i32 = arith.constant 0 : i32
    %c0_i32_0 = arith.constant 0 : i32
    %c0_i32_1 = arith.constant 0 : i32
    %c0_i32_2 = arith.constant 0 : i32
    return %c0_i32, %c0_i32_0, %c0_i32_1, %arg1 : i32, i32, i32, i32
  }
  func.func @transform_2(%arg0: i32, %arg1: i32, %arg2: i32) -> (i32, i32) {
    %c0_i32 = arith.constant 0 : i32
    %c0_i32_0 = arith.constant 0 : i32
    return %c0_i32, %arg1 : i32, i32
  }
  func.func @transform_3(%arg0: i32, %arg1: i32, %arg2: i32) -> (i32, i32) {
    %c0_i32 = arith.constant 0 : i32
    %c0_i32_0 = arith.constant 0 : i32
    return %c0_i32, %arg1 : i32, i32
  }
  func.func @transform_4(%arg0: i32, %arg1: i32, %arg2: i32) -> (i32, i32) {
    %c0_i32 = arith.constant 0 : i32
    %c0_i32_0 = arith.constant 0 : i32
    return %c0_i32, %arg1 : i32, i32
  }
  func.func @transform_5(%arg0: i32, %arg1: i32, %arg2: i32) -> (i32, i32, i32, i32) {
    %c0_i32 = arith.constant 0 : i32
    %c0_i32_0 = arith.constant 0 : i32
    return %arg0, %arg2, %c0_i32, %arg1 : i32, i32, i32, i32
  }
}

module attributes {stable_mosaic.version = 11 : i64} {
  func.func @kernel(%arg0: i32, %arg1: i32, %arg2: i32, %arg3: memref<1x18x18x128xbf16, #tpu.memory_space<vmem>>, %arg4: memref<1x8x16x128xbf16, #tpu.memory_space<vmem>>, %arg5: memref<3x3x128x128xbf16, #tpu.memory_space<vmem>>, %arg6: memref<128x128xbf16, #tpu.memory_space<vmem>>, %arg7: memref<1x128xf32, #tpu.memory_space<vmem>>, %arg8: memref<1x128xf32, #tpu.memory_space<vmem>>, %arg9: memref<1x8x16x128xf32, #tpu.memory_space<vmem>>) attributes {dimension_semantics = [#tpu.dimension_semantics<parallel>, #tpu.dimension_semantics<parallel>, #tpu.dimension_semantics<parallel>], iteration_bounds = array<i64: 2, 1, 2>, scalar_prefetch = 0 : i64, scratch_operands = 0 : i64, tpu.core_type = #tpu.core_type<tc>, window_params = [{transform_indices = @transform_0, window_bounds = array<i64: 1, 18, 18, 128>}, {transform_indices = @transform_1, window_bounds = array<i64: 1, 8, 16, 128>}, {transform_indices = @transform_2, window_bounds = array<i64: 3, 3, 128, 128>}, {transform_indices = @transform_3, window_bounds = array<i64: 128, 128>}, {transform_indices = @transform_4, window_bounds = array<i64: 1, 128>}, {transform_indices = @transform_5, window_bounds = array<i64: 1, 128>}, {transform_indices = @transform_6, window_bounds = array<i64: 1, 8, 16, 128>}]} {
    %c8_i32 = arith.constant 8 : i32
    %0 = arith.muli %arg2, %c8_i32 : i32
    %1 = tpu.assume_multiple %0, 8 : i32
    %cst = arith.constant 0.000000e+00 : f32
    %2 = vector.broadcast %cst : f32 to vector<128x128xf32>
    %c0 = arith.constant 0 : index
    %3 = arith.index_cast %1 : i32 to index
    %c0_0 = arith.constant 0 : index
    %c0_1 = arith.constant 0 : index
    %4 = vector.load %arg3[%c0, %3, %c0_0, %c0_1] : memref<1x18x18x128xbf16, #tpu.memory_space<vmem>>, vector<1x10x16x128xbf16>
    %5 = vector.shape_cast %4 : vector<1x10x16x128xbf16> to vector<10x16x128xbf16>
    %6 = vector.extract_strided_slice %5 {offsets = [0, 0, 0], sizes = [8, 16, 128], strides = [1, 1, 1]} : vector<10x16x128xbf16> to vector<8x16x128xbf16>
    %7 = vector.shape_cast %6 : vector<8x16x128xbf16> to vector<128x128xbf16>
    %c0_2 = arith.constant 0 : index
    %c0_3 = arith.constant 0 : index
    %c0_4 = arith.constant 0 : index
    %c0_5 = arith.constant 0 : index
    %8 = vector.load %arg5[%c0_2, %c0_3, %c0_4, %c0_5] : memref<3x3x128x128xbf16, #tpu.memory_space<vmem>>, vector<1x1x128x128xbf16>
    %9 = vector.shape_cast %8 : vector<1x1x128x128xbf16> to vector<128x128xbf16>
    %cst_6 = arith.constant dense<0.000000e+00> : vector<128x128xf32>
    %10 = tpu.matmul %7, %9, %cst_6 {dimension_numbers = #tpu.dot_dimension_numbers<[1], [0], [0], [1], [0, 0, 1, 1], [], []>} : vector<128x128xbf16>, vector<128x128xbf16>, vector<128x128xf32> -> vector<128x128xf32>
    %11 = arith.addf %2, %10 : vector<128x128xf32>
    %12 = vector.extract_strided_slice %5 {offsets = [1, 0, 0], sizes = [8, 16, 128], strides = [1, 1, 1]} : vector<10x16x128xbf16> to vector<8x16x128xbf16>
    %13 = vector.shape_cast %12 : vector<8x16x128xbf16> to vector<128x128xbf16>
    %c1 = arith.constant 1 : index
    %c0_7 = arith.constant 0 : index
    %c0_8 = arith.constant 0 : index
    %c0_9 = arith.constant 0 : index
    %14 = vector.load %arg5[%c1, %c0_7, %c0_8, %c0_9] : memref<3x3x128x128xbf16, #tpu.memory_space<vmem>>, vector<1x1x128x128xbf16>
    %15 = vector.shape_cast %14 : vector<1x1x128x128xbf16> to vector<128x128xbf16>
    %cst_10 = arith.constant dense<0.000000e+00> : vector<128x128xf32>
    %16 = tpu.matmul %13, %15, %cst_10 {dimension_numbers = #tpu.dot_dimension_numbers<[1], [0], [0], [1], [0, 0, 1, 1], [], []>} : vector<128x128xbf16>, vector<128x128xbf16>, vector<128x128xf32> -> vector<128x128xf32>
    %17 = arith.addf %11, %16 : vector<128x128xf32>
    %18 = vector.extract_strided_slice %5 {offsets = [2, 0, 0], sizes = [8, 16, 128], strides = [1, 1, 1]} : vector<10x16x128xbf16> to vector<8x16x128xbf16>
    %19 = vector.shape_cast %18 : vector<8x16x128xbf16> to vector<128x128xbf16>
    %c2 = arith.constant 2 : index
    %c0_11 = arith.constant 0 : index
    %c0_12 = arith.constant 0 : index
    %c0_13 = arith.constant 0 : index
    %20 = vector.load %arg5[%c2, %c0_11, %c0_12, %c0_13] : memref<3x3x128x128xbf16, #tpu.memory_space<vmem>>, vector<1x1x128x128xbf16>
    %21 = vector.shape_cast %20 : vector<1x1x128x128xbf16> to vector<128x128xbf16>
    %cst_14 = arith.constant dense<0.000000e+00> : vector<128x128xf32>
    %22 = tpu.matmul %19, %21, %cst_14 {dimension_numbers = #tpu.dot_dimension_numbers<[1], [0], [0], [1], [0, 0, 1, 1], [], []>} : vector<128x128xbf16>, vector<128x128xbf16>, vector<128x128xf32> -> vector<128x128xf32>
    %23 = arith.addf %17, %22 : vector<128x128xf32>
    %c0_15 = arith.constant 0 : index
    %24 = arith.index_cast %1 : i32 to index
    %c1_16 = arith.constant 1 : index
    %c0_17 = arith.constant 0 : index
    %25 = vector.load %arg3[%c0_15, %24, %c1_16, %c0_17] : memref<1x18x18x128xbf16, #tpu.memory_space<vmem>>, vector<1x10x16x128xbf16>
    %26 = vector.shape_cast %25 : vector<1x10x16x128xbf16> to vector<10x16x128xbf16>
    %27 = vector.extract_strided_slice %26 {offsets = [0, 0, 0], sizes = [8, 16, 128], strides = [1, 1, 1]} : vector<10x16x128xbf16> to vector<8x16x128xbf16>
    %28 = vector.shape_cast %27 : vector<8x16x128xbf16> to vector<128x128xbf16>
    %c0_18 = arith.constant 0 : index
    %c1_19 = arith.constant 1 : index
    %c0_20 = arith.constant 0 : index
    %c0_21 = arith.constant 0 : index
    %29 = vector.load %arg5[%c0_18, %c1_19, %c0_20, %c0_21] : memref<3x3x128x128xbf16, #tpu.memory_space<vmem>>, vector<1x1x128x128xbf16>
    %30 = vector.shape_cast %29 : vector<1x1x128x128xbf16> to vector<128x128xbf16>
    %cst_22 = arith.constant dense<0.000000e+00> : vector<128x128xf32>
    %31 = tpu.matmul %28, %30, %cst_22 {dimension_numbers = #tpu.dot_dimension_numbers<[1], [0], [0], [1], [0, 0, 1, 1], [], []>} : vector<128x128xbf16>, vector<128x128xbf16>, vector<128x128xf32> -> vector<128x128xf32>
    %32 = arith.addf %23, %31 : vector<128x128xf32>
    %33 = vector.extract_strided_slice %26 {offsets = [1, 0, 0], sizes = [8, 16, 128], strides = [1, 1, 1]} : vector<10x16x128xbf16> to vector<8x16x128xbf16>
    %34 = vector.shape_cast %33 : vector<8x16x128xbf16> to vector<128x128xbf16>
    %c1_23 = arith.constant 1 : index
    %c1_24 = arith.constant 1 : index
    %c0_25 = arith.constant 0 : index
    %c0_26 = arith.constant 0 : index
    %35 = vector.load %arg5[%c1_23, %c1_24, %c0_25, %c0_26] : memref<3x3x128x128xbf16, #tpu.memory_space<vmem>>, vector<1x1x128x128xbf16>
    %36 = vector.shape_cast %35 : vector<1x1x128x128xbf16> to vector<128x128xbf16>
    %cst_27 = arith.constant dense<0.000000e+00> : vector<128x128xf32>
    %37 = tpu.matmul %34, %36, %cst_27 {dimension_numbers = #tpu.dot_dimension_numbers<[1], [0], [0], [1], [0, 0, 1, 1], [], []>} : vector<128x128xbf16>, vector<128x128xbf16>, vector<128x128xf32> -> vector<128x128xf32>
    %38 = arith.addf %32, %37 : vector<128x128xf32>
    %39 = vector.extract_strided_slice %26 {offsets = [2, 0, 0], sizes = [8, 16, 128], strides = [1, 1, 1]} : vector<10x16x128xbf16> to vector<8x16x128xbf16>
    %40 = vector.shape_cast %39 : vector<8x16x128xbf16> to vector<128x128xbf16>
    %c2_28 = arith.constant 2 : index
    %c1_29 = arith.constant 1 : index
    %c0_30 = arith.constant 0 : index
    %c0_31 = arith.constant 0 : index
    %41 = vector.load %arg5[%c2_28, %c1_29, %c0_30, %c0_31] : memref<3x3x128x128xbf16, #tpu.memory_space<vmem>>, vector<1x1x128x128xbf16>
    %42 = vector.shape_cast %41 : vector<1x1x128x128xbf16> to vector<128x128xbf16>
    %cst_32 = arith.constant dense<0.000000e+00> : vector<128x128xf32>
    %43 = tpu.matmul %40, %42, %cst_32 {dimension_numbers = #tpu.dot_dimension_numbers<[1], [0], [0], [1], [0, 0, 1, 1], [], []>} : vector<128x128xbf16>, vector<128x128xbf16>, vector<128x128xf32> -> vector<128x128xf32>
    %44 = arith.addf %38, %43 : vector<128x128xf32>
    %c0_33 = arith.constant 0 : index
    %45 = arith.index_cast %1 : i32 to index
    %c2_34 = arith.constant 2 : index
    %c0_35 = arith.constant 0 : index
    %46 = vector.load %arg3[%c0_33, %45, %c2_34, %c0_35] : memref<1x18x18x128xbf16, #tpu.memory_space<vmem>>, vector<1x10x16x128xbf16>
    %47 = vector.shape_cast %46 : vector<1x10x16x128xbf16> to vector<10x16x128xbf16>
    %48 = vector.extract_strided_slice %47 {offsets = [0, 0, 0], sizes = [8, 16, 128], strides = [1, 1, 1]} : vector<10x16x128xbf16> to vector<8x16x128xbf16>
    %49 = vector.shape_cast %48 : vector<8x16x128xbf16> to vector<128x128xbf16>
    %c0_36 = arith.constant 0 : index
    %c2_37 = arith.constant 2 : index
    %c0_38 = arith.constant 0 : index
    %c0_39 = arith.constant 0 : index
    %50 = vector.load %arg5[%c0_36, %c2_37, %c0_38, %c0_39] : memref<3x3x128x128xbf16, #tpu.memory_space<vmem>>, vector<1x1x128x128xbf16>
    %51 = vector.shape_cast %50 : vector<1x1x128x128xbf16> to vector<128x128xbf16>
    %cst_40 = arith.constant dense<0.000000e+00> : vector<128x128xf32>
    %52 = tpu.matmul %49, %51, %cst_40 {dimension_numbers = #tpu.dot_dimension_numbers<[1], [0], [0], [1], [0, 0, 1, 1], [], []>} : vector<128x128xbf16>, vector<128x128xbf16>, vector<128x128xf32> -> vector<128x128xf32>
    %53 = arith.addf %44, %52 : vector<128x128xf32>
    %54 = vector.extract_strided_slice %47 {offsets = [1, 0, 0], sizes = [8, 16, 128], strides = [1, 1, 1]} : vector<10x16x128xbf16> to vector<8x16x128xbf16>
    %55 = vector.shape_cast %54 : vector<8x16x128xbf16> to vector<128x128xbf16>
    %c1_41 = arith.constant 1 : index
    %c2_42 = arith.constant 2 : index
    %c0_43 = arith.constant 0 : index
    %c0_44 = arith.constant 0 : index
    %56 = vector.load %arg5[%c1_41, %c2_42, %c0_43, %c0_44] : memref<3x3x128x128xbf16, #tpu.memory_space<vmem>>, vector<1x1x128x128xbf16>
    %57 = vector.shape_cast %56 : vector<1x1x128x128xbf16> to vector<128x128xbf16>
    %cst_45 = arith.constant dense<0.000000e+00> : vector<128x128xf32>
    %58 = tpu.matmul %55, %57, %cst_45 {dimension_numbers = #tpu.dot_dimension_numbers<[1], [0], [0], [1], [0, 0, 1, 1], [], []>} : vector<128x128xbf16>, vector<128x128xbf16>, vector<128x128xf32> -> vector<128x128xf32>
    %59 = arith.addf %53, %58 : vector<128x128xf32>
    %60 = vector.extract_strided_slice %47 {offsets = [2, 0, 0], sizes = [8, 16, 128], strides = [1, 1, 1]} : vector<10x16x128xbf16> to vector<8x16x128xbf16>
    %61 = vector.shape_cast %60 : vector<8x16x128xbf16> to vector<128x128xbf16>
    %c2_46 = arith.constant 2 : index
    %c2_47 = arith.constant 2 : index
    %c0_48 = arith.constant 0 : index
    %c0_49 = arith.constant 0 : index
    %62 = vector.load %arg5[%c2_46, %c2_47, %c0_48, %c0_49] : memref<3x3x128x128xbf16, #tpu.memory_space<vmem>>, vector<1x1x128x128xbf16>
    %63 = vector.shape_cast %62 : vector<1x1x128x128xbf16> to vector<128x128xbf16>
    %cst_50 = arith.constant dense<0.000000e+00> : vector<128x128xf32>
    %64 = tpu.matmul %61, %63, %cst_50 {dimension_numbers = #tpu.dot_dimension_numbers<[1], [0], [0], [1], [0, 0, 1, 1], [], []>} : vector<128x128xbf16>, vector<128x128xbf16>, vector<128x128xf32> -> vector<128x128xf32>
    %65 = arith.addf %59, %64 : vector<128x128xf32>
    %c0_51 = arith.constant 0 : index
    %c0_52 = arith.constant 0 : index
    %c0_53 = arith.constant 0 : index
    %c0_54 = arith.constant 0 : index
    %66 = vector.load %arg4[%c0_51, %c0_52, %c0_53, %c0_54] : memref<1x8x16x128xbf16, #tpu.memory_space<vmem>>, vector<1x8x16x128xbf16>
    %67 = vector.shape_cast %66 : vector<1x8x16x128xbf16> to vector<8x16x128xbf16>
    %68 = vector.shape_cast %67 : vector<8x16x128xbf16> to vector<128x128xbf16>
    %c0_55 = arith.constant 0 : index
    %c0_56 = arith.constant 0 : index
    %69 = vector.load %arg6[%c0_55, %c0_56] : memref<128x128xbf16, #tpu.memory_space<vmem>>, vector<128x128xbf16>
    %cst_57 = arith.constant dense<0.000000e+00> : vector<128x128xf32>
    %70 = tpu.matmul %68, %69, %cst_57 {dimension_numbers = #tpu.dot_dimension_numbers<[1], [0], [0], [1], [0, 0, 1, 1], [], []>} : vector<128x128xbf16>, vector<128x128xbf16>, vector<128x128xf32> -> vector<128x128xf32>
    %c0_58 = arith.constant 0 : index
    %c0_59 = arith.constant 0 : index
    %71 = vector.load %arg7[%c0_58, %c0_59] : memref<1x128xf32, #tpu.memory_space<vmem>>, vector<1x128xf32>
    %72 = vector.shape_cast %71 : vector<1x128xf32> to vector<128xf32>
    %73 = vector.shape_cast %72 : vector<128xf32> to vector<1x128xf32>
    %74 = vector.broadcast %73 : vector<1x128xf32> to vector<128x128xf32>
    %75 = arith.addf %65, %74 : vector<128x128xf32>
    %76 = arith.addf %75, %70 : vector<128x128xf32>
    %c0_60 = arith.constant 0 : index
    %c0_61 = arith.constant 0 : index
    %77 = vector.load %arg8[%c0_60, %c0_61] : memref<1x128xf32, #tpu.memory_space<vmem>>, vector<1x128xf32>
    %78 = vector.shape_cast %77 : vector<1x128xf32> to vector<128xf32>
    %79 = vector.shape_cast %78 : vector<128xf32> to vector<1x128xf32>
    %80 = vector.broadcast %79 : vector<1x128xf32> to vector<128x128xf32>
    %81 = arith.addf %76, %80 : vector<128x128xf32>
    %82 = vector.shape_cast %81 : vector<128x128xf32> to vector<8x16x128xf32>
    %c0_62 = arith.constant 0 : index
    %c0_63 = arith.constant 0 : index
    %c0_64 = arith.constant 0 : index
    %c0_65 = arith.constant 0 : index
    %83 = vector.load %arg9[%c0_62, %c0_63, %c0_64, %c0_65] : memref<1x8x16x128xf32, #tpu.memory_space<vmem>>, vector<1x8x16x128xf32>
    %84 = vector.shape_cast %83 : vector<1x8x16x128xf32> to vector<8x16x128xf32>
    %85 = vector.shape_cast %82 : vector<8x16x128xf32> to vector<1x8x16x128xf32>
    tpu.vector_store %arg9[%c0_62, %c0_63, %c0_64, %c0_65], %85 {strides = array<i32>} : memref<1x8x16x128xf32, #tpu.memory_space<vmem>>, vector<1x8x16x128xf32>,
    return
  }
  func.func @transform_0(%arg0: i32, %arg1: i32, %arg2: i32) -> (i32, i32, i32, i32) {
    %c0_i32 = arith.constant 0 : i32
    %c0_i32_0 = arith.constant 0 : i32
    %c0_i32_1 = arith.constant 0 : i32
    %c0_i32_2 = arith.constant 0 : i32
    return %arg0, %c0_i32, %c0_i32_0, %c0_i32_1 : i32, i32, i32, i32
  }
  func.func @transform_1(%arg0: i32, %arg1: i32, %arg2: i32) -> (i32, i32, i32, i32) {
    %c0_i32 = arith.constant 0 : i32
    %c0_i32_0 = arith.constant 0 : i32
    %c0_i32_1 = arith.constant 0 : i32
    return %arg0, %arg2, %c0_i32, %c0_i32_0 : i32, i32, i32, i32
  }
  func.func @transform_2(%arg0: i32, %arg1: i32, %arg2: i32) -> (i32, i32, i32, i32) {
    %c0_i32 = arith.constant 0 : i32
    %c0_i32_0 = arith.constant 0 : i32
    %c0_i32_1 = arith.constant 0 : i32
    %c0_i32_2 = arith.constant 0 : i32
    return %c0_i32, %c0_i32_0, %c0_i32_1, %arg1 : i32, i32, i32, i32
  }
  func.func @transform_3(%arg0: i32, %arg1: i32, %arg2: i32) -> (i32, i32) {
    %c0_i32 = arith.constant 0 : i32
    %c0_i32_0 = arith.constant 0 : i32
    return %c0_i32, %arg1 : i32, i32
  }
  func.func @transform_4(%arg0: i32, %arg1: i32, %arg2: i32) -> (i32, i32) {
    %c0_i32 = arith.constant 0 : i32
    %c0_i32_0 = arith.constant 0 : i32
    return %c0_i32, %arg1 : i32, i32
  }
  func.func @transform_5(%arg0: i32, %arg1: i32, %arg2: i32) -> (i32, i32) {
    %c0_i32 = arith.constant 0 : i32
    %c0_i32_0 = arith.constant 0 : i32
    return %c0_i32, %arg1 : i32, i32
  }
  func.func @transform_6(%arg0: i32, %arg1: i32, %arg2: i32) -> (i32, i32, i32, i32) {
    %c0_i32 = arith.constant 0 : i32
    %c0_i32_0 = arith.constant 0 : i32
    return %arg0, %arg2, %c0_i32, %arg1 : i32, i32, i32, i32
  }
}

</mosaic_0001>

<llo_original>
// kernel: wide_basic_forward.2
$region0: #{wide_basic_forward.2}
  #allocation0 [shape = 'u32[]', space=smem, size = 0x4, offset = 0x4, fixed_abs, tag = 'smem constant byte address 0x4 - core index']
  #allocation1 [shape = 'u32[144,128]{1,0:T(1,128)}', space=vmem, size = 0x12000, scoped, tag = 'internal scratch']
  %s0 = inlined_call_operand.vmem [shape: bf16[2,18,18,128], index: 0, kind: input, shape index: {}]
  %s1 = inlined_call_operand.vmem [shape: bf16[3,3,128,128], index: 1, kind: input, shape index: {}]
  %s2 = inlined_call_operand.vmem [shape: f32[1,128], index: 2, kind: input, shape index: {}]
  %s3 = inlined_call_operand.vmem [shape: f32[1,128], index: 3, kind: input, shape index: {}]
  %s4 = inlined_call_operand.vmem [shape: f32[1,128], index: 4, kind: input, shape index: {}]
  %s5 = inlined_call_operand.vmem [shape: bf16[2,16,16,128], index: 5, kind: output, shape index: {}]
  %s6 = sld [smem:[#allocation0]]
  $region53: #{wide_basic_forward.2} parent=0
    _
  %s8 = ssub.s32 1, %s6
  %s9 = scalar_select 0, %s8, %s6
  loop: start=0, step=1, limit=6
  $region2: #{wide_basic_forward.2} parent=0 // loop_pre_header
    _
  $region3: #{wide_basic_forward.2} parent=0 // loop_header
    %s11 = sphi 0, %s15
    %p12 = scmp.ge.s32.totalorder %s11, 6
    %s18 = sphi 0, %s37
    %s19 = sphi 0, %s33
    %s20 = sphi 0, %s29
    %s21 = sphi 0, %s18
    %s22 = sphi 0, %s19
    %s23 = sphi 0, %s20
    %s24 = sphi 0, %s21
    %s25 = sphi 0, %s22
    %s26 = sphi 0, %s23
    %s40 = sphi 0, %s42
    %s43 = sphi 0, %s40
    %s44 = sphi 0, %s43
    %s60 = sphi 0, %s44
    %s66 = sphi 0, %s68
    %s69 = sphi 0, %s66
    %s70 = sphi 0, %s69
    %s86 = sphi 0, %s70
    %s92 = sphi 0, %s94
    %s95 = sphi 0, %s92
    %s96 = sphi 0, %s95
    %s112 = sphi 0, %s96
    %s118 = sphi 0, %s120
    %s121 = sphi 0, %s118
    %s122 = sphi 0, %s121
    %s138 = sphi 0, %s122
    %s144 = sphi 0, %s146
    %s147 = sphi 0, %s144
    %s148 = sphi 0, %s147
    %s164 = sphi 0, %s148
    %s174 = sphi 0, %s176
    %s177 = sphi 0, %s174
    %s178 = sphi 0, %s177
    %s194 = sphi 0, %s178
  $region4: #{wide_basic_forward.2} parent=0 // loop_header_branch
    %14 = sbr.rel (%p12) target = $region8
  $region5: #{wide_basic_forward.2} parent=0 // loop_body
    %s16 = ssub.s32 %s11, 1
    %s17 = ssub.s32 %s11, 2
    %s27 = sadd.s32 1, %s20
    %p28 = scmp.ge.s32.totalorder %s27, 2
    %s29 = scalar_select %p28, 0, %s27
    %s30 = sadd.s32 1, %s19
    %s31 = scalar_select %p28, %s30, %s19
    %p32 = scmp.ge.s32.totalorder %s31, 1
    %s33 = scalar_select %p32, 0, %s31
    %s34 = sadd.s32 1, %s18
    %s35 = scalar_select %p32, %s34, %s18
    %p36 = scmp.ge.s32.totalorder %s35, 2
    %s37 = scalar_select %p36, 0, %s35
    %s38 = ssub.s32 %s18, %s37
    %p39 = scmp.eq.s32.totalorder %s38, 0
    %s41 = sadd.s32 %s40, 1
    %s42 = scalar_select %p39, %s40, %s41
    %p45 = pneg %p39
    %p46 = scmp.eq.s32.totalorder %s11, 3
    %p47 = por %p45, %p46
    %p48 = scmp.ne.s32.totalorder %s40, %s43
    %p49 = scmp.eq.s32.totalorder %s11, 0
    %p50 = por %p48, %p49
    %p51 = scmp.ne.s32.totalorder %s40, %s43
    %p52 = scmp.eq.s32.totalorder %s16, 3
    %p53 = por %p51, %p52
    %p54 = scmp.ne.s32.totalorder %s43, %s44
    %p55 = scmp.eq.s32.totalorder %s16, 0
    %p56 = por %p54, %p55
    %p57 = scmp.ne.s32.totalorder %s43, %s44
    %p58 = scmp.eq.s32.totalorder %s17, 3
    %p59 = por %p57, %p58
    %p61 = scmp.ne.s32.totalorder %s44, %s60
    %p62 = scmp.eq.s32.totalorder %s17, 0
    %p63 = por %p61, %p62
    %s64 = ssub.s32 %s19, %s33
    %p65 = scmp.eq.s32.totalorder %s64, 0
    %s67 = sadd.s32 %s66, 1
    %s68 = scalar_select %p65, %s66, %s67
    %p71 = pneg %p65
    %p72 = scmp.eq.s32.totalorder %s11, 3
    %p73 = por %p71, %p72
    %p74 = scmp.ne.s32.totalorder %s66, %s69
    %p75 = scmp.eq.s32.totalorder %s11, 0
    %p76 = por %p74, %p75
    %p77 = scmp.ne.s32.totalorder %s66, %s69
    %p78 = scmp.eq.s32.totalorder %s16, 3
    %p79 = por %p77, %p78
    %p80 = scmp.ne.s32.totalorder %s69, %s70
    %p81 = scmp.eq.s32.totalorder %s16, 0
    %p82 = por %p80, %p81
    %p83 = scmp.ne.s32.totalorder %s69, %s70
    %p84 = scmp.eq.s32.totalorder %s17, 3
    %p85 = por %p83, %p84
    %p87 = scmp.ne.s32.totalorder %s70, %s86
    %p88 = scmp.eq.s32.totalorder %s17, 0
    %p89 = por %p87, %p88
    %s90 = ssub.s32 %s19, %s33
    %p91 = scmp.eq.s32.totalorder %s90, 0
    %s93 = sadd.s32 %s92, 1
    %s94 = scalar_select %p91, %s92, %s93
    %p97 = pneg %p91
    %p98 = scmp.eq.s32.totalorder %s11, 3
    %p99 = por %p97, %p98
    %p100 = scmp.ne.s32.totalorder %s92, %s95
    %p101 = scmp.eq.s32.totalorder %s11, 0
    %p102 = por %p100, %p101
    %p103 = scmp.ne.s32.totalorder %s92, %s95
    %p104 = scmp.eq.s32.totalorder %s16, 3
    %p105 = por %p103, %p104
    %p106 = scmp.ne.s32.totalorder %s95, %s96
    %p107 = scmp.eq.s32.totalorder %s16, 0
    %p108 = por %p106, %p107
    %p109 = scmp.ne.s32.totalorder %s95, %s96
    %p110 = scmp.eq.s32.totalorder %s17, 3
    %p111 = por %p109, %p110
    %p113 = scmp.ne.s32.totalorder %s96, %s112
    %p114 = scmp.eq.s32.totalorder %s17, 0
    %p115 = por %p113, %p114
    %s116 = ssub.s32 %s19, %s33
    %p117 = scmp.eq.s32.totalorder %s116, 0
    %s119 = sadd.s32 %s118, 1
    %s120 = scalar_select %p117, %s118, %s119
    %p123 = pneg %p117
    %p124 = scmp.eq.s32.totalorder %s11, 3
    %p125 = por %p123, %p124
    %p126 = scmp.ne.s32.totalorder %s118, %s121
    %p127 = scmp.eq.s32.totalorder %s11, 0
    %p128 = por %p126, %p127
    %p129 = scmp.ne.s32.totalorder %s118, %s121
    %p130 = scmp.eq.s32.totalorder %s16, 3
    %p131 = por %p129, %p130
    %p132 = scmp.ne.s32.totalorder %s121, %s122
    %p133 = scmp.eq.s32.totalorder %s16, 0
    %p134 = por %p132, %p133
    %p135 = scmp.ne.s32.totalorder %s121, %s122
    %p136 = scmp.eq.s32.totalorder %s17, 3
    %p137 = por %p135, %p136
    %p139 = scmp.ne.s32.totalorder %s122, %s138
    %p140 = scmp.eq.s32.totalorder %s17, 0
    %p141 = por %p139, %p140
    %s142 = ssub.s32 %s19, %s33
    %p143 = scmp.eq.s32.totalorder %s142, 0
    %s145 = sadd.s32 %s144, 1
    %s146 = scalar_select %p143, %s144, %s145
    %p149 = pneg %p143
    %p150 = scmp.eq.s32.totalorder %s11, 3
    %p151 = por %p149, %p150
    %p152 = scmp.ne.s32.totalorder %s144, %s147
    %p153 = scmp.eq.s32.totalorder %s11, 0
    %p154 = por %p152, %p153
    %p155 = scmp.ne.s32.totalorder %s144, %s147
    %p156 = scmp.eq.s32.totalorder %s16, 3
    %p157 = por %p155, %p156
    %p158 = scmp.ne.s32.totalorder %s147, %s148
    %p159 = scmp.eq.s32.totalorder %s16, 0
    %p160 = por %p158, %p159
    %p161 = scmp.ne.s32.totalorder %s147, %s148
    %p162 = scmp.eq.s32.totalorder %s17, 3
    %p163 = por %p161, %p162
    %p165 = scmp.ne.s32.totalorder %s148, %s164
    %p166 = scmp.eq.s32.totalorder %s17, 0
    %p167 = por %p165, %p166
    %s168 = ssub.s32 %s18, %s37
    %s169 = ssub.s32 %s20, %s29
    %s170 = sor.u32 %s168, %s169
    %s171 = ssub.s32 %s19, %s33
    %s172 = sor.u32 %s170, %s171
    %p173 = scmp.eq.s32.totalorder %s172, 0
    %s175 = sadd.s32 %s174, 1
    %s176 = scalar_select %p173, %s174, %s175
    %p179 = pneg %p173
    %p180 = scmp.eq.s32.totalorder %s11, 3
    %p181 = por %p179, %p180
    %p182 = scmp.ne.s32.totalorder %s174, %s177
    %p183 = scmp.eq.s32.totalorder %s11, 0
    %p184 = por %p182, %p183
    %p185 = scmp.ne.s32.totalorder %s174, %s177
    %p186 = scmp.eq.s32.totalorder %s16, 3
    %p187 = por %p185, %p186
    %p188 = scmp.ne.s32.totalorder %s177, %s178
    %p189 = scmp.eq.s32.totalorder %s16, 0
    %p190 = por %p188, %p189
    %p191 = scmp.ne.s32.totalorder %s177, %s178
    %p192 = scmp.eq.s32.totalorder %s17, 3
    %p193 = por %p191, %p192
    %p195 = scmp.ne.s32.totalorder %s178, %s194
    %p196 = scmp.eq.s32.totalorder %s17, 0
    %p197 = por %p195, %p196
    %p198 = scmp.le.s32.totalorder 1, %s11
    %p199 = scmp.lt.s32.totalorder %s11, 5
    %p200 = pnand %p198, %p199
    %p201 = pneg %p200
    // Predicated region
    $region9: #{wide_basic_forward.2} parent=5 // pred_check
      _
    $region10: #{wide_basic_forward.2} parent=5 // pred_check_branch
      %203 = sbr.rel (%p200) target = $region12
    $region11: #{wide_basic_forward.2} parent=5 // pred_region
      %s204 = ssub.s32 %s11, 1
      // Predicated region
      $region13: #{wide_basic_forward.2} parent=11 // pred_check
        %p205 = pneg %p82
      $region14: #{wide_basic_forward.2} parent=11 // pred_check_branch
        %207 = sbr.rel (%p205) target = $region16
      $region15: #{wide_basic_forward.2} parent=11 // pred_region
        %p208 = scmp.lt.s32.totalorder %s22, 0
        %s209 = scalar_select %p208, %s22, 0
        %s210 = smul.addr %s209, 4
        %s211 = scalar_lea.vmem %s1, %s210
      $region16: #{wide_basic_forward.2} parent=11 // pred_fallthru
        _
      // Predicated region
      $region17: #{wide_basic_forward.2} parent=11 // pred_check
        %p212 = pneg %p108
      $region18: #{wide_basic_forward.2} parent=11 // pred_check_branch
        %214 = sbr.rel (%p212) target = $region20
      $region19: #{wide_basic_forward.2} parent=11 // pred_region
        %p215 = scmp.lt.s32.totalorder %s22, 0
        %s216 = scalar_select %p215, %s22, 0
        %s217 = scalar_lea.vmem %s2, %s216
      $region20: #{wide_basic_forward.2} parent=11 // pred_fallthru
        _
      // Predicated region
      $region21: #{wide_basic_forward.2} parent=11 // pred_check
        %p218 = pneg %p134
      $region22: #{wide_basic_forward.2} parent=11 // pred_check_branch
        %220 = sbr.rel (%p218) target = $region24
      $region23: #{wide_basic_forward.2} parent=11 // pred_region
        %p221 = scmp.lt.s32.totalorder %s22, 0
        %s222 = scalar_select %p221, %s22, 0
        %s223 = scalar_lea.vmem %s3, %s222
      $region24: #{wide_basic_forward.2} parent=11 // pred_fallthru
        _
      // Predicated region
      $region25: #{wide_basic_forward.2} parent=11 // pred_check
        %p224 = pneg %p160
      $region26: #{wide_basic_forward.2} parent=11 // pred_check_branch
        %226 = sbr.rel (%p224) target = $region28
      $region27: #{wide_basic_forward.2} parent=11 // pred_region
        %p227 = scmp.lt.s32.totalorder %s22, 0
        %s228 = scalar_select %p227, %s22, 0
        %s229 = scalar_lea.vmem %s4, %s228
      $region28: #{wide_basic_forward.2} parent=11 // pred_fallthru
        _
    $region12: #{wide_basic_forward.2} parent=5 // pred_fallthru
      _
    %p230 = scmp.lt.s32.totalorder %s11, 4
    // Predicated region
    $region29: #{wide_basic_forward.2} parent=5 // pred_check
      %p231 = pneg %p230
    $region30: #{wide_basic_forward.2} parent=5 // pred_check_branch
      %233 = sbr.rel (%p231) target = $region32
    $region31: #{wide_basic_forward.2} parent=5 // pred_region
      // Predicated region
      $region33: #{wide_basic_forward.2} parent=31 // pred_check
        %p234 = pneg %p50
      $region34: #{wide_basic_forward.2} parent=31 // pred_check_branch
        %236 = sbr.rel (%p234) target = $region36
      $region35: #{wide_basic_forward.2} parent=31 // pred_region
        %p237 = scmp.lt.s32.totalorder %s18, 1
        %s238 = scalar_select %p237, %s18, 1
        %s239 = smul.addr %s238, 54
        %s240 = smul.addr %s239, 4
        %s241 = scalar_lea.vmem %s0, %s240
      $region36: #{wide_basic_forward.2} parent=31 // pred_fallthru
        _
    $region32: #{wide_basic_forward.2} parent=5 // pred_fallthru
      _
    %p242 = scmp.le.s32.totalorder 1, %s11
    %p243 = scmp.lt.s32.totalorder %s11, 5
    %p244 = pnand %p242, %p243
    %p245 = pneg %p244
    // Predicated region
    $region37: #{wide_basic_forward.2} parent=5 // pred_check
      _
    $region38: #{wide_basic_forward.2} parent=5 // pred_check_branch
      %247 = sbr.rel (%p244) target = $region40
    $region39: #{wide_basic_forward.2} parent=5 // pred_region
      %s248 = ssub.s32 %s11, 1
      %p249 = scmp.lt.s32.totalorder %s21, 1
      %s250 = scalar_select %p249, %s21, 1
      %s251 = smul.addr %s250, 54
      %s252 = smul.addr %s251, 4
      %s253 = scalar_lea.vmem %s0, %s252
      %p254 = pneg %p56
      %p255 = pneg %p53
      %p256 = scmp.lt.s32.totalorder %s22, 0
      %s257 = scalar_select %p256, %s22, 0
      %s258 = smul.addr %s257, 4
      %s259 = scalar_lea.vmem %s1, %s258
      %p260 = pneg %p82
      %p261 = pneg %p79
      %p262 = scmp.lt.s32.totalorder %s22, 0
      %s263 = scalar_select %p262, %s22, 0
      %s264 = scalar_lea.vmem %s2, %s263
      %p265 = pneg %p108
      %p266 = pneg %p105
      %p267 = scmp.lt.s32.totalorder %s22, 0
      %s268 = scalar_select %p267, %s22, 0
      %s269 = scalar_lea.vmem %s3, %s268
      %p270 = pneg %p134
      %p271 = pneg %p131
      %p272 = scmp.lt.s32.totalorder %s22, 0
      %s273 = scalar_select %p272, %s22, 0
      %s274 = scalar_lea.vmem %s4, %s273
      %p275 = pneg %p160
      %p276 = pneg %p157
      %p277 = pneg %p190
      %p278 = pneg %p187
      %s279 = smul.u32 8, %s23
      %p280 = scmp.lt.s32.totalorder %s21, 1
      %s281 = scalar_select %p280, %s21, 1
      %p282 = scmp.lt.s32.totalorder %s279, 15
      %s283 = scalar_select %p282, %s279, 15
      %p284 = scmp.lt.s32.totalorder %s22, 0
      %s285 = scalar_select %p284, %s22, 0
      %s286 = smul.addr %s283, 2
      %s287 = sadd.s32 %s285, %s286
      %s288 = smul.addr %s281, 32
      %s289 = sadd.s32 %s287, %s288
      %s290 = smul.addr %s289, 4
      %s291 = scalar_lea.vmem %s5, %s290
      %p292 = scmp.lt.s32.totalorder %s21, 1
      %s293 = scalar_select %p292, %s21, 1
      %s294 = smul.addr %s293, 54
      %s295 = smul.addr %s294, 4
      %s296 = scalar_lea.vmem %s0, %s295
      %p297 = scmp.lt.s32.totalorder %s22, 0
      %s298 = scalar_select %p297, %s22, 0
      %s299 = smul.addr %s298, 4
      %s300 = scalar_lea.vmem %s1, %s299
      %p301 = scmp.lt.s32.totalorder %s22, 0
      %s302 = scalar_select %p301, %s22, 0
      %s303 = scalar_lea.vmem %s2, %s302
      %p304 = scmp.lt.s32.totalorder %s22, 0
      %s305 = scalar_select %p304, %s22, 0
      %s306 = scalar_lea.vmem %s3, %s305
      %p307 = scmp.lt.s32.totalorder %s22, 0
      %s308 = scalar_select %p307, %s22, 0
      %s309 = scalar_lea.vmem %s4, %s308
      %s310 = smul.u32 8, %s23
      %p311 = scmp.lt.s32.totalorder %s21, 1
      %s312 = scalar_select %p311, %s21, 1
      %p313 = scmp.lt.s32.totalorder %s310, 15
      %s314 = scalar_select %p313, %s310, 15
      %p315 = scmp.lt.s32.totalorder %s22, 0
      %s316 = scalar_select %p315, %s22, 0
      %s317 = smul.addr %s314, 2
      %s318 = sadd.s32 %s316, %s317
      %s319 = smul.addr %s312, 32
      %s320 = sadd.s32 %s318, %s319
      %s321 = smul.addr %s320, 4
      %s322 = scalar_lea.vmem %s5, %s321
      %s323 = smul.u32 8, %s23
      %s325 = smul.u32 %s23, 8
      %s326 = smul.u32 %s325, 3
      %s327 = smul.addr %s326, 4
      %s328 = scalar_lea.vmem %s296, %s327
      %v329 = vld [vmem:[%s328] sm:$0xf]
      %v330 = vld [vmem:[%s328 + $0x4] sm:$0xf]
      %v331 = vld [vmem:[%s328 + $0xc] sm:$0xf]
      %v332 = vld [vmem:[%s328 + $0x10] sm:$0xf]
      %v333 = vld [vmem:[%s328 + $0x18] sm:$0xf]
      %v334 = vld [vmem:[%s328 + $0x1c] sm:$0xf]
      %v335 = vld [vmem:[%s328 + $0x24] sm:$0xf]
      %v336 = vld [vmem:[%s328 + $0x28] sm:$0xf]
      %v337 = vld [vmem:[%s328 + $0x30] sm:$0xf]
      %v338 = vld [vmem:[%s328 + $0x34] sm:$0xf]
      %v339 = vld [vmem:[%s328 + $0x3c] sm:$0xf]
      %v340 = vld [vmem:[%s328 + $0x40] sm:$0xf]
      %v341 = vld [vmem:[%s328 + $0x48] sm:$0xf]
      %v342 = vld [vmem:[%s328 + $0x4c] sm:$0xf]
      %v343 = vld [vmem:[%s328 + $0x54] sm:$0xf]
      %v344 = vld [vmem:[%s328 + $0x58] sm:$0xf]
      %v345 = vld [vmem:[%s328 + $0x60] sm:$0xf]
      %v346 = vld [vmem:[%s328 + $0x64] sm:$0xf]
      %v347 = vld [vmem:[%s328 + $0x6c] sm:$0xf]
      %v348 = vld [vmem:[%s328 + $0x70] sm:$0xf]
      %v349 = vld [vmem:[%s300] sm:$0xf]
      %v350 = vld [vmem:[%s300 + $0x4] sm:$0xf]
      %v351 = vld [vmem:[%s300 + $0x8] sm:$0xf]
      %v352 = vld [vmem:[%s300 + $0xc] sm:$0xf]
      %v353 = vld [vmem:[%s300 + $0x10] sm:$0xf]
      %v354 = vld [vmem:[%s300 + $0x14] sm:$0xf]
      %v355 = vld [vmem:[%s300 + $0x18] sm:$0xf]
      %v356 = vld [vmem:[%s300 + $0x1c] sm:$0xf]
      %v357 = vld [vmem:[%s300 + $0x20] sm:$0xf]
      %v358 = vld [vmem:[%s300 + $0x24] sm:$0xf]
      %v359 = vld [vmem:[%s300 + $0x28] sm:$0xf]
      %v360 = vld [vmem:[%s300 + $0x2c] sm:$0xf]
      %v361 = vld [vmem:[%s300 + $0x30] sm:$0xf]
      %v362 = vld [vmem:[%s300 + $0x34] sm:$0xf]
      %v363 = vld [vmem:[%s300 + $0x38] sm:$0xf]
      %v364 = vld [vmem:[%s300 + $0x3c] sm:$0xf]
      %s365 = scalar_lea.vmem %s300, 192
      %v366 = vld [vmem:[%s365] sm:$0xf]
      %v367 = vld [vmem:[%s365 + $0x4] sm:$0xf]
      %v368 = vld [vmem:[%s365 + $0x8] sm:$0xf]
      %v369 = vld [vmem:[%s365 + $0xc] sm:$0xf]
      %v370 = vld [vmem:[%s365 + $0x10] sm:$0xf]
      %v371 = vld [vmem:[%s365 + $0x14] sm:$0xf]
      %v372 = vld [vmem:[%s365 + $0x18] sm:$0xf]
      %v373 = vld [vmem:[%s365 + $0x1c] sm:$0xf]
      %v374 = vld [vmem:[%s365 + $0x20] sm:$0xf]
      %v375 = vld [vmem:[%s365 + $0x24] sm:$0xf]
      %v376 = vld [vmem:[%s365 + $0x28] sm:$0xf]
      %v377 = vld [vmem:[%s365 + $0x2c] sm:$0xf]
      %v378 = vld [vmem:[%s365 + $0x30] sm:$0xf]
      %v379 = vld [vmem:[%s365 + $0x34] sm:$0xf]
      %v380 = vld [vmem:[%s365 + $0x38] sm:$0xf]
      %v381 = vld [vmem:[%s365 + $0x3c] sm:$0xf]
      %v398 = vunpack.c.l.b16 %v331
      %v399 = vunpack.c.l.b16 %v332
      %v400 = vunpack.c.l.b16 %v333
      %v401 = vunpack.c.l.b16 %v334
      %v402 = vunpack.c.l.b16 %v335
      %v403 = vunpack.c.l.b16 %v336
      %v404 = vunpack.c.l.b16 %v337
      %v405 = vunpack.c.l.b16 %v338
      %v406 = vunpack.c.l.b16 %v339
      %v407 = vunpack.c.l.b16 %v340
      %v408 = vunpack.c.l.b16 %v341
      %v409 = vunpack.c.l.b16 %v342
      %v410 = vunpack.c.l.b16 %v343
      %v411 = vunpack.c.l.b16 %v344
      %v412 = vunpack.c.l.b16 %v345
      %v413 = vunpack.c.l.b16 %v346
      %v414 = vpack.c.b16 %v399, %v398
      %v415 = vpack.c.b16 %v401, %v400
      %v416 = vpack.c.b16 %v403, %v402
      %v417 = vpack.c.b16 %v405, %v404
      %v418 = vpack.c.b16 %v407, %v406
      %v419 = vpack.c.b16 %v409, %v408
      %v420 = vpack.c.b16 %v411, %v410
      %v421 = vpack.c.b16 %v413, %v412
      %v446 = vunpack.c.l.b16 %v366
      %v447 = vunpack.c.l.b16 %v367
      %v448 = vunpack.c.l.b16 %v368
      %v449 = vunpack.c.l.b16 %v369
      %v450 = vunpack.c.l.b16 %v370
      %v451 = vunpack.c.l.b16 %v371
      %v452 = vunpack.c.l.b16 %v372
      %v453 = vunpack.c.l.b16 %v373
      %v454 = vunpack.c.l.b16 %v374
      %v455 = vunpack.c.l.b16 %v375
      %v456 = vunpack.c.l.b16 %v376
      %v457 = vunpack.c.l.b16 %v377
      %v458 = vunpack.c.l.b16 %v378
      %v459 = vunpack.c.l.b16 %v379
      %v460 = vunpack.c.l.b16 %v380
      %v461 = vunpack.c.l.b16 %v381
      %v462 = vpack.c.b16 %v447, %v446
      %v463 = vpack.c.b16 %v449, %v448
      %v464 = vpack.c.b16 %v451, %v450
      %v465 = vpack.c.b16 %v453, %v452
      %v466 = vpack.c.b16 %v455, %v454
      %v467 = vpack.c.b16 %v457, %v456
      %v468 = vpack.c.b16 %v459, %v458
      %v469 = vpack.c.b16 %v461, %v460
      %478 = vmatprep.subr.bf16.mxu0 0
      %479 = vmatpush1.bf16.msra.mxu0 %v462
      %480 = vmatprep.subr.bf16.mxu0 0
      %481 = vmatpush1.bf16.msra.mxu0 %v463
      %482 = vmatprep.subr.bf16.mxu0 0
      %483 = vmatpush1.bf16.msra.mxu0 %v464
      %484 = vmatprep.subr.bf16.mxu0 0
      %485 = vmatpush1.bf16.msra.mxu0 %v465
      %486 = vmatprep.subr.bf16.mxu0 0
      %487 = vmatpush1.bf16.msra.mxu0 %v466
      %488 = vmatprep.subr.bf16.mxu0 0
      %489 = vmatpush1.bf16.msra.mxu0 %v467
      %490 = vmatprep.subr.bf16.mxu0 0
      %491 = vmatpush1.bf16.msra.mxu0 %v468
      %492 = vmatprep.subr.bf16.mxu0 0
      %493 = vmatpush1.bf16.msra.mxu0 %v469
      %494 = vmatprep.subr.bf16.mxu0 0
      %495 = vmatpush1.bf16.msra.mxu0 0
      %496 = vmatprep.subr.bf16.mxu0 0
      %497 = vmatpush1.bf16.msra.mxu0 0
      %498 = vmatprep.subr.bf16.mxu0 0
      %499 = vmatpush1.bf16.msra.mxu0 0
      %500 = vmatprep.subr.bf16.mxu0 0
      %501 = vmatpush1.bf16.msra.mxu0 0
      %502 = vmatprep.subr.bf16.mxu0 0
      %503 = vmatpush1.bf16.msra.mxu0 0
      %504 = vmatprep.subr.bf16.mxu0 0
      %505 = vmatpush1.bf16.msra.mxu0 0
      %506 = vmatprep.subr.bf16.mxu0 0
      %507 = vmatpush1.bf16.msra.mxu0 0
      %508 = vmatprep.subr.bf16.mxu0 0
      %509 = vmatpush1.bf16.msra.mxu0 0
      %510 = vmatprep.mubr.bf16.mxu0 0
      %511 = vmatmul.mubr.bf16.gmra.mrb[0].mxu0 %v414
      %v512 = vpop.f32.mrb[0].mxu0
      %v513 = vadd.f32 0.0, %v512
      %v514 = vpop.f32.mrb[0].mxu0
      %v515 = vpop.f32.mrb[0].mxu0
      %v516 = vadd.f32 0.0, %v515
      %v517 = vpop.f32.mrb[0].mxu0
      %518 = vmatprep.mubr.bf16.mxu0 0
      %519 = vmatmul.mubr.bf16.gmra.mrb[0].mxu0 %v415
      %v520 = vpop.f32.mrb[0].mxu0
      %v521 = vadd.f32 0.0, %v520
      %v522 = vpop.f32.mrb[0].mxu0
      %v523 = vpop.f32.mrb[0].mxu0
      %v524 = vadd.f32 0.0, %v523
      %v525 = vpop.f32.mrb[0].mxu0
      %526 = vmatprep.mubr.bf16.mxu0 0
      %527 = vmatmul.mubr.bf16.gmra.mrb[0].mxu0 %v416
      %v528 = vpop.f32.mrb[0].mxu0
      %v529 = vadd.f32 0.0, %v528
      %v530 = vpop.f32.mrb[0].mxu0
      %v531 = vpop.f32.mrb[0].mxu0
      %v532 = vadd.f32 0.0, %v531
      %v533 = vpop.f32.mrb[0].mxu0
      %534 = vmatprep.mubr.bf16.mxu0 0
      %535 = vmatmul.mubr.bf16.gmra.mrb[0].mxu0 %v417
      %v536 = vpop.f32.mrb[0].mxu0
      %v537 = vadd.f32 0.0, %v536
      %v538 = vpop.f32.mrb[0].mxu0
      %v539 = vpop.f32.mrb[0].mxu0
      %v540 = vadd.f32 0.0, %v539
      %v541 = vpop.f32.mrb[0].mxu0
      %542 = vmatprep.mubr.bf16.mxu0 0
      %543 = vmatmul.mubr.bf16.gmra.mrb[0].mxu0 %v418
      %v544 = vpop.f32.mrb[0].mxu0
      %v545 = vadd.f32 0.0, %v544
      %v546 = vpop.f32.mrb[0].mxu0
      %v547 = vpop.f32.mrb[0].mxu0
      %v548 = vadd.f32 0.0, %v547
      %v549 = vpop.f32.mrb[0].mxu0
      %550 = vmatprep.mubr.bf16.mxu0 0
      %551 = vmatmul.mubr.bf16.gmra.mrb[0].mxu0 %v419
      %v552 = vpop.f32.mrb[0].mxu0
      %v553 = vadd.f32 0.0, %v552
      %v554 = vpop.f32.mrb[0].mxu0
      %v555 = vpop.f32.mrb[0].mxu0
      %v556 = vadd.f32 0.0, %v555
      %v557 = vpop.f32.mrb[0].mxu0
      %558 = vmatprep.mubr.bf16.mxu0 0
      %559 = vmatmul.mubr.bf16.gmra.mrb[0].mxu0 %v420
      %v560 = vpop.f32.mrb[0].mxu0
      %v561 = vadd.f32 0.0, %v560
      %v562 = vpop.f32.mrb[0].mxu0
      %v563 = vpop.f32.mrb[0].mxu0
      %v564 = vadd.f32 0.0, %v563
      %v565 = vpop.f32.mrb[0].mxu0
      %566 = vmatprep.mubr.bf16.mxu0 0
      %567 = vmatmul.mubr.bf16.gmra.mrb[0].mxu0 %v421
      %v568 = vpop.f32.mrb[0].mxu0
      %v569 = vadd.f32 0.0, %v568
      %v570 = vpop.f32.mrb[0].mxu0
      %v571 = vpop.f32.mrb[0].mxu0
      %v572 = vadd.f32 0.0, %v571
      %v573 = vpop.f32.mrb[0].mxu0
      %574 = vdwg.mxu0
      %v577 = vunpack.c.l.b16 %v329
      %v578 = vunpack.c.l.b16 %v330
      %v579 = vpack.c.b16 %v578, %v577
      %v597 = vunpack.c.l.b16 %v349
      %v598 = vunpack.c.l.b16 %v350
      %v599 = vunpack.c.l.b16 %v351
      %v600 = vunpack.c.l.b16 %v352
      %v601 = vunpack.c.l.b16 %v353
      %v602 = vunpack.c.l.b16 %v354
      %v603 = vunpack.c.l.b16 %v355
      %v604 = vunpack.c.l.b16 %v356
      %v605 = vunpack.c.l.b16 %v357
      %v606 = vunpack.c.l.b16 %v358
      %v607 = vunpack.c.l.b16 %v359
      %v608 = vunpack.c.l.b16 %v360
      %v609 = vunpack.c.l.b16 %v361
      %v610 = vunpack.c.l.b16 %v362
      %v611 = vunpack.c.l.b16 %v363
      %v612 = vunpack.c.l.b16 %v364
      %v613 = vpack.c.b16 %v598, %v597
      %v614 = vpack.c.b16 %v600, %v599
      %v615 = vpack.c.b16 %v602, %v601
      %v616 = vpack.c.b16 %v604, %v603
      %v617 = vpack.c.b16 %v606, %v605
      %v618 = vpack.c.b16 %v608, %v607
      %v619 = vpack.c.b16 %v610, %v609
      %v620 = vpack.c.b16 %v612, %v611
      %629 = vmatprep.subr.bf16.mxu0 0
      %630 = vmatpush1.bf16.msra.mxu0 %v613
      %631 = vmatprep.subr.bf16.mxu0 0
      %632 = vmatpush1.bf16.msra.mxu0 %v614
      %633 = vmatprep.subr.bf16.mxu0 0
      %634 = vmatpush1.bf16.msra.mxu0 %v615
      %635 = vmatprep.subr.bf16.mxu0 0
      %636 = vmatpush1.bf16.msra.mxu0 %v616
      %637 = vmatprep.subr.bf16.mxu0 0
      %638 = vmatpush1.bf16.msra.mxu0 %v617
      %639 = vmatprep.subr.bf16.mxu0 0
      %640 = vmatpush1.bf16.msra.mxu0 %v618
      %641 = vmatprep.subr.bf16.mxu0 0
      %642 = vmatpush1.bf16.msra.mxu0 %v619
      %643 = vmatprep.subr.bf16.mxu0 0
      %644 = vmatpush1.bf16.msra.mxu0 %v620
      %645 = vmatprep.subr.bf16.mxu0 0
      %646 = vmatpush1.bf16.msra.mxu0 0
      %647 = vmatprep.subr.bf16.mxu0 0
      %648 = vmatpush1.bf16.msra.mxu0 0
      %649 = vmatprep.subr.bf16.mxu0 0
      %650 = vmatpush1.bf16.msra.mxu0 0
      %651 = vmatprep.subr.bf16.mxu0 0
      %652 = vmatpush1.bf16.msra.mxu0 0
      %653 = vmatprep.subr.bf16.mxu0 0
      %654 = vmatpush1.bf16.msra.mxu0 0
      %655 = vmatprep.subr.bf16.mxu0 0
      %656 = vmatpush1.bf16.msra.mxu0 0
      %657 = vmatprep.subr.bf16.mxu0 0
      %658 = vmatpush1.bf16.msra.mxu0 0
      %659 = vmatprep.subr.bf16.mxu0 0
      %660 = vmatpush1.bf16.msra.mxu0 0
      %661 = vmatprep.mubr.bf16.mxu0 0
      %662 = vmatmul.mubr.bf16.gmra.mrb[0].mxu0 %v579
      %v663 = vpop.f32.mrb[0].mxu0
      %v664 = vadd.f32 %v513, %v663
      %v665 = vpop.f32.mrb[0].mxu0
      %v666 = vpop.f32.mrb[0].mxu0
      %v667 = vadd.f32 %v516, %v666
      %v668 = vpop.f32.mrb[0].mxu0
      %669 = vmatprep.mubr.bf16.mxu0 0
      %670 = vmatmul.mubr.bf16.gmra.mrb[0].mxu0 %v414
      %v671 = vpop.f32.mrb[0].mxu0
      %v672 = vadd.f32 %v521, %v671
      %v673 = vpop.f32.mrb[0].mxu0
      %v674 = vpop.f32.mrb[0].mxu0
      %v675 = vadd.f32 %v524, %v674
      %v676 = vpop.f32.mrb[0].mxu0
      %677 = vmatprep.mubr.bf16.mxu0 0
      %678 = vmatmul.mubr.bf16.gmra.mrb[0].mxu0 %v415
      %v679 = vpop.f32.mrb[0].mxu0
      %v680 = vadd.f32 %v529, %v679
      %v681 = vpop.f32.mrb[0].mxu0
      %v682 = vpop.f32.mrb[0].mxu0
      %v683 = vadd.f32 %v532, %v682
      %v684 = vpop.f32.mrb[0].mxu0
      %685 = vmatprep.mubr.bf16.mxu0 0
      %686 = vmatmul.mubr.bf16.gmra.mrb[0].mxu0 %v416
      %v687 = vpop.f32.mrb[0].mxu0
      %v688 = vadd.f32 %v537, %v687
      %v689 = vpop.f32.mrb[0].mxu0
      %v690 = vpop.f32.mrb[0].mxu0
      %v691 = vadd.f32 %v540, %v690
      %v692 = vpop.f32.mrb[0].mxu0
      %693 = vmatprep.mubr.bf16.mxu0 0
      %694 = vmatmul.mubr.bf16.gmra.mrb[0].mxu0 %v417
      %v695 = vpop.f32.mrb[0].mxu0
      %v696 = vadd.f32 %v545, %v695
      %v697 = vpop.f32.mrb[0].mxu0
      %v698 = vpop.f32.mrb[0].mxu0
      %v699 = vadd.f32 %v548, %v698
      %v700 = vpop.f32.mrb[0].mxu0
      %701 = vmatprep.mubr.bf16.mxu0 0
      %702 = vmatmul.mubr.bf16.gmra.mrb[0].mxu0 %v418
      %v703 = vpop.f32.mrb[0].mxu0
      %v704 = vadd.f32 %v553, %v703
      %v705 = vpop.f32.mrb[0].mxu0
      %v706 = vpop.f32.mrb[0].mxu0
      %v707 = vadd.f32 %v556, %v706
      %v708 = vpop.f32.mrb[0].mxu0
      %709 = vmatprep.mubr.bf16.mxu0 0
      %710 = vmatmul.mubr.bf16.gmra.mrb[0].mxu0 %v419
      %v711 = vpop.f32.mrb[0].mxu0
      %v712 = vadd.f32 %v561, %v711
      %v713 = vpop.f32.mrb[0].mxu0
      %v714 = vpop.f32.mrb[0].mxu0
      %v715 = vadd.f32 %v564, %v714
      %v716 = vpop.f32.mrb[0].mxu0
      %717 = vmatprep.mubr.bf16.mxu0 0
      %718 = vmatmul.mubr.bf16.gmra.mrb[0].mxu0 %v420
      %v719 = vpop.f32.mrb[0].mxu0
      %v720 = vadd.f32 %v569, %v719
      %v721 = vpop.f32.mrb[0].mxu0
      %v722 = vpop.f32.mrb[0].mxu0
      %v723 = vadd.f32 %v572, %v722
      %v724 = vpop.f32.mrb[0].mxu0
      %725 = vdwg.mxu0
      %s726 = scalar_lea.vmem %s300, 384
      %v727 = vld [vmem:[%s726] sm:$0xf]
      %v728 = vld [vmem:[%s726 + $0x4] sm:$0xf]
      %v729 = vld [vmem:[%s726 + $0x8] sm:$0xf]
      %v730 = vld [vmem:[%s726 + $0xc] sm:$0xf]
      %v731 = vld [vmem:[%s726 + $0x10] sm:$0xf]
      %v732 = vld [vmem:[%s726 + $0x14] sm:$0xf]
      %v733 = vld [vmem:[%s726 + $0x18] sm:$0xf]
      %v734 = vld [vmem:[%s726 + $0x1c] sm:$0xf]
      %v735 = vld [vmem:[%s726 + $0x20] sm:$0xf]
      %v736 = vld [vmem:[%s726 + $0x24] sm:$0xf]
      %v737 = vld [vmem:[%s726 + $0x28] sm:$0xf]
      %v738 = vld [vmem:[%s726 + $0x2c] sm:$0xf]
      %v739 = vld [vmem:[%s726 + $0x30] sm:$0xf]
      %v740 = vld [vmem:[%s726 + $0x34] sm:$0xf]
      %v741 = vld [vmem:[%s726 + $0x38] sm:$0xf]
      %v742 = vld [vmem:[%s726 + $0x3c] sm:$0xf]
      %v745 = vunpack.c.l.b16 %v347
      %v746 = vunpack.c.l.b16 %v348
      %v747 = vpack.c.b16 %v746, %v745
      %v765 = vunpack.c.l.b16 %v727
      %v766 = vunpack.c.l.b16 %v728
      %v767 = vunpack.c.l.b16 %v729
      %v768 = vunpack.c.l.b16 %v730
      %v769 = vunpack.c.l.b16 %v731
      %v770 = vunpack.c.l.b16 %v732
      %v771 = vunpack.c.l.b16 %v733
      %v772 = vunpack.c.l.b16 %v734
      %v773 = vunpack.c.l.b16 %v735
      %v774 = vunpack.c.l.b16 %v736
      %v775 = vunpack.c.l.b16 %v737
      %v776 = vunpack.c.l.b16 %v738
      %v777 = vunpack.c.l.b16 %v739
      %v778 = vunpack.c.l.b16 %v740
      %v779 = vunpack.c.l.b16 %v741
      %v780 = vunpack.c.l.b16 %v742
      %v781 = vpack.c.b16 %v766, %v765
      %v782 = vpack.c.b16 %v768, %v767
      %v783 = vpack.c.b16 %v770, %v769
      %v784 = vpack.c.b16 %v772, %v771
      %v785 = vpack.c.b16 %v774, %v773
      %v786 = vpack.c.b16 %v776, %v775
      %v787 = vpack.c.b16 %v778, %v777
      %v788 = vpack.c.b16 %v780, %v779
      %797 = vmatprep.subr.bf16.mxu0 0
      %798 = vmatpush1.bf16.msra.mxu0 %v781
      %799 = vmatprep.subr.bf16.mxu0 0
      %800 = vmatpush1.bf16.msra.mxu0 %v782
      %801 = vmatprep.subr.bf16.mxu0 0
      %802 = vmatpush1.bf16.msra.mxu0 %v783
      %803 = vmatprep.subr.bf16.mxu0 0
      %804 = vmatpush1.bf16.msra.mxu0 %v784
      %805 = vmatprep.subr.bf16.mxu0 0
      %806 = vmatpush1.bf16.msra.mxu0 %v785
      %807 = vmatprep.subr.bf16.mxu0 0
      %808 = vmatpush1.bf16.msra.mxu0 %v786
      %809 = vmatprep.subr.bf16.mxu0 0
      %810 = vmatpush1.bf16.msra.mxu0 %v787
      %811 = vmatprep.subr.bf16.mxu0 0
      %812 = vmatpush1.bf16.msra.mxu0 %v788
      %813 = vmatprep.subr.bf16.mxu0 0
      %814 = vmatpush1.bf16.msra.mxu0 0
      %815 = vmatprep.subr.bf16.mxu0 0
      %816 = vmatpush1.bf16.msra.mxu0 0
      %817 = vmatprep.subr.bf16.mxu0 0
      %818 = vmatpush1.bf16.msra.mxu0 0
      %819 = vmatprep.subr.bf16.mxu0 0
      %820 = vmatpush1.bf16.msra.mxu0 0
      %821 = vmatprep.subr.bf16.mxu0 0
      %822 = vmatpush1.bf16.msra.mxu0 0
      %823 = vmatprep.subr.bf16.mxu0 0
      %824 = vmatpush1.bf16.msra.mxu0 0
      %825 = vmatprep.subr.bf16.mxu0 0
      %826 = vmatpush1.bf16.msra.mxu0 0
      %827 = vmatprep.subr.bf16.mxu0 0
      %828 = vmatpush1.bf16.msra.mxu0 0
      %829 = vmatprep.mubr.bf16.mxu0 0
      %830 = vmatmul.mubr.bf16.gmra.mrb[0].mxu0 %v415
      %v831 = vpop.f32.mrb[0].mxu0
      %v832 = vadd.f32 0.0, %v831
      %v833 = vpop.f32.mrb[0].mxu0
      %v834 = vpop.f32.mrb[0].mxu0
      %v835 = vadd.f32 0.0, %v834
      %v836 = vpop.f32.mrb[0].mxu0
      %837 = vmatprep.mubr.bf16.mxu0 0
      %838 = vmatmul.mubr.bf16.gmra.mrb[0].mxu0 %v416
      %v839 = vpop.f32.mrb[0].mxu0
      %v840 = vadd.f32 0.0, %v839
      %v841 = vpop.f32.mrb[0].mxu0
      %v842 = vpop.f32.mrb[0].mxu0
      %v843 = vadd.f32 0.0, %v842
      %v844 = vpop.f32.mrb[0].mxu0
      %845 = vmatprep.mubr.bf16.mxu0 0
      %846 = vmatmul.mubr.bf16.gmra.mrb[0].mxu0 %v417
      %v847 = vpop.f32.mrb[0].mxu0
      %v848 = vadd.f32 0.0, %v847
      %v849 = vpop.f32.mrb[0].mxu0
      %v850 = vpop.f32.mrb[0].mxu0
      %v851 = vadd.f32 0.0, %v850
      %v852 = vpop.f32.mrb[0].mxu0
      %853 = vmatprep.mubr.bf16.mxu0 0
      %854 = vmatmul.mubr.bf16.gmra.mrb[0].mxu0 %v418
      %v855 = vpop.f32.mrb[0].mxu0
      %v856 = vadd.f32 0.0, %v855
      %v857 = vpop.f32.mrb[0].mxu0
      %v858 = vpop.f32.mrb[0].mxu0
      %v859 = vadd.f32 0.0, %v858
      %v860 = vpop.f32.mrb[0].mxu0
      %861 = vmatprep.mubr.bf16.mxu0 0
      %862 = vmatmul.mubr.bf16.gmra.mrb[0].mxu0 %v419
      %v863 = vpop.f32.mrb[0].mxu0
      %v864 = vadd.f32 0.0, %v863
      %v865 = vpop.f32.mrb[0].mxu0
      %v866 = vpop.f32.mrb[0].mxu0
      %v867 = vadd.f32 0.0, %v866
      %v868 = vpop.f32.mrb[0].mxu0
      %869 = vmatprep.mubr.bf16.mxu0 0
      %870 = vmatmul.mubr.bf16.gmra.mrb[0].mxu0 %v420
      %v871 = vpop.f32.mrb[0].mxu0
      %v872 = vadd.f32 0.0, %v871
      %v873 = vpop.f32.mrb[0].mxu0
      %v874 = vpop.f32.mrb[0].mxu0
      %v875 = vadd.f32 0.0, %v874
      %v876 = vpop.f32.mrb[0].mxu0
      %877 = vmatprep.mubr.bf16.mxu0 0
      %878 = vmatmul.mubr.bf16.gmra.mrb[0].mxu0 %v421
      %v879 = vpop.f32.mrb[0].mxu0
      %v880 = vadd.f32 0.0, %v879
      %v881 = vpop.f32.mrb[0].mxu0
      %v882 = vpop.f32.mrb[0].mxu0
      %v883 = vadd.f32 0.0, %v882
      %v884 = vpop.f32.mrb[0].mxu0
      %885 = vmatprep.mubr.bf16.mxu0 0
      %886 = vmatmul.mubr.bf16.gmra.mrb[0].mxu0 %v747
      %v887 = vpop.f32.mrb[0].mxu0
      %v888 = vadd.f32 0.0, %v887
      %v889 = vpop.f32.mrb[0].mxu0
      %v890 = vpop.f32.mrb[0].mxu0
      %v891 = vadd.f32 0.0, %v890
      %v892 = vpop.f32.mrb[0].mxu0
      %893 = vdwg.mxu0
      %v894 = vadd.f32 %v664, %v832
      %v895 = vadd.f32 %v667, %v835
      %v896 = vadd.f32 %v672, %v840
      %v897 = vadd.f32 %v675, %v843
      %v898 = vadd.f32 %v680, %v848
      %v899 = vadd.f32 %v683, %v851
      %v900 = vadd.f32 %v688, %v856
      %v901 = vadd.f32 %v691, %v859
      %v902 = vadd.f32 %v696, %v864
      %v903 = vadd.f32 %v699, %v867
      %v904 = vadd.f32 %v704, %v872
      %v905 = vadd.f32 %v707, %v875
      %v906 = vadd.f32 %v712, %v880
      %v907 = vadd.f32 %v715, %v883
      %v908 = vadd.f32 %v720, %v888
      %v909 = vadd.f32 %v723, %v891
      %v910 = vld [vmem:[%s328] sm:$0xf]
      %v911 = vld [vmem:[%s328 + $0x4] sm:$0xf]
      %v912 = vld [vmem:[%s328 + $0x8] sm:$0x1]
      %v913 = vld [vmem:[%s328 + $0xc] sm:$0xf]
      %v914 = vld [vmem:[%s328 + $0x10] sm:$0xf]
      %v915 = vld [vmem:[%s328 + $0x14] sm:$0x1]
      %v916 = vld [vmem:[%s328 + $0x18] sm:$0xf]
      %v917 = vld [vmem:[%s328 + $0x1c] sm:$0xf]
      %v918 = vld [vmem:[%s328 + $0x20] sm:$0x1]
      %v919 = vld [vmem:[%s328 + $0x24] sm:$0xf]
      %v920 = vld [vmem:[%s328 + $0x28] sm:$0xf]
      %v921 = vld [vmem:[%s328 + $0x2c] sm:$0x1]
      %v922 = vld [vmem:[%s328 + $0x30] sm:$0xf]
      %v923 = vld [vmem:[%s328 + $0x34] sm:$0xf]
      %v924 = vld [vmem:[%s328 + $0x38] sm:$0x1]
      %v925 = vld [vmem:[%s328 + $0x3c] sm:$0xf]
      %v926 = vld [vmem:[%s328 + $0x40] sm:$0xf]
      %v927 = vld [vmem:[%s328 + $0x44] sm:$0x1]
      %v928 = vld [vmem:[%s328 + $0x48] sm:$0xf]
      %v929 = vld [vmem:[%s328 + $0x4c] sm:$0xf]
      %v930 = vld [vmem:[%s328 + $0x50] sm:$0x1]
      %v931 = vld [vmem:[%s328 + $0x54] sm:$0xf]
      %v932 = vld [vmem:[%s328 + $0x58] sm:$0xf]
      %v933 = vld [vmem:[%s328 + $0x5c] sm:$0x1]
      %v934 = vld [vmem:[%s328 + $0x60] sm:$0xf]
      %v935 = vld [vmem:[%s328 + $0x64] sm:$0xf]
      %v936 = vld [vmem:[%s328 + $0x68] sm:$0x1]
      %v937 = vld [vmem:[%s328 + $0x6c] sm:$0xf]
      %v938 = vld [vmem:[%s328 + $0x70] sm:$0xf]
      %v939 = vld [vmem:[%s328 + $0x74] sm:$0x1]
      %vm940 = vsmask.f32 3328
      %vm941 = vsmask.f32 7440
      %vm942 = vmor %vm940, %vm941
      %v944 = vshrl.u32 %v910, 16
      %v946 = vrot.slane %v944, 4
      %v947 = vshll.u32 %v910, 16
      %v949 = vrot.slane %v947, 5
      %v950 = vor.u32 %v946, %v949
      %v951 = vrot.slane %v950, 4
      %v953 = vshll.u32 %v911, 16
      %v955 = vrot.slane %v953, 5
      %v956 = vsel %vm942, %v951, %v955
      %v957 = vshrl.u32 %v911, 16
      %v959 = vrot.slane %v957, 4
      %v960 = vor.u32 %v959, %v955
      %v961 = vrot.slane %v960, 4
      %v963 = vshll.u32 %v912, 16
      %v965 = vrot.slane %v963, 5
      %v966 = vsel %vm942, %v961, %v965
      %v968 = vshrl.u32 %v913, 16
      %v970 = vrot.slane %v968, 4
      %v971 = vshll.u32 %v913, 16
      %v973 = vrot.slane %v971, 5
      %v974 = vor.u32 %v970, %v973
      %v975 = vrot.slane %v974, 4
      %v977 = vshll.u32 %v914, 16
      %v979 = vrot.slane %v977, 5
      %v980 = vsel %vm942, %v975, %v979
      %v981 = vshrl.u32 %v914, 16
      %v983 = vrot.slane %v981, 4
      %v984 = vor.u32 %v983, %v979
      %v985 = vrot.slane %v984, 4
      %v987 = vshll.u32 %v915, 16
      %v989 = vrot.slane %v987, 5
      %v990 = vsel %vm942, %v985, %v989
      %v992 = vshrl.u32 %v916, 16
      %v994 = vrot.slane %v992, 4
      %v995 = vshll.u32 %v916, 16
      %v997 = vrot.slane %v995, 5
      %v998 = vor.u32 %v994, %v997
      %v999 = vrot.slane %v998, 4
      %v1001 = vshll.u32 %v917, 16
      %v1003 = vrot.slane %v1001, 5
      %v1004 = vsel %vm942, %v999, %v1003
      %v1005 = vshrl.u32 %v917, 16
      %v1007 = vrot.slane %v1005, 4
      %v1008 = vor.u32 %v1007, %v1003
      %v1009 = vrot.slane %v1008, 4
      %v1011 = vshll.u32 %v918, 16
      %v1013 = vrot.slane %v1011, 5
      %v1014 = vsel %vm942, %v1009, %v1013
      %v1016 = vshrl.u32 %v919, 16
      %v1018 = vrot.slane %v1016, 4
      %v1019 = vshll.u32 %v919, 16
      %v1021 = vrot.slane %v1019, 5
      %v1022 = vor.u32 %v1018, %v1021
      %v1023 = vrot.slane %v1022, 4
      %v1025 = vshll.u32 %v920, 16
      %v1027 = vrot.slane %v1025, 5
      %v1028 = vsel %vm942, %v1023, %v1027
      %v1029 = vshrl.u32 %v920, 16
      %v1031 = vrot.slane %v1029, 4
      %v1032 = vor.u32 %v1031, %v1027
      %v1033 = vrot.slane %v1032, 4
      %v1035 = vshll.u32 %v921, 16
      %v1037 = vrot.slane %v1035, 5
      %v1038 = vsel %vm942, %v1033, %v1037
      %v1040 = vshrl.u32 %v922, 16
      %v1042 = vrot.slane %v1040, 4
      %v1043 = vshll.u32 %v922, 16
      %v1045 = vrot.slane %v1043, 5
      %v1046 = vor.u32 %v1042, %v1045
      %v1047 = vrot.slane %v1046, 4
      %v1049 = vshll.u32 %v923, 16
      %v1051 = vrot.slane %v1049, 5
      %v1052 = vsel %vm942, %v1047, %v1051
      %v1053 = vshrl.u32 %v923, 16
      %v1055 = vrot.slane %v1053, 4
      %v1056 = vor.u32 %v1055, %v1051
      %v1057 = vrot.slane %v1056, 4
      %v1059 = vshll.u32 %v924, 16
      %v1061 = vrot.slane %v1059, 5
      %v1062 = vsel %vm942, %v1057, %v1061
      %v1064 = vshrl.u32 %v925, 16
      %v1066 = vrot.slane %v1064, 4
      %v1067 = vshll.u32 %v925, 16
      %v1069 = vrot.slane %v1067, 5
      %v1070 = vor.u32 %v1066, %v1069
      %v1071 = vrot.slane %v1070, 4
      %v1073 = vshll.u32 %v926, 16
      %v1075 = vrot.slane %v1073, 5
      %v1076 = vsel %vm942, %v1071, %v1075
      %v1077 = vshrl.u32 %v926, 16
      %v1079 = vrot.slane %v1077, 4
      %v1080 = vor.u32 %v1079, %v1075
      %v1081 = vrot.slane %v1080, 4
      %v1083 = vshll.u32 %v927, 16
      %v1085 = vrot.slane %v1083, 5
      %v1086 = vsel %vm942, %v1081, %v1085
      %v1088 = vshrl.u32 %v928, 16
      %v1090 = vrot.slane %v1088, 4
      %v1091 = vshll.u32 %v928, 16
      %v1093 = vrot.slane %v1091, 5
      %v1094 = vor.u32 %v1090, %v1093
      %v1095 = vrot.slane %v1094, 4
      %v1097 = vshll.u32 %v929, 16
      %v1099 = vrot.slane %v1097, 5
      %v1100 = vsel %vm942, %v1095, %v1099
      %v1101 = vshrl.u32 %v929, 16
      %v1103 = vrot.slane %v1101, 4
      %v1104 = vor.u32 %v1103, %v1099
      %v1105 = vrot.slane %v1104, 4
      %v1107 = vshll.u32 %v930, 16
      %v1109 = vrot.slane %v1107, 5
      %v1110 = vsel %vm942, %v1105, %v1109
      %v1112 = vshrl.u32 %v931, 16
      %v1114 = vrot.slane %v1112, 4
      %v1115 = vshll.u32 %v931, 16
      %v1117 = vrot.slane %v1115, 5
      %v1118 = vor.u32 %v1114, %v1117
      %v1119 = vrot.slane %v1118, 4
      %v1121 = vshll.u32 %v932, 16
      %v1123 = vrot.slane %v1121, 5
      %v1124 = vsel %vm942, %v1119, %v1123
      %v1125 = vshrl.u32 %v932, 16
      %v1127 = vrot.slane %v1125, 4
      %v1128 = vor.u32 %v1127, %v1123
      %v1129 = vrot.slane %v1128, 4
      %v1131 = vshll.u32 %v933, 16
      %v1133 = vrot.slane %v1131, 5
      %v1134 = vsel %vm942, %v1129, %v1133
      %s1135 = scalar_lea.vmem %s300, 64
      %v1136 = vld [vmem:[%s1135] sm:$0xf]
      %v1137 = vld [vmem:[%s1135 + $0x4] sm:$0xf]
      %v1138 = vld [vmem:[%s1135 + $0x8] sm:$0xf]
      %v1139 = vld [vmem:[%s1135 + $0xc] sm:$0xf]
      %v1140 = vld [vmem:[%s1135 + $0x10] sm:$0xf]
      %v1141 = vld [vmem:[%s1135 + $0x14] sm:$0xf]
      %v1142 = vld [vmem:[%s1135 + $0x18] sm:$0xf]
      %v1143 = vld [vmem:[%s1135 + $0x1c] sm:$0xf]
      %v1144 = vld [vmem:[%s1135 + $0x20] sm:$0xf]
      %v1145 = vld [vmem:[%s1135 + $0x24] sm:$0xf]
      %v1146 = vld [vmem:[%s1135 + $0x28] sm:$0xf]
      %v1147 = vld [vmem:[%s1135 + $0x2c] sm:$0xf]
      %v1148 = vld [vmem:[%s1135 + $0x30] sm:$0xf]
      %v1149 = vld [vmem:[%s1135 + $0x34] sm:$0xf]
      %v1150 = vld [vmem:[%s1135 + $0x38] sm:$0xf]
      %v1151 = vld [vmem:[%s1135 + $0x3c] sm:$0xf]
      %v1152 = vunpack.c.l.b16 %v956
      %v1153 = vunpack.c.l.b16 %v966
      %v1154 = vunpack.c.l.b16 %v980
      %v1155 = vunpack.c.l.b16 %v990
      %v1156 = vunpack.c.l.b16 %v1004
      %v1157 = vunpack.c.l.b16 %v1014
      %v1158 = vunpack.c.l.b16 %v1028
      %v1159 = vunpack.c.l.b16 %v1038
      %v1160 = vunpack.c.l.b16 %v1052
      %v1161 = vunpack.c.l.b16 %v1062
      %v1162 = vunpack.c.l.b16 %v1076
      %v1163 = vunpack.c.l.b16 %v1086
      %v1164 = vunpack.c.l.b16 %v1100
      %v1165 = vunpack.c.l.b16 %v1110
      %v1166 = vunpack.c.l.b16 %v1124
      %v1167 = vunpack.c.l.b16 %v1134
      %v1168 = vpack.c.b16 %v1153, %v1152
      %v1169 = vpack.c.b16 %v1155, %v1154
      %v1170 = vpack.c.b16 %v1157, %v1156
      %v1171 = vpack.c.b16 %v1159, %v1158
      %v1172 = vpack.c.b16 %v1161, %v1160
      %v1173 = vpack.c.b16 %v1163, %v1162
      %v1174 = vpack.c.b16 %v1165, %v1164
      %v1175 = vpack.c.b16 %v1167, %v1166
      %v1200 = vunpack.c.l.b16 %v1136
      %v1201 = vunpack.c.l.b16 %v1137
      %v1202 = vunpack.c.l.b16 %v1138
      %v1203 = vunpack.c.l.b16 %v1139
      %v1204 = vunpack.c.l.b16 %v1140
      %v1205 = vunpack.c.l.b16 %v1141
      %v1206 = vunpack.c.l.b16 %v1142
      %v1207 = vunpack.c.l.b16 %v1143
      %v1208 = vunpack.c.l.b16 %v1144
      %v1209 = vunpack.c.l.b16 %v1145
      %v1210 = vunpack.c.l.b16 %v1146
      %v1211 = vunpack.c.l.b16 %v1147
      %v1212 = vunpack.c.l.b16 %v1148
      %v1213 = vunpack.c.l.b16 %v1149
      %v1214 = vunpack.c.l.b16 %v1150
      %v1215 = vunpack.c.l.b16 %v1151
      %v1216 = vpack.c.b16 %v1201, %v1200
      %v1217 = vpack.c.b16 %v1203, %v1202
      %v1218 = vpack.c.b16 %v1205, %v1204
      %v1219 = vpack.c.b16 %v1207, %v1206
      %v1220 = vpack.c.b16 %v1209, %v1208
      %v1221 = vpack.c.b16 %v1211, %v1210
      %v1222 = vpack.c.b16 %v1213, %v1212
      %v1223 = vpack.c.b16 %v1215, %v1214
      %1232 = vmatprep.subr.bf16.mxu0 0
      %1233 = vmatpush1.bf16.msra.mxu0 %v1216
      %1234 = vmatprep.subr.bf16.mxu0 0
      %1235 = vmatpush1.bf16.msra.mxu0 %v1217
      %1236 = vmatprep.subr.bf16.mxu0 0
      %1237 = vmatpush1.bf16.msra.mxu0 %v1218
      %1238 = vmatprep.subr.bf16.mxu0 0
      %1239 = vmatpush1.bf16.msra.mxu0 %v1219
      %1240 = vmatprep.subr.bf16.mxu0 0
      %1241 = vmatpush1.bf16.msra.mxu0 %v1220
      %1242 = vmatprep.subr.bf16.mxu0 0
      %1243 = vmatpush1.bf16.msra.mxu0 %v1221
      %1244 = vmatprep.subr.bf16.mxu0 0
      %1245 = vmatpush1.bf16.msra.mxu0 %v1222
      %1246 = vmatprep.subr.bf16.mxu0 0
      %1247 = vmatpush1.bf16.msra.mxu0 %v1223
      %1248 = vmatprep.subr.bf16.mxu0 0
      %1249 = vmatpush1.bf16.msra.mxu0 0
      %1250 = vmatprep.subr.bf16.mxu0 0
      %1251 = vmatpush1.bf16.msra.mxu0 0
      %1252 = vmatprep.subr.bf16.mxu0 0
      %1253 = vmatpush1.bf16.msra.mxu0 0
      %1254 = vmatprep.subr.bf16.mxu0 0
      %1255 = vmatpush1.bf16.msra.mxu0 0
      %1256 = vmatprep.subr.bf16.mxu0 0
      %1257 = vmatpush1.bf16.msra.mxu0 0
      %1258 = vmatprep.subr.bf16.mxu0 0
      %1259 = vmatpush1.bf16.msra.mxu0 0
      %1260 = vmatprep.subr.bf16.mxu0 0
      %1261 = vmatpush1.bf16.msra.mxu0 0
      %1262 = vmatprep.subr.bf16.mxu0 0
      %1263 = vmatpush1.bf16.msra.mxu0 0
      %1264 = vmatprep.mubr.bf16.mxu0 0
      %1265 = vmatmul.mubr.bf16.gmra.mrb[0].mxu0 %v1168
      %v1266 = vpop.f32.mrb[0].mxu0
      %v1267 = vadd.f32 0.0, %v1266
      %v1268 = vpop.f32.mrb[0].mxu0
      %v1269 = vpop.f32.mrb[0].mxu0
      %v1270 = vadd.f32 0.0, %v1269
      %v1271 = vpop.f32.mrb[0].mxu0
      %1272 = vmatprep.mubr.bf16.mxu0 0
      %1273 = vmatmul.mubr.bf16.gmra.mrb[0].mxu0 %v1169
      %v1274 = vpop.f32.mrb[0].mxu0
      %v1275 = vadd.f32 0.0, %v1274
      %v1276 = vpop.f32.mrb[0].mxu0
      %v1277 = vpop.f32.mrb[0].mxu0
      %v1278 = vadd.f32 0.0, %v1277
      %v1279 = vpop.f32.mrb[0].mxu0
      %1280 = vmatprep.mubr.bf16.mxu0 0
      %1281 = vmatmul.mubr.bf16.gmra.mrb[0].mxu0 %v1170
      %v1282 = vpop.f32.mrb[0].mxu0
      %v1283 = vadd.f32 0.0, %v1282
      %v1284 = vpop.f32.mrb[0].mxu0
      %v1285 = vpop.f32.mrb[0].mxu0
      %v1286 = vadd.f32 0.0, %v1285
      %v1287 = vpop.f32.mrb[0].mxu0
      %1288 = vmatprep.mubr.bf16.mxu0 0
      %1289 = vmatmul.mubr.bf16.gmra.mrb[0].mxu0 %v1171
      %v1290 = vpop.f32.mrb[0].mxu0
      %v1291 = vadd.f32 0.0, %v1290
      %v1292 = vpop.f32.mrb[0].mxu0
      %v1293 = vpop.f32.mrb[0].mxu0
      %v1294 = vadd.f32 0.0, %v1293
      %v1295 = vpop.f32.mrb[0].mxu0
      %1296 = vmatprep.mubr.bf16.mxu0 0
      %1297 = vmatmul.mubr.bf16.gmra.mrb[0].mxu0 %v1172
      %v1298 = vpop.f32.mrb[0].mxu0
      %v1299 = vadd.f32 0.0, %v1298
      %v1300 = vpop.f32.mrb[0].mxu0
      %v1301 = vpop.f32.mrb[0].mxu0
      %v1302 = vadd.f32 0.0, %v1301
      %v1303 = vpop.f32.mrb[0].mxu0
      %1304 = vmatprep.mubr.bf16.mxu0 0
      %1305 = vmatmul.mubr.bf16.gmra.mrb[0].mxu0 %v1173
      %v1306 = vpop.f32.mrb[0].mxu0
      %v1307 = vadd.f32 0.0, %v1306
      %v1308 = vpop.f32.mrb[0].mxu0
      %v1309 = vpop.f32.mrb[0].mxu0
      %v1310 = vadd.f32 0.0, %v1309
      %v1311 = vpop.f32.mrb[0].mxu0
      %1312 = vmatprep.mubr.bf16.mxu0 0
      %1313 = vmatmul.mubr.bf16.gmra.mrb[0].mxu0 %v1174
      %v1314 = vpop.f32.mrb[0].mxu0
      %v1315 = vadd.f32 0.0, %v1314
      %v1316 = vpop.f32.mrb[0].mxu0
      %v1317 = vpop.f32.mrb[0].mxu0
      %v1318 = vadd.f32 0.0, %v1317
      %v1319 = vpop.f32.mrb[0].mxu0
      %1320 = vmatprep.mubr.bf16.mxu0 0
      %1321 = vmatmul.mubr.bf16.gmra.mrb[0].mxu0 %v1175
      %v1322 = vpop.f32.mrb[0].mxu0
      %v1323 = vadd.f32 0.0, %v1322
      %v1324 = vpop.f32.mrb[0].mxu0
      %v1325 = vpop.f32.mrb[0].mxu0
      %v1326 = vadd.f32 0.0, %v1325
      %v1327 = vpop.f32.mrb[0].mxu0
      %1328 = vdwg.mxu0
      %v1329 = vadd.f32 %v894, %v1267
      %v1330 = vadd.f32 %v895, %v1270
      %v1331 = vadd.f32 %v896, %v1275
      %v1332 = vadd.f32 %v897, %v1278
      %v1333 = vadd.f32 %v898, %v1283
      %v1334 = vadd.f32 %v899, %v1286
      %v1335 = vadd.f32 %v900, %v1291
      %v1336 = vadd.f32 %v901, %v1294
      %v1337 = vadd.f32 %v902, %v1299
      %v1338 = vadd.f32 %v903, %v1302
      %v1339 = vadd.f32 %v904, %v1307
      %v1340 = vadd.f32 %v905, %v1310
      %v1341 = vadd.f32 %v906, %v1315
      %v1342 = vadd.f32 %v907, %v1318
      %v1343 = vadd.f32 %v908, %v1323
      %v1344 = vadd.f32 %v909, %v1326
      %v1346 = vshrl.u32 %v934, 16
      %v1348 = vrot.slane %v1346, 4
      %v1349 = vshll.u32 %v934, 16
      %v1351 = vrot.slane %v1349, 5
      %v1352 = vor.u32 %v1348, %v1351
      %v1353 = vrot.slane %v1352, 4
      %v1355 = vshll.u32 %v935, 16
      %v1357 = vrot.slane %v1355, 5
      %v1358 = vsel %vm942, %v1353, %v1357
      %v1359 = vshrl.u32 %v935, 16
      %v1361 = vrot.slane %v1359, 4
      %v1362 = vor.u32 %v1361, %v1357
      %v1363 = vrot.slane %v1362, 4
      %v1365 = vshll.u32 %v936, 16
      %v1367 = vrot.slane %v1365, 5
      %v1368 = vsel %vm942, %v1363, %v1367
      %s1369 = scalar_lea.vmem %s300, 256
      %v1370 = vld [vmem:[%s1369] sm:$0xf]
      %v1371 = vld [vmem:[%s1369 + $0x4] sm:$0xf]
      %v1372 = vld [vmem:[%s1369 + $0x8] sm:$0xf]
      %v1373 = vld [vmem:[%s1369 + $0xc] sm:$0xf]
      %v1374 = vld [vmem:[%s1369 + $0x10] sm:$0xf]
      %v1375 = vld [vmem:[%s1369 + $0x14] sm:$0xf]
      %v1376 = vld [vmem:[%s1369 + $0x18] sm:$0xf]
      %v1377 = vld [vmem:[%s1369 + $0x1c] sm:$0xf]
      %v1378 = vld [vmem:[%s1369 + $0x20] sm:$0xf]
      %v1379 = vld [vmem:[%s1369 + $0x24] sm:$0xf]
      %v1380 = vld [vmem:[%s1369 + $0x28] sm:$0xf]
      %v1381 = vld [vmem:[%s1369 + $0x2c] sm:$0xf]
      %v1382 = vld [vmem:[%s1369 + $0x30] sm:$0xf]
      %v1383 = vld [vmem:[%s1369 + $0x34] sm:$0xf]
      %v1384 = vld [vmem:[%s1369 + $0x38] sm:$0xf]
      %v1385 = vld [vmem:[%s1369 + $0x3c] sm:$0xf]
      %v1386 = vunpack.c.l.b16 %v1358
      %v1387 = vunpack.c.l.b16 %v1368
      %v1388 = vpack.c.b16 %v1387, %v1386
      %v1406 = vunpack.c.l.b16 %v1370
      %v1407 = vunpack.c.l.b16 %v1371
      %v1408 = vunpack.c.l.b16 %v1372
      %v1409 = vunpack.c.l.b16 %v1373
      %v1410 = vunpack.c.l.b16 %v1374
      %v1411 = vunpack.c.l.b16 %v1375
      %v1412 = vunpack.c.l.b16 %v1376
      %v1413 = vunpack.c.l.b16 %v1377
      %v1414 = vunpack.c.l.b16 %v1378
      %v1415 = vunpack.c.l.b16 %v1379
      %v1416 = vunpack.c.l.b16 %v1380
      %v1417 = vunpack.c.l.b16 %v1381
      %v1418 = vunpack.c.l.b16 %v1382
      %v1419 = vunpack.c.l.b16 %v1383
      %v1420 = vunpack.c.l.b16 %v1384
      %v1421 = vunpack.c.l.b16 %v1385
      %v1422 = vpack.c.b16 %v1407, %v1406
      %v1423 = vpack.c.b16 %v1409, %v1408
      %v1424 = vpack.c.b16 %v1411, %v1410
      %v1425 = vpack.c.b16 %v1413, %v1412
      %v1426 = vpack.c.b16 %v1415, %v1414
      %v1427 = vpack.c.b16 %v1417, %v1416
      %v1428 = vpack.c.b16 %v1419, %v1418
      %v1429 = vpack.c.b16 %v1421, %v1420
      %1438 = vmatprep.subr.bf16.mxu0 0
      %1439 = vmatpush1.bf16.msra.mxu0 %v1422
      %1440 = vmatprep.subr.bf16.mxu0 0
      %1441 = vmatpush1.bf16.msra.mxu0 %v1423
      %1442 = vmatprep.subr.bf16.mxu0 0
      %1443 = vmatpush1.bf16.msra.mxu0 %v1424
      %1444 = vmatprep.subr.bf16.mxu0 0
      %1445 = vmatpush1.bf16.msra.mxu0 %v1425
      %1446 = vmatprep.subr.bf16.mxu0 0
      %1447 = vmatpush1.bf16.msra.mxu0 %v1426
      %1448 = vmatprep.subr.bf16.mxu0 0
      %1449 = vmatpush1.bf16.msra.mxu0 %v1427
      %1450 = vmatprep.subr.bf16.mxu0 0
      %1451 = vmatpush1.bf16.msra.mxu0 %v1428
      %1452 = vmatprep.subr.bf16.mxu0 0
      %1453 = vmatpush1.bf16.msra.mxu0 %v1429
      %1454 = vmatprep.subr.bf16.mxu0 0
      %1455 = vmatpush1.bf16.msra.mxu0 0
      %1456 = vmatprep.subr.bf16.mxu0 0
      %1457 = vmatpush1.bf16.msra.mxu0 0
      %1458 = vmatprep.subr.bf16.mxu0 0
      %1459 = vmatpush1.bf16.msra.mxu0 0
      %1460 = vmatprep.subr.bf16.mxu0 0
      %1461 = vmatpush1.bf16.msra.mxu0 0
      %1462 = vmatprep.subr.bf16.mxu0 0
      %1463 = vmatpush1.bf16.msra.mxu0 0
      %1464 = vmatprep.subr.bf16.mxu0 0
      %1465 = vmatpush1.bf16.msra.mxu0 0
      %1466 = vmatprep.subr.bf16.mxu0 0
      %1467 = vmatpush1.bf16.msra.mxu0 0
      %1468 = vmatprep.subr.bf16.mxu0 0
      %1469 = vmatpush1.bf16.msra.mxu0 0
      %1470 = vmatprep.mubr.bf16.mxu0 0
      %1471 = vmatmul.mubr.bf16.gmra.mrb[0].mxu0 %v1169
      %v1472 = vpop.f32.mrb[0].mxu0
      %v1473 = vadd.f32 0.0, %v1472
      %v1474 = vpop.f32.mrb[0].mxu0
      %v1475 = vpop.f32.mrb[0].mxu0
      %v1476 = vadd.f32 0.0, %v1475
      %v1477 = vpop.f32.mrb[0].mxu0
      %1478 = vmatprep.mubr.bf16.mxu0 0
      %1479 = vmatmul.mubr.bf16.gmra.mrb[0].mxu0 %v1170
      %v1480 = vpop.f32.mrb[0].mxu0
      %v1481 = vadd.f32 0.0, %v1480
      %v1482 = vpop.f32.mrb[0].mxu0
      %v1483 = vpop.f32.mrb[0].mxu0
      %v1484 = vadd.f32 0.0, %v1483
      %v1485 = vpop.f32.mrb[0].mxu0
      %1486 = vmatprep.mubr.bf16.mxu0 0
      %1487 = vmatmul.mubr.bf16.gmra.mrb[0].mxu0 %v1171
      %v1488 = vpop.f32.mrb[0].mxu0
      %v1489 = vadd.f32 0.0, %v1488
      %v1490 = vpop.f32.mrb[0].mxu0
      %v1491 = vpop.f32.mrb[0].mxu0
      %v1492 = vadd.f32 0.0, %v1491
      %v1493 = vpop.f32.mrb[0].mxu0
      %1494 = vmatprep.mubr.bf16.mxu0 0
      %1495 = vmatmul.mubr.bf16.gmra.mrb[0].mxu0 %v1172
      %v1496 = vpop.f32.mrb[0].mxu0
      %v1497 = vadd.f32 0.0, %v1496
      %v1498 = vpop.f32.mrb[0].mxu0
      %v1499 = vpop.f32.mrb[0].mxu0
      %v1500 = vadd.f32 0.0, %v1499
      %v1501 = vpop.f32.mrb[0].mxu0
      %1502 = vmatprep.mubr.bf16.mxu0 0
      %1503 = vmatmul.mubr.bf16.gmra.mrb[0].mxu0 %v1173
      %v1504 = vpop.f32.mrb[0].mxu0
      %v1505 = vadd.f32 0.0, %v1504
      %v1506 = vpop.f32.mrb[0].mxu0
      %v1507 = vpop.f32.mrb[0].mxu0
      %v1508 = vadd.f32 0.0, %v1507
      %v1509 = vpop.f32.mrb[0].mxu0
      %1510 = vmatprep.mubr.bf16.mxu0 0
      %1511 = vmatmul.mubr.bf16.gmra.mrb[0].mxu0 %v1174
      %v1512 = vpop.f32.mrb[0].mxu0
      %v1513 = vadd.f32 0.0, %v1512
      %v1514 = vpop.f32.mrb[0].mxu0
      %v1515 = vpop.f32.mrb[0].mxu0
      %v1516 = vadd.f32 0.0, %v1515
      %v1517 = vpop.f32.mrb[0].mxu0
      %1518 = vmatprep.mubr.bf16.mxu0 0
      %1519 = vmatmul.mubr.bf16.gmra.mrb[0].mxu0 %v1175
      %v1520 = vpop.f32.mrb[0].mxu0
      %v1521 = vadd.f32 0.0, %v1520
      %v1522 = vpop.f32.mrb[0].mxu0
      %v1523 = vpop.f32.mrb[0].mxu0
      %v1524 = vadd.f32 0.0, %v1523
      %v1525 = vpop.f32.mrb[0].mxu0
      %1526 = vmatprep.mubr.bf16.mxu0 0
      %1527 = vmatmul.mubr.bf16.gmra.mrb[0].mxu0 %v1388
      %v1528 = vpop.f32.mrb[0].mxu0
      %v1529 = vadd.f32 0.0, %v1528
      %v1530 = vpop.f32.mrb[0].mxu0
      %v1531 = vpop.f32.mrb[0].mxu0
      %v1532 = vadd.f32 0.0, %v1531
      %v1533 = vpop.f32.mrb[0].mxu0
      %1534 = vdwg.mxu0
      %v1535 = vadd.f32 %v1329, %v1473
      %v1536 = vadd.f32 %v1330, %v1476
      %v1537 = vadd.f32 %v1331, %v1481
      %v1538 = vadd.f32 %v1332, %v1484
      %v1539 = vadd.f32 %v1333, %v1489
      %v1540 = vadd.f32 %v1334, %v1492
      %v1541 = vadd.f32 %v1335, %v1497
      %v1542 = vadd.f32 %v1336, %v1500
      %v1543 = vadd.f32 %v1337, %v1505
      %v1544 = vadd.f32 %v1338, %v1508
      %v1545 = vadd.f32 %v1339, %v1513
      %v1546 = vadd.f32 %v1340, %v1516
      %v1547 = vadd.f32 %v1341, %v1521
      %v1548 = vadd.f32 %v1342, %v1524
      %v1549 = vadd.f32 %v1343, %v1529
      %v1550 = vadd.f32 %v1344, %v1532
      %v1552 = vshrl.u32 %v937, 16
      %v1554 = vrot.slane %v1552, 4
      %v1555 = vshll.u32 %v937, 16
      %v1557 = vrot.slane %v1555, 5
      %v1558 = vor.u32 %v1554, %v1557
      %v1559 = vrot.slane %v1558, 4
      %v1561 = vshll.u32 %v938, 16
      %v1563 = vrot.slane %v1561, 5
      %v1564 = vsel %vm942, %v1559, %v1563
      %v1565 = vshrl.u32 %v938, 16
      %v1567 = vrot.slane %v1565, 4
      %v1568 = vor.u32 %v1567, %v1563
      %v1569 = vrot.slane %v1568, 4
      %v1571 = vshll.u32 %v939, 16
      %v1573 = vrot.slane %v1571, 5
      %v1574 = vsel %vm942, %v1569, %v1573
      %s1575 = scalar_lea.vmem %s300, 448
      %v1576 = vld [vmem:[%s1575] sm:$0xf]
      %v1577 = vld [vmem:[%s1575 + $0x4] sm:$0xf]
      %v1578 = vld [vmem:[%s1575 + $0x8] sm:$0xf]
      %v1579 = vld [vmem:[%s1575 + $0xc] sm:$0xf]
      %v1580 = vld [vmem:[%s1575 + $0x10] sm:$0xf]
      %v1581 = vld [vmem:[%s1575 + $0x14] sm:$0xf]
      %v1582 = vld [vmem:[%s1575 + $0x18] sm:$0xf]
      %v1583 = vld [vmem:[%s1575 + $0x1c] sm:$0xf]
      %v1584 = vld [vmem:[%s1575 + $0x20] sm:$0xf]
      %v1585 = vld [vmem:[%s1575 + $0x24] sm:$0xf]
      %v1586 = vld [vmem:[%s1575 + $0x28] sm:$0xf]
      %v1587 = vld [vmem:[%s1575 + $0x2c] sm:$0xf]
      %v1588 = vld [vmem:[%s1575 + $0x30] sm:$0xf]
      %v1589 = vld [vmem:[%s1575 + $0x34] sm:$0xf]
      %v1590 = vld [vmem:[%s1575 + $0x38] sm:$0xf]
      %v1591 = vld [vmem:[%s1575 + $0x3c] sm:$0xf]
      %v1592 = vunpack.c.l.b16 %v1564
      %v1593 = vunpack.c.l.b16 %v1574
      %v1594 = vpack.c.b16 %v1593, %v1592
      %v1612 = vunpack.c.l.b16 %v1576
      %v1613 = vunpack.c.l.b16 %v1577
      %v1614 = vunpack.c.l.b16 %v1578
      %v1615 = vunpack.c.l.b16 %v1579
      %v1616 = vunpack.c.l.b16 %v1580
      %v1617 = vunpack.c.l.b16 %v1581
      %v1618 = vunpack.c.l.b16 %v1582
      %v1619 = vunpack.c.l.b16 %v1583
      %v1620 = vunpack.c.l.b16 %v1584
      %v1621 = vunpack.c.l.b16 %v1585
      %v1622 = vunpack.c.l.b16 %v1586
      %v1623 = vunpack.c.l.b16 %v1587
      %v1624 = vunpack.c.l.b16 %v1588
      %v1625 = vunpack.c.l.b16 %v1589
      %v1626 = vunpack.c.l.b16 %v1590
      %v1627 = vunpack.c.l.b16 %v1591
      %v1628 = vpack.c.b16 %v1613, %v1612
      %v1629 = vpack.c.b16 %v1615, %v1614
      %v1630 = vpack.c.b16 %v1617, %v1616
      %v1631 = vpack.c.b16 %v1619, %v1618
      %v1632 = vpack.c.b16 %v1621, %v1620
      %v1633 = vpack.c.b16 %v1623, %v1622
      %v1634 = vpack.c.b16 %v1625, %v1624
      %v1635 = vpack.c.b16 %v1627, %v1626
      %1644 = vmatprep.subr.bf16.mxu0 0
      %1645 = vmatpush1.bf16.msra.mxu0 %v1628
      %1646 = vmatprep.subr.bf16.mxu0 0
      %1647 = vmatpush1.bf16.msra.mxu0 %v1629
      %1648 = vmatprep.subr.bf16.mxu0 0
      %1649 = vmatpush1.bf16.msra.mxu0 %v1630
      %1650 = vmatprep.subr.bf16.mxu0 0
      %1651 = vmatpush1.bf16.msra.mxu0 %v1631
      %1652 = vmatprep.subr.bf16.mxu0 0
      %1653 = vmatpush1.bf16.msra.mxu0 %v1632
      %1654 = vmatprep.subr.bf16.mxu0 0
      %1655 = vmatpush1.bf16.msra.mxu0 %v1633
      %1656 = vmatprep.subr.bf16.mxu0 0
      %1657 = vmatpush1.bf16.msra.mxu0 %v1634
      %1658 = vmatprep.subr.bf16.mxu0 0
      %1659 = vmatpush1.bf16.msra.mxu0 %v1635
      %1660 = vmatprep.subr.bf16.mxu0 0
      %1661 = vmatpush1.bf16.msra.mxu0 0
      %1662 = vmatprep.subr.bf16.mxu0 0
      %1663 = vmatpush1.bf16.msra.mxu0 0
      %1664 = vmatprep.subr.bf16.mxu0 0
      %1665 = vmatpush1.bf16.msra.mxu0 0
      %1666 = vmatprep.subr.bf16.mxu0 0
      %1667 = vmatpush1.bf16.msra.mxu0 0
      %1668 = vmatprep.subr.bf16.mxu0 0
      %1669 = vmatpush1.bf16.msra.mxu0 0
      %1670 = vmatprep.subr.bf16.mxu0 0
      %1671 = vmatpush1.bf16.msra.mxu0 0
      %1672 = vmatprep.subr.bf16.mxu0 0
      %1673 = vmatpush1.bf16.msra.mxu0 0
      %1674 = vmatprep.subr.bf16.mxu0 0
      %1675 = vmatpush1.bf16.msra.mxu0 0
      %1676 = vmatprep.mubr.bf16.mxu0 0
      %1677 = vmatmul.mubr.bf16.gmra.mrb[0].mxu0 %v1170
      %v1678 = vpop.f32.mrb[0].mxu0
      %v1679 = vadd.f32 0.0, %v1678
      %v1680 = vpop.f32.mrb[0].mxu0
      %v1681 = vpop.f32.mrb[0].mxu0
      %v1682 = vadd.f32 0.0, %v1681
      %v1683 = vpop.f32.mrb[0].mxu0
      %1684 = vmatprep.mubr.bf16.mxu0 0
      %1685 = vmatmul.mubr.bf16.gmra.mrb[0].mxu0 %v1171
      %v1686 = vpop.f32.mrb[0].mxu0
      %v1687 = vadd.f32 0.0, %v1686
      %v1688 = vpop.f32.mrb[0].mxu0
      %v1689 = vpop.f32.mrb[0].mxu0
      %v1690 = vadd.f32 0.0, %v1689
      %v1691 = vpop.f32.mrb[0].mxu0
      %1692 = vmatprep.mubr.bf16.mxu0 0
      %1693 = vmatmul.mubr.bf16.gmra.mrb[0].mxu0 %v1172
      %v1694 = vpop.f32.mrb[0].mxu0
      %v1695 = vadd.f32 0.0, %v1694
      %v1696 = vpop.f32.mrb[0].mxu0
      %v1697 = vpop.f32.mrb[0].mxu0
      %v1698 = vadd.f32 0.0, %v1697
      %v1699 = vpop.f32.mrb[0].mxu0
      %1700 = vmatprep.mubr.bf16.mxu0 0
      %1701 = vmatmul.mubr.bf16.gmra.mrb[0].mxu0 %v1173
      %v1702 = vpop.f32.mrb[0].mxu0
      %v1703 = vadd.f32 0.0, %v1702
      %v1704 = vpop.f32.mrb[0].mxu0
      %v1705 = vpop.f32.mrb[0].mxu0
      %v1706 = vadd.f32 0.0, %v1705
      %v1707 = vpop.f32.mrb[0].mxu0
      %1708 = vmatprep.mubr.bf16.mxu0 0
      %1709 = vmatmul.mubr.bf16.gmra.mrb[0].mxu0 %v1174
      %v1710 = vpop.f32.mrb[0].mxu0
      %v1711 = vadd.f32 0.0, %v1710
      %v1712 = vpop.f32.mrb[0].mxu0
      %v1713 = vpop.f32.mrb[0].mxu0
      %v1714 = vadd.f32 0.0, %v1713
      %v1715 = vpop.f32.mrb[0].mxu0
      %1716 = vmatprep.mubr.bf16.mxu0 0
      %1717 = vmatmul.mubr.bf16.gmra.mrb[0].mxu0 %v1175
      %v1718 = vpop.f32.mrb[0].mxu0
      %v1719 = vadd.f32 0.0, %v1718
      %v1720 = vpop.f32.mrb[0].mxu0
      %v1721 = vpop.f32.mrb[0].mxu0
      %v1722 = vadd.f32 0.0, %v1721
      %v1723 = vpop.f32.mrb[0].mxu0
      %1724 = vmatprep.mubr.bf16.mxu0 0
      %1725 = vmatmul.mubr.bf16.gmra.mrb[0].mxu0 %v1388
      %v1726 = vpop.f32.mrb[0].mxu0
      %v1727 = vadd.f32 0.0, %v1726
      %v1728 = vpop.f32.mrb[0].mxu0
      %v1729 = vpop.f32.mrb[0].mxu0
      %v1730 = vadd.f32 0.0, %v1729
      %v1731 = vpop.f32.mrb[0].mxu0
      %1732 = vmatprep.mubr.bf16.mxu0 0
      %1733 = vmatmul.mubr.bf16.gmra.mrb[0].mxu0 %v1594
      %v1734 = vpop.f32.mrb[0].mxu0
      %v1735 = vadd.f32 0.0, %v1734
      %v1736 = vpop.f32.mrb[0].mxu0
      %v1737 = vpop.f32.mrb[0].mxu0
      %v1738 = vadd.f32 0.0, %v1737
      %v1739 = vpop.f32.mrb[0].mxu0
      %1740 = vdwg.mxu0
      %v1741 = vadd.f32 %v1535, %v1679
      %v1742 = vadd.f32 %v1536, %v1682
      %v1743 = vadd.f32 %v1537, %v1687
      %v1744 = vadd.f32 %v1538, %v1690
      %v1745 = vadd.f32 %v1539, %v1695
      %v1746 = vadd.f32 %v1540, %v1698
      %v1747 = vadd.f32 %v1541, %v1703
      %v1748 = vadd.f32 %v1542, %v1706
      %v1749 = vadd.f32 %v1543, %v1711
      %v1750 = vadd.f32 %v1544, %v1714
      %v1751 = vadd.f32 %v1545, %v1719
      %v1752 = vadd.f32 %v1546, %v1722
      %v1753 = vadd.f32 %v1547, %v1727
      %v1754 = vadd.f32 %v1548, %v1730
      %v1755 = vadd.f32 %v1549, %v1735
      %v1756 = vadd.f32 %v1550, %v1738
      %v1757 = vld [vmem:[%s328] sm:$0xe]
      %v1758 = vld [vmem:[%s328 + $0xc] sm:$0xe]
      %v1759 = vld [vmem:[%s328 + $0x18] sm:$0xe]
      %v1760 = vld [vmem:[%s328 + $0x24] sm:$0xe]
      %v1761 = vld [vmem:[%s328 + $0x30] sm:$0xe]
      %v1762 = vld [vmem:[%s328 + $0x3c] sm:$0xe]
      %v1763 = vld [vmem:[%s328 + $0x48] sm:$0xe]
      %v1764 = vld [vmem:[%s328 + $0x54] sm:$0xe]
      %v1765 = vld [vmem:[%s328 + $0x60] sm:$0xe]
      %v1766 = vld [vmem:[%s328 + $0x6c] sm:$0xe]
      %vm1791 = vcmask 1042432
      %vm1792 = vcmask 1046532
      %vm1793 = vmor %vm1791, %vm1792
      %v1794 = vrot.slane %v1757, 5
      %v1795 = vrot.slane %v1794, 4
      %v1796 = vrot.slane %v911, 5
      %v1797 = vsel %vm1793, %v1795, %v1796
      %v1798 = vrot.slane %v1796, 4
      %v1799 = vrot.slane %v912, 5
      %v1800 = vsel %vm1793, %v1798, %v1799
      %v1801 = vrot.slane %v1758, 5
      %v1802 = vrot.slane %v1801, 4
      %v1803 = vrot.slane %v914, 5
      %v1804 = vsel %vm1793, %v1802, %v1803
      %v1805 = vrot.slane %v1803, 4
      %v1806 = vrot.slane %v915, 5
      %v1807 = vsel %vm1793, %v1805, %v1806
      %v1808 = vrot.slane %v1759, 5
      %v1809 = vrot.slane %v1808, 4
      %v1810 = vrot.slane %v917, 5
      %v1811 = vsel %vm1793, %v1809, %v1810
      %v1812 = vrot.slane %v1810, 4
      %v1813 = vrot.slane %v918, 5
      %v1814 = vsel %vm1793, %v1812, %v1813
      %v1815 = vrot.slane %v1760, 5
      %v1816 = vrot.slane %v1815, 4
      %v1817 = vrot.slane %v920, 5
      %v1818 = vsel %vm1793, %v1816, %v1817
      %v1819 = vrot.slane %v1817, 4
      %v1820 = vrot.slane %v921, 5
      %v1821 = vsel %vm1793, %v1819, %v1820
      %v1822 = vrot.slane %v1761, 5
      %v1823 = vrot.slane %v1822, 4
      %v1824 = vrot.slane %v923, 5
      %v1825 = vsel %vm1793, %v1823, %v1824
      %v1826 = vrot.slane %v1824, 4
      %v1827 = vrot.slane %v924, 5
      %v1828 = vsel %vm1793, %v1826, %v1827
      %v1829 = vrot.slane %v1762, 5
      %v1830 = vrot.slane %v1829, 4
      %v1831 = vrot.slane %v926, 5
      %v1832 = vsel %vm1793, %v1830, %v1831
      %v1833 = vrot.slane %v1831, 4
      %v1834 = vrot.slane %v927, 5
      %v1835 = vsel %vm1793, %v1833, %v1834
      %v1836 = vrot.slane %v1763, 5
      %v1837 = vrot.slane %v1836, 4
      %v1838 = vrot.slane %v929, 5
      %v1839 = vsel %vm1793, %v1837, %v1838
      %v1840 = vrot.slane %v1838, 4
      %v1841 = vrot.slane %v930, 5
      %v1842 = vsel %vm1793, %v1840, %v1841
      %v1843 = vrot.slane %v1764, 5
      %v1844 = vrot.slane %v1843, 4
      %v1845 = vrot.slane %v932, 5
      %v1846 = vsel %vm1793, %v1844, %v1845
      %v1847 = vrot.slane %v1845, 4
      %v1848 = vrot.slane %v933, 5
      %v1849 = vsel %vm1793, %v1847, %v1848
      %s1850 = scalar_lea.vmem %s300, 128
      %v1851 = vld [vmem:[%s1850] sm:$0xf]
      %v1852 = vld [vmem:[%s1850 + $0x4] sm:$0xf]
      %v1853 = vld [vmem:[%s1850 + $0x8] sm:$0xf]
      %v1854 = vld [vmem:[%s1850 + $0xc] sm:$0xf]
      %v1855 = vld [vmem:[%s1850 + $0x10] sm:$0xf]
      %v1856 = vld [vmem:[%s1850 + $0x14] sm:$0xf]
      %v1857 = vld [vmem:[%s1850 + $0x18] sm:$0xf]
      %v1858 = vld [vmem:[%s1850 + $0x1c] sm:$0xf]
      %v1859 = vld [vmem:[%s1850 + $0x20] sm:$0xf]
      %v1860 = vld [vmem:[%s1850 + $0x24] sm:$0xf]
      %v1861 = vld [vmem:[%s1850 + $0x28] sm:$0xf]
      %v1862 = vld [vmem:[%s1850 + $0x2c] sm:$0xf]
      %v1863 = vld [vmem:[%s1850 + $0x30] sm:$0xf]
      %v1864 = vld [vmem:[%s1850 + $0x34] sm:$0xf]
      %v1865 = vld [vmem:[%s1850 + $0x38] sm:$0xf]
      %v1866 = vld [vmem:[%s1850 + $0x3c] sm:$0xf]
      %v1867 = vunpack.c.l.b16 %v1797
      %v1868 = vunpack.c.l.b16 %v1800
      %v1869 = vunpack.c.l.b16 %v1804
      %v1870 = vunpack.c.l.b16 %v1807
      %v1871 = vunpack.c.l.b16 %v1811
      %v1872 = vunpack.c.l.b16 %v1814
      %v1873 = vunpack.c.l.b16 %v1818
      %v1874 = vunpack.c.l.b16 %v1821
      %v1875 = vunpack.c.l.b16 %v1825
      %v1876 = vunpack.c.l.b16 %v1828
      %v1877 = vunpack.c.l.b16 %v1832
      %v1878 = vunpack.c.l.b16 %v1835
      %v1879 = vunpack.c.l.b16 %v1839
      %v1880 = vunpack.c.l.b16 %v1842
      %v1881 = vunpack.c.l.b16 %v1846
      %v1882 = vunpack.c.l.b16 %v1849
      %v1883 = vpack.c.b16 %v1868, %v1867
      %v1884 = vpack.c.b16 %v1870, %v1869
      %v1885 = vpack.c.b16 %v1872, %v1871
      %v1886 = vpack.c.b16 %v1874, %v1873
      %v1887 = vpack.c.b16 %v1876, %v1875
      %v1888 = vpack.c.b16 %v1878, %v1877
      %v1889 = vpack.c.b16 %v1880, %v1879
      %v1890 = vpack.c.b16 %v1882, %v1881
      %v1915 = vunpack.c.l.b16 %v1851
      %v1916 = vunpack.c.l.b16 %v1852
      %v1917 = vunpack.c.l.b16 %v1853
      %v1918 = vunpack.c.l.b16 %v1854
      %v1919 = vunpack.c.l.b16 %v1855
      %v1920 = vunpack.c.l.b16 %v1856
      %v1921 = vunpack.c.l.b16 %v1857
      %v1922 = vunpack.c.l.b16 %v1858
      %v1923 = vunpack.c.l.b16 %v1859
      %v1924 = vunpack.c.l.b16 %v1860
      %v1925 = vunpack.c.l.b16 %v1861
      %v1926 = vunpack.c.l.b16 %v1862
      %v1927 = vunpack.c.l.b16 %v1863
      %v1928 = vunpack.c.l.b16 %v1864
      %v1929 = vunpack.c.l.b16 %v1865
      %v1930 = vunpack.c.l.b16 %v1866
      %v1931 = vpack.c.b16 %v1916, %v1915
      %v1932 = vpack.c.b16 %v1918, %v1917
      %v1933 = vpack.c.b16 %v1920, %v1919
      %v1934 = vpack.c.b16 %v1922, %v1921
      %v1935 = vpack.c.b16 %v1924, %v1923
      %v1936 = vpack.c.b16 %v1926, %v1925
      %v1937 = vpack.c.b16 %v1928, %v1927
      %v1938 = vpack.c.b16 %v1930, %v1929
      %1947 = vmatprep.subr.bf16.mxu0 0
      %1948 = vmatpush1.bf16.msra.mxu0 %v1931
      %1949 = vmatprep.subr.bf16.mxu0 0
      %1950 = vmatpush1.bf16.msra.mxu0 %v1932
      %1951 = vmatprep.subr.bf16.mxu0 0
      %1952 = vmatpush1.bf16.msra.mxu0 %v1933
      %1953 = vmatprep.subr.bf16.mxu0 0
      %1954 = vmatpush1.bf16.msra.mxu0 %v1934
      %1955 = vmatprep.subr.bf16.mxu0 0
      %1956 = vmatpush1.bf16.msra.mxu0 %v1935
      %1957 = vmatprep.subr.bf16.mxu0 0
      %1958 = vmatpush1.bf16.msra.mxu0 %v1936
      %1959 = vmatprep.subr.bf16.mxu0 0
      %1960 = vmatpush1.bf16.msra.mxu0 %v1937
      %1961 = vmatprep.subr.bf16.mxu0 0
      %1962 = vmatpush1.bf16.msra.mxu0 %v1938
      %1963 = vmatprep.subr.bf16.mxu0 0
      %1964 = vmatpush1.bf16.msra.mxu0 0
      %1965 = vmatprep.subr.bf16.mxu0 0
      %1966 = vmatpush1.bf16.msra.mxu0 0
      %1967 = vmatprep.subr.bf16.mxu0 0
      %1968 = vmatpush1.bf16.msra.mxu0 0
      %1969 = vmatprep.subr.bf16.mxu0 0
      %1970 = vmatpush1.bf16.msra.mxu0 0
      %1971 = vmatprep.subr.bf16.mxu0 0
      %1972 = vmatpush1.bf16.msra.mxu0 0
      %1973 = vmatprep.subr.bf16.mxu0 0
      %1974 = vmatpush1.bf16.msra.mxu0 0
      %1975 = vmatprep.subr.bf16.mxu0 0
      %1976 = vmatpush1.bf16.msra.mxu0 0
      %1977 = vmatprep.subr.bf16.mxu0 0
      %1978 = vmatpush1.bf16.msra.mxu0 0
      %1979 = vmatprep.mubr.bf16.mxu0 0
      %1980 = vmatmul.mubr.bf16.gmra.mrb[0].mxu0 %v1883
      %v1981 = vpop.f32.mrb[0].mxu0
      %v1982 = vadd.f32 0.0, %v1981
      %v1983 = vpop.f32.mrb[0].mxu0
      %v1984 = vpop.f32.mrb[0].mxu0
      %v1985 = vadd.f32 0.0, %v1984
      %v1986 = vpop.f32.mrb[0].mxu0
      %1987 = vmatprep.mubr.bf16.mxu0 0
      %1988 = vmatmul.mubr.bf16.gmra.mrb[0].mxu0 %v1884
      %v1989 = vpop.f32.mrb[0].mxu0
      %v1990 = vadd.f32 0.0, %v1989
      %v1991 = vpop.f32.mrb[0].mxu0
      %v1992 = vpop.f32.mrb[0].mxu0
      %v1993 = vadd.f32 0.0, %v1992
      %v1994 = vpop.f32.mrb[0].mxu0
      %1995 = vmatprep.mubr.bf16.mxu0 0
      %1996 = vmatmul.mubr.bf16.gmra.mrb[0].mxu0 %v1885
      %v1997 = vpop.f32.mrb[0].mxu0
      %v1998 = vadd.f32 0.0, %v1997
      %v1999 = vpop.f32.mrb[0].mxu0
      %v2000 = vpop.f32.mrb[0].mxu0
      %v2001 = vadd.f32 0.0, %v2000
      %v2002 = vpop.f32.mrb[0].mxu0
      %2003 = vmatprep.mubr.bf16.mxu0 0
      %2004 = vmatmul.mubr.bf16.gmra.mrb[0].mxu0 %v1886
      %v2005 = vpop.f32.mrb[0].mxu0
      %v2006 = vadd.f32 0.0, %v2005
      %v2007 = vpop.f32.mrb[0].mxu0
      %v2008 = vpop.f32.mrb[0].mxu0
      %v2009 = vadd.f32 0.0, %v2008
      %v2010 = vpop.f32.mrb[0].mxu0
      %2011 = vmatprep.mubr.bf16.mxu0 0
      %2012 = vmatmul.mubr.bf16.gmra.mrb[0].mxu0 %v1887
      %v2013 = vpop.f32.mrb[0].mxu0
      %v2014 = vadd.f32 0.0, %v2013
      %v2015 = vpop.f32.mrb[0].mxu0
      %v2016 = vpop.f32.mrb[0].mxu0
      %v2017 = vadd.f32 0.0, %v2016
      %v2018 = vpop.f32.mrb[0].mxu0
      %2019 = vmatprep.mubr.bf16.mxu0 0
      %2020 = vmatmul.mubr.bf16.gmra.mrb[0].mxu0 %v1888
      %v2021 = vpop.f32.mrb[0].mxu0
      %v2022 = vadd.f32 0.0, %v2021
      %v2023 = vpop.f32.mrb[0].mxu0
      %v2024 = vpop.f32.mrb[0].mxu0
      %v2025 = vadd.f32 0.0, %v2024
      %v2026 = vpop.f32.mrb[0].mxu0
      %2027 = vmatprep.mubr.bf16.mxu0 0
      %2028 = vmatmul.mubr.bf16.gmra.mrb[0].mxu0 %v1889
      %v2029 = vpop.f32.mrb[0].mxu0
      %v2030 = vadd.f32 0.0, %v2029
      %v2031 = vpop.f32.mrb[0].mxu0
      %v2032 = vpop.f32.mrb[0].mxu0
      %v2033 = vadd.f32 0.0, %v2032
      %v2034 = vpop.f32.mrb[0].mxu0
      %2035 = vmatprep.mubr.bf16.mxu0 0
      %2036 = vmatmul.mubr.bf16.gmra.mrb[0].mxu0 %v1890
      %v2037 = vpop.f32.mrb[0].mxu0
      %v2038 = vadd.f32 0.0, %v2037
      %v2039 = vpop.f32.mrb[0].mxu0
      %v2040 = vpop.f32.mrb[0].mxu0
      %v2041 = vadd.f32 0.0, %v2040
      %v2042 = vpop.f32.mrb[0].mxu0
      %2043 = vdwg.mxu0
      %v2044 = vadd.f32 %v1741, %v1982
      %v2045 = vadd.f32 %v1742, %v1985
      %v2046 = vadd.f32 %v1743, %v1990
      %v2047 = vadd.f32 %v1744, %v1993
      %v2048 = vadd.f32 %v1745, %v1998
      %v2049 = vadd.f32 %v1746, %v2001
      %v2050 = vadd.f32 %v1747, %v2006
      %v2051 = vadd.f32 %v1748, %v2009
      %v2052 = vadd.f32 %v1749, %v2014
      %v2053 = vadd.f32 %v1750, %v2017
      %v2054 = vadd.f32 %v1751, %v2022
      %v2055 = vadd.f32 %v1752, %v2025
      %v2056 = vadd.f32 %v1753, %v2030
      %v2057 = vadd.f32 %v1754, %v2033
      %v2058 = vadd.f32 %v1755, %v2038
      %v2059 = vadd.f32 %v1756, %v2041
      %v2063 = vrot.slane %v1765, 5
      %v2064 = vrot.slane %v2063, 4
      %v2065 = vrot.slane %v935, 5
      %v2066 = vsel %vm1793, %v2064, %v2065
      %v2067 = vrot.slane %v2065, 4
      %v2068 = vrot.slane %v936, 5
      %v2069 = vsel %vm1793, %v2067, %v2068
      %s2070 = scalar_lea.vmem %s300, 320
      %v2071 = vld [vmem:[%s2070] sm:$0xf]
      %v2072 = vld [vmem:[%s2070 + $0x4] sm:$0xf]
      %v2073 = vld [vmem:[%s2070 + $0x8] sm:$0xf]
      %v2074 = vld [vmem:[%s2070 + $0xc] sm:$0xf]
      %v2075 = vld [vmem:[%s2070 + $0x10] sm:$0xf]
      %v2076 = vld [vmem:[%s2070 + $0x14] sm:$0xf]
      %v2077 = vld [vmem:[%s2070 + $0x18] sm:$0xf]
      %v2078 = vld [vmem:[%s2070 + $0x1c] sm:$0xf]
      %v2079 = vld [vmem:[%s2070 + $0x20] sm:$0xf]
      %v2080 = vld [vmem:[%s2070 + $0x24] sm:$0xf]
      %v2081 = vld [vmem:[%s2070 + $0x28] sm:$0xf]
      %v2082 = vld [vmem:[%s2070 + $0x2c] sm:$0xf]
      %v2083 = vld [vmem:[%s2070 + $0x30] sm:$0xf]
      %v2084 = vld [vmem:[%s2070 + $0x34] sm:$0xf]
      %v2085 = vld [vmem:[%s2070 + $0x38] sm:$0xf]
      %v2086 = vld [vmem:[%s2070 + $0x3c] sm:$0xf]
      %v2087 = vunpack.c.l.b16 %v2066
      %v2088 = vunpack.c.l.b16 %v2069
      %v2089 = vpack.c.b16 %v2088, %v2087
      %v2107 = vunpack.c.l.b16 %v2071
      %v2108 = vunpack.c.l.b16 %v2072
      %v2109 = vunpack.c.l.b16 %v2073
      %v2110 = vunpack.c.l.b16 %v2074
      %v2111 = vunpack.c.l.b16 %v2075
      %v2112 = vunpack.c.l.b16 %v2076
      %v2113 = vunpack.c.l.b16 %v2077
      %v2114 = vunpack.c.l.b16 %v2078
      %v2115 = vunpack.c.l.b16 %v2079
      %v2116 = vunpack.c.l.b16 %v2080
      %v2117 = vunpack.c.l.b16 %v2081
      %v2118 = vunpack.c.l.b16 %v2082
      %v2119 = vunpack.c.l.b16 %v2083
      %v2120 = vunpack.c.l.b16 %v2084
      %v2121 = vunpack.c.l.b16 %v2085
      %v2122 = vunpack.c.l.b16 %v2086
      %v2123 = vpack.c.b16 %v2108, %v2107
      %v2124 = vpack.c.b16 %v2110, %v2109
      %v2125 = vpack.c.b16 %v2112, %v2111
      %v2126 = vpack.c.b16 %v2114, %v2113
      %v2127 = vpack.c.b16 %v2116, %v2115
      %v2128 = vpack.c.b16 %v2118, %v2117
      %v2129 = vpack.c.b16 %v2120, %v2119
      %v2130 = vpack.c.b16 %v2122, %v2121
      %2139 = vmatprep.subr.bf16.mxu0 0
      %2140 = vmatpush1.bf16.msra.mxu0 %v2123
      %2141 = vmatprep.subr.bf16.mxu0 0
      %2142 = vmatpush1.bf16.msra.mxu0 %v2124
      %2143 = vmatprep.subr.bf16.mxu0 0
      %2144 = vmatpush1.bf16.msra.mxu0 %v2125
      %2145 = vmatprep.subr.bf16.mxu0 0
      %2146 = vmatpush1.bf16.msra.mxu0 %v2126
      %2147 = vmatprep.subr.bf16.mxu0 0
      %2148 = vmatpush1.bf16.msra.mxu0 %v2127
      %2149 = vmatprep.subr.bf16.mxu0 0
      %2150 = vmatpush1.bf16.msra.mxu0 %v2128
      %2151 = vmatprep.subr.bf16.mxu0 0
      %2152 = vmatpush1.bf16.msra.mxu0 %v2129
      %2153 = vmatprep.subr.bf16.mxu0 0
      %2154 = vmatpush1.bf16.msra.mxu0 %v2130
      %2155 = vmatprep.subr.bf16.mxu0 0
      %2156 = vmatpush1.bf16.msra.mxu0 0
      %2157 = vmatprep.subr.bf16.mxu0 0
      %2158 = vmatpush1.bf16.msra.mxu0 0
      %2159 = vmatprep.subr.bf16.mxu0 0
      %2160 = vmatpush1.bf16.msra.mxu0 0
      %2161 = vmatprep.subr.bf16.mxu0 0
      %2162 = vmatpush1.bf16.msra.mxu0 0
      %2163 = vmatprep.subr.bf16.mxu0 0
      %2164 = vmatpush1.bf16.msra.mxu0 0
      %2165 = vmatprep.subr.bf16.mxu0 0
      %2166 = vmatpush1.bf16.msra.mxu0 0
      %2167 = vmatprep.subr.bf16.mxu0 0
      %2168 = vmatpush1.bf16.msra.mxu0 0
      %2169 = vmatprep.subr.bf16.mxu0 0
      %2170 = vmatpush1.bf16.msra.mxu0 0
      %2171 = vmatprep.mubr.bf16.mxu0 0
      %2172 = vmatmul.mubr.bf16.gmra.mrb[0].mxu0 %v1884
      %v2173 = vpop.f32.mrb[0].mxu0
      %v2174 = vadd.f32 0.0, %v2173
      %v2175 = vpop.f32.mrb[0].mxu0
      %v2176 = vpop.f32.mrb[0].mxu0
      %v2177 = vadd.f32 0.0, %v2176
      %v2178 = vpop.f32.mrb[0].mxu0
      %2179 = vmatprep.mubr.bf16.mxu0 0
      %2180 = vmatmul.mubr.bf16.gmra.mrb[0].mxu0 %v1885
      %v2181 = vpop.f32.mrb[0].mxu0
      %v2182 = vadd.f32 0.0, %v2181
      %v2183 = vpop.f32.mrb[0].mxu0
      %v2184 = vpop.f32.mrb[0].mxu0
      %v2185 = vadd.f32 0.0, %v2184
      %v2186 = vpop.f32.mrb[0].mxu0
      %2187 = vmatprep.mubr.bf16.mxu0 0
      %2188 = vmatmul.mubr.bf16.gmra.mrb[0].mxu0 %v1886
      %v2189 = vpop.f32.mrb[0].mxu0
      %v2190 = vadd.f32 0.0, %v2189
      %v2191 = vpop.f32.mrb[0].mxu0
      %v2192 = vpop.f32.mrb[0].mxu0
      %v2193 = vadd.f32 0.0, %v2192
      %v2194 = vpop.f32.mrb[0].mxu0
      %2195 = vmatprep.mubr.bf16.mxu0 0
      %2196 = vmatmul.mubr.bf16.gmra.mrb[0].mxu0 %v1887
      %v2197 = vpop.f32.mrb[0].mxu0
      %v2198 = vadd.f32 0.0, %v2197
      %v2199 = vpop.f32.mrb[0].mxu0
      %v2200 = vpop.f32.mrb[0].mxu0
      %v2201 = vadd.f32 0.0, %v2200
      %v2202 = vpop.f32.mrb[0].mxu0
      %2203 = vmatprep.mubr.bf16.mxu0 0
      %2204 = vmatmul.mubr.bf16.gmra.mrb[0].mxu0 %v1888
      %v2205 = vpop.f32.mrb[0].mxu0
      %v2206 = vadd.f32 0.0, %v2205
      %v2207 = vpop.f32.mrb[0].mxu0
      %v2208 = vpop.f32.mrb[0].mxu0
      %v2209 = vadd.f32 0.0, %v2208
      %v2210 = vpop.f32.mrb[0].mxu0
      %2211 = vmatprep.mubr.bf16.mxu0 0
      %2212 = vmatmul.mubr.bf16.gmra.mrb[0].mxu0 %v1889
      %v2213 = vpop.f32.mrb[0].mxu0
      %v2214 = vadd.f32 0.0, %v2213
      %v2215 = vpop.f32.mrb[0].mxu0
      %v2216 = vpop.f32.mrb[0].mxu0
      %v2217 = vadd.f32 0.0, %v2216
      %v2218 = vpop.f32.mrb[0].mxu0
      %2219 = vmatprep.mubr.bf16.mxu0 0
      %2220 = vmatmul.mubr.bf16.gmra.mrb[0].mxu0 %v1890
      %v2221 = vpop.f32.mrb[0].mxu0
      %v2222 = vadd.f32 0.0, %v2221
      %v2223 = vpop.f32.mrb[0].mxu0
      %v2224 = vpop.f32.mrb[0].mxu0
      %v2225 = vadd.f32 0.0, %v2224
      %v2226 = vpop.f32.mrb[0].mxu0
      %2227 = vmatprep.mubr.bf16.mxu0 0
      %2228 = vmatmul.mubr.bf16.gmra.mrb[0].mxu0 %v2089
      %v2229 = vpop.f32.mrb[0].mxu0
      %v2230 = vadd.f32 0.0, %v2229
      %v2231 = vpop.f32.mrb[0].mxu0
      %v2232 = vpop.f32.mrb[0].mxu0
      %v2233 = vadd.f32 0.0, %v2232
      %v2234 = vpop.f32.mrb[0].mxu0
      %2235 = vdwg.mxu0
      %v2236 = vadd.f32 %v2044, %v2174
      %v2237 = vadd.f32 %v2045, %v2177
      %v2238 = vadd.f32 %v2046, %v2182
      %v2239 = vadd.f32 %v2047, %v2185
      %v2240 = vadd.f32 %v2048, %v2190
      %v2241 = vadd.f32 %v2049, %v2193
      %v2242 = vadd.f32 %v2050, %v2198
      %v2243 = vadd.f32 %v2051, %v2201
      %v2244 = vadd.f32 %v2052, %v2206
      %v2245 = vadd.f32 %v2053, %v2209
      %v2246 = vadd.f32 %v2054, %v2214
      %v2247 = vadd.f32 %v2055, %v2217
      %v2248 = vadd.f32 %v2056, %v2222
      %v2249 = vadd.f32 %v2057, %v2225
      %v2250 = vadd.f32 %v2058, %v2230
      %v2251 = vadd.f32 %v2059, %v2233
      %v2255 = vrot.slane %v1766, 5
      %v2256 = vrot.slane %v2255, 4
      %v2257 = vrot.slane %v938, 5
      %v2258 = vsel %vm1793, %v2256, %v2257
      %v2259 = vrot.slane %v2257, 4
      %v2260 = vrot.slane %v939, 5
      %v2261 = vsel %vm1793, %v2259, %v2260
      %s2262 = scalar_lea.vmem %s300, 512
      %v2263 = vld [vmem:[%s2262] sm:$0xf]
      %v2264 = vld [vmem:[%s2262 + $0x4] sm:$0xf]
      %v2265 = vld [vmem:[%s2262 + $0x8] sm:$0xf]
      %v2266 = vld [vmem:[%s2262 + $0xc] sm:$0xf]
      %v2267 = vld [vmem:[%s2262 + $0x10] sm:$0xf]
      %v2268 = vld [vmem:[%s2262 + $0x14] sm:$0xf]
      %v2269 = vld [vmem:[%s2262 + $0x18] sm:$0xf]
      %v2270 = vld [vmem:[%s2262 + $0x1c] sm:$0xf]
      %v2271 = vld [vmem:[%s2262 + $0x20] sm:$0xf]
      %v2272 = vld [vmem:[%s2262 + $0x24] sm:$0xf]
      %v2273 = vld [vmem:[%s2262 + $0x28] sm:$0xf]
      %v2274 = vld [vmem:[%s2262 + $0x2c] sm:$0xf]
      %v2275 = vld [vmem:[%s2262 + $0x30] sm:$0xf]
      %v2276 = vld [vmem:[%s2262 + $0x34] sm:$0xf]
      %v2277 = vld [vmem:[%s2262 + $0x38] sm:$0xf]
      %v2278 = vld [vmem:[%s2262 + $0x3c] sm:$0xf]
      %v2279 = vunpack.c.l.b16 %v2258
      %v2280 = vunpack.c.l.b16 %v2261
      %v2281 = vpack.c.b16 %v2280, %v2279
      %v2299 = vunpack.c.l.b16 %v2263
      %v2300 = vunpack.c.l.b16 %v2264
      %v2301 = vunpack.c.l.b16 %v2265
      %v2302 = vunpack.c.l.b16 %v2266
      %v2303 = vunpack.c.l.b16 %v2267
      %v2304 = vunpack.c.l.b16 %v2268
      %v2305 = vunpack.c.l.b16 %v2269
      %v2306 = vunpack.c.l.b16 %v2270
      %v2307 = vunpack.c.l.b16 %v2271
      %v2308 = vunpack.c.l.b16 %v2272
      %v2309 = vunpack.c.l.b16 %v2273
      %v2310 = vunpack.c.l.b16 %v2274
      %v2311 = vunpack.c.l.b16 %v2275
      %v2312 = vunpack.c.l.b16 %v2276
      %v2313 = vunpack.c.l.b16 %v2277
      %v2314 = vunpack.c.l.b16 %v2278
      %v2315 = vpack.c.b16 %v2300, %v2299
      %v2316 = vpack.c.b16 %v2302, %v2301
      %v2317 = vpack.c.b16 %v2304, %v2303
      %v2318 = vpack.c.b16 %v2306, %v2305
      %v2319 = vpack.c.b16 %v2308, %v2307
      %v2320 = vpack.c.b16 %v2310, %v2309
      %v2321 = vpack.c.b16 %v2312, %v2311
      %v2322 = vpack.c.b16 %v2314, %v2313
      %2331 = vmatprep.subr.bf16.mxu0 0
      %2332 = vmatpush1.bf16.msra.mxu0 %v2315
      %2333 = vmatprep.subr.bf16.mxu0 0
      %2334 = vmatpush1.bf16.msra.mxu0 %v2316
      %2335 = vmatprep.subr.bf16.mxu0 0
      %2336 = vmatpush1.bf16.msra.mxu0 %v2317
      %2337 = vmatprep.subr.bf16.mxu0 0
      %2338 = vmatpush1.bf16.msra.mxu0 %v2318
      %2339 = vmatprep.subr.bf16.mxu0 0
      %2340 = vmatpush1.bf16.msra.mxu0 %v2319
      %2341 = vmatprep.subr.bf16.mxu0 0
      %2342 = vmatpush1.bf16.msra.mxu0 %v2320
      %2343 = vmatprep.subr.bf16.mxu0 0
      %2344 = vmatpush1.bf16.msra.mxu0 %v2321
      %2345 = vmatprep.subr.bf16.mxu0 0
      %2346 = vmatpush1.bf16.msra.mxu0 %v2322
      %2347 = vmatprep.subr.bf16.mxu0 0
      %2348 = vmatpush1.bf16.msra.mxu0 0
      %2349 = vmatprep.subr.bf16.mxu0 0
      %2350 = vmatpush1.bf16.msra.mxu0 0
      %2351 = vmatprep.subr.bf16.mxu0 0
      %2352 = vmatpush1.bf16.msra.mxu0 0
      %2353 = vmatprep.subr.bf16.mxu0 0
      %2354 = vmatpush1.bf16.msra.mxu0 0
      %2355 = vmatprep.subr.bf16.mxu0 0
      %2356 = vmatpush1.bf16.msra.mxu0 0
      %2357 = vmatprep.subr.bf16.mxu0 0
      %2358 = vmatpush1.bf16.msra.mxu0 0
      %2359 = vmatprep.subr.bf16.mxu0 0
      %2360 = vmatpush1.bf16.msra.mxu0 0
      %2361 = vmatprep.subr.bf16.mxu0 0
      %2362 = vmatpush1.bf16.msra.mxu0 0
      %2363 = vmatprep.mubr.bf16.mxu0 0
      %2364 = vmatmul.mubr.bf16.gmra.mrb[0].mxu0 %v1885
      %v2365 = vpop.f32.mrb[0].mxu0
      %v2366 = vadd.f32 0.0, %v2365
      %v2367 = vpop.f32.mrb[0].mxu0
      %v2368 = vpop.f32.mrb[0].mxu0
      %v2369 = vadd.f32 0.0, %v2368
      %v2370 = vpop.f32.mrb[0].mxu0
      %2371 = vmatprep.mubr.bf16.mxu0 0
      %2372 = vmatmul.mubr.bf16.gmra.mrb[0].mxu0 %v1886
      %v2373 = vpop.f32.mrb[0].mxu0
      %v2374 = vadd.f32 0.0, %v2373
      %v2375 = vpop.f32.mrb[0].mxu0
      %v2376 = vpop.f32.mrb[0].mxu0
      %v2377 = vadd.f32 0.0, %v2376
      %v2378 = vpop.f32.mrb[0].mxu0
      %2379 = vmatprep.mubr.bf16.mxu0 0
      %2380 = vmatmul.mubr.bf16.gmra.mrb[0].mxu0 %v1887
      %v2381 = vpop.f32.mrb[0].mxu0
      %v2382 = vadd.f32 0.0, %v2381
      %v2383 = vpop.f32.mrb[0].mxu0
      %v2384 = vpop.f32.mrb[0].mxu0
      %v2385 = vadd.f32 0.0, %v2384
      %v2386 = vpop.f32.mrb[0].mxu0
      %2387 = vmatprep.mubr.bf16.mxu0 0
      %2388 = vmatmul.mubr.bf16.gmra.mrb[0].mxu0 %v1888
      %v2389 = vpop.f32.mrb[0].mxu0
      %v2390 = vadd.f32 0.0, %v2389
      %v2391 = vpop.f32.mrb[0].mxu0
      %v2392 = vpop.f32.mrb[0].mxu0
      %v2393 = vadd.f32 0.0, %v2392
      %v2394 = vpop.f32.mrb[0].mxu0
      %2395 = vmatprep.mubr.bf16.mxu0 0
      %2396 = vmatmul.mubr.bf16.gmra.mrb[0].mxu0 %v1889
      %v2397 = vpop.f32.mrb[0].mxu0
      %v2398 = vadd.f32 0.0, %v2397
      %v2399 = vpop.f32.mrb[0].mxu0
      %v2400 = vpop.f32.mrb[0].mxu0
      %v2401 = vadd.f32 0.0, %v2400
      %v2402 = vpop.f32.mrb[0].mxu0
      %2403 = vmatprep.mubr.bf16.mxu0 0
      %2404 = vmatmul.mubr.bf16.gmra.mrb[0].mxu0 %v1890
      %v2405 = vpop.f32.mrb[0].mxu0
      %v2406 = vadd.f32 0.0, %v2405
      %v2407 = vpop.f32.mrb[0].mxu0
      %v2408 = vpop.f32.mrb[0].mxu0
      %v2409 = vadd.f32 0.0, %v2408
      %v2410 = vpop.f32.mrb[0].mxu0
      %2411 = vmatprep.mubr.bf16.mxu0 0
      %2412 = vmatmul.mubr.bf16.gmra.mrb[0].mxu0 %v2089
      %v2413 = vpop.f32.mrb[0].mxu0
      %v2414 = vadd.f32 0.0, %v2413
      %v2415 = vpop.f32.mrb[0].mxu0
      %v2416 = vpop.f32.mrb[0].mxu0
      %v2417 = vadd.f32 0.0, %v2416
      %v2418 = vpop.f32.mrb[0].mxu0
      %2419 = vmatprep.mubr.bf16.mxu0 0
      %2420 = vmatmul.mubr.bf16.gmra.mrb[0].mxu0 %v2281
      %v2421 = vpop.f32.mrb[0].mxu0
      %v2422 = vadd.f32 0.0, %v2421
      %v2423 = vpop.f32.mrb[0].mxu0
      %v2424 = vpop.f32.mrb[0].mxu0
      %v2425 = vadd.f32 0.0, %v2424
      %v2426 = vpop.f32.mrb[0].mxu0
      %2427 = vdwg.mxu0
      %v2428 = vadd.f32 %v2236, %v2366
      %v2429 = vadd.f32 %v2237, %v2369
      %v2430 = vadd.f32 %v2238, %v2374
      %v2431 = vadd.f32 %v2239, %v2377
      %v2432 = vadd.f32 %v2240, %v2382
      %v2433 = vadd.f32 %v2241, %v2385
      %v2434 = vadd.f32 %v2242, %v2390
      %v2435 = vadd.f32 %v2243, %v2393
      %v2436 = vadd.f32 %v2244, %v2398
      %v2437 = vadd.f32 %v2245, %v2401
      %v2438 = vadd.f32 %v2246, %v2406
      %v2439 = vadd.f32 %v2247, %v2409
      %v2440 = vadd.f32 %v2248, %v2414
      %v2441 = vadd.f32 %v2249, %v2417
      %v2442 = vadd.f32 %v2250, %v2422
      %v2443 = vadd.f32 %v2251, %v2425
      %v2444 = vld [vmem:[%s303] sm:$0x1]
      %v2446 = vlaneseq
      %v2447 = vshrl.u32 %v2446, 7
      %v2448 = vsub.s32 0, %v2447
      %v2449 = vrot.slane %v2444, %v2448
      %v2451 = vadd.f32 %v2428, %v2449
      %v2452 = vadd.f32 %v2429, %v2449
      %v2453 = vadd.f32 %v2430, %v2449
      %v2454 = vadd.f32 %v2431, %v2449
      %v2455 = vadd.f32 %v2432, %v2449
      %v2456 = vadd.f32 %v2433, %v2449
      %v2457 = vadd.f32 %v2434, %v2449
      %v2458 = vadd.f32 %v2435, %v2449
      %v2459 = vadd.f32 %v2436, %v2449
      %v2460 = vadd.f32 %v2437, %v2449
      %v2461 = vadd.f32 %v2438, %v2449
      %v2462 = vadd.f32 %v2439, %v2449
      %v2463 = vadd.f32 %v2440, %v2449
      %v2464 = vadd.f32 %v2441, %v2449
      %v2465 = vadd.f32 %v2442, %v2449
      %v2466 = vadd.f32 %v2443, %v2449
      %v2467 = vld [vmem:[%s306] sm:$0x1]
      %v2469 = vlaneseq
      %v2470 = vshrl.u32 %v2469, 7
      %v2471 = vsub.s32 0, %v2470
      %v2472 = vrot.slane %v2467, %v2471
      %v2474 = vmul.f32 %v2451, %v2472
      %v2475 = vmul.f32 %v2452, %v2472
      %v2476 = vmul.f32 %v2453, %v2472
      %v2477 = vmul.f32 %v2454, %v2472
      %v2478 = vmul.f32 %v2455, %v2472
      %v2479 = vmul.f32 %v2456, %v2472
      %v2480 = vmul.f32 %v2457, %v2472
      %v2481 = vmul.f32 %v2458, %v2472
      %v2482 = vmul.f32 %v2459, %v2472
      %v2483 = vmul.f32 %v2460, %v2472
      %v2484 = vmul.f32 %v2461, %v2472
      %v2485 = vmul.f32 %v2462, %v2472
      %v2486 = vmul.f32 %v2463, %v2472
      %v2487 = vmul.f32 %v2464, %v2472
      %v2488 = vmul.f32 %v2465, %v2472
      %v2489 = vmul.f32 %v2466, %v2472
      %v2490 = vld [vmem:[%s309] sm:$0x1]
      %v2492 = vlaneseq
      %v2493 = vshrl.u32 %v2492, 7
      %v2494 = vsub.s32 0, %v2493
      %v2495 = vrot.slane %v2490, %v2494
      %v2497 = vadd.f32 %v2474, %v2495
      %v2498 = vadd.f32 %v2475, %v2495
      %v2499 = vadd.f32 %v2476, %v2495
      %v2500 = vadd.f32 %v2477, %v2495
      %v2501 = vadd.f32 %v2478, %v2495
      %v2502 = vadd.f32 %v2479, %v2495
      %v2503 = vadd.f32 %v2480, %v2495
      %v2504 = vadd.f32 %v2481, %v2495
      %v2505 = vadd.f32 %v2482, %v2495
      %v2506 = vadd.f32 %v2483, %v2495
      %v2507 = vadd.f32 %v2484, %v2495
      %v2508 = vadd.f32 %v2485, %v2495
      %v2509 = vadd.f32 %v2486, %v2495
      %v2510 = vadd.f32 %v2487, %v2495
      %v2511 = vadd.f32 %v2488, %v2495
      %v2512 = vadd.f32 %v2489, %v2495
      %v2513 = vmax.f32 %v2497, 0.0
      %v2514 = vmax.f32 %v2498, 0.0
      %v2515 = vmax.f32 %v2499, 0.0
      %v2516 = vmax.f32 %v2500, 0.0
      %v2517 = vmax.f32 %v2501, 0.0
      %v2518 = vmax.f32 %v2502, 0.0
      %v2519 = vmax.f32 %v2503, 0.0
      %v2520 = vmax.f32 %v2504, 0.0
      %v2521 = vmax.f32 %v2505, 0.0
      %v2522 = vmax.f32 %v2506, 0.0
      %v2523 = vmax.f32 %v2507, 0.0
      %v2524 = vmax.f32 %v2508, 0.0
      %v2525 = vmax.f32 %v2509, 0.0
      %v2526 = vmax.f32 %v2510, 0.0
      %v2527 = vmax.f32 %v2511, 0.0
      %v2528 = vmax.f32 %v2512, 0.0
      %v2529 = vpack.c.bf16 %v2514, %v2513
      %v2530 = vpack.c.bf16 %v2516, %v2515
      %v2531 = vpack.c.bf16 %v2518, %v2517
      %v2532 = vpack.c.bf16 %v2520, %v2519
      %v2533 = vpack.c.bf16 %v2522, %v2521
      %v2534 = vpack.c.bf16 %v2524, %v2523
      %v2535 = vpack.c.bf16 %v2526, %v2525
      %v2536 = vpack.c.bf16 %v2528, %v2527
      %v2545 = vunpack.c.l.b16 %v2529
      %v2546 = vunpack.c.h.b16 %v2529
      %v2547 = vunpack.c.l.b16 %v2530
      %v2548 = vunpack.c.h.b16 %v2530
      %v2549 = vunpack.c.l.b16 %v2531
      %v2550 = vunpack.c.h.b16 %v2531
      %v2551 = vunpack.c.l.b16 %v2532
      %v2552 = vunpack.c.h.b16 %v2532
      %v2553 = vunpack.c.l.b16 %v2533
      %v2554 = vunpack.c.h.b16 %v2533
      %v2555 = vunpack.c.l.b16 %v2534
      %v2556 = vunpack.c.h.b16 %v2534
      %v2557 = vunpack.c.l.b16 %v2535
      %v2558 = vunpack.c.h.b16 %v2535
      %v2559 = vunpack.c.l.b16 %v2536
      %v2560 = vunpack.c.h.b16 %v2536
      %v2561 = vpack.c.b16 %v2545, %v2545
      %v2562 = vpack.c.b16 %v2546, %v2546
      %v2563 = vpack.c.b16 %v2547, %v2547
      %v2564 = vpack.c.b16 %v2548, %v2548
      %v2565 = vpack.c.b16 %v2549, %v2549
      %v2566 = vpack.c.b16 %v2550, %v2550
      %v2567 = vpack.c.b16 %v2551, %v2551
      %v2568 = vpack.c.b16 %v2552, %v2552
      %v2569 = vpack.c.b16 %v2553, %v2553
      %v2570 = vpack.c.b16 %v2554, %v2554
      %v2571 = vpack.c.b16 %v2555, %v2555
      %v2572 = vpack.c.b16 %v2556, %v2556
      %v2573 = vpack.c.b16 %v2557, %v2557
      %v2574 = vpack.c.b16 %v2558, %v2558
      %v2575 = vpack.c.b16 %v2559, %v2559
      %v2576 = vpack.c.b16 %v2560, %v2560
      %2593 = vst [vmem:[%s322] sm:$0xf] %v2561
      %2594 = vst [vmem:[%s322 + $0x4] sm:$0xf] %v2562
      %2595 = vst [vmem:[%s322 + $0x8] sm:$0xf] %v2563
      %2596 = vst [vmem:[%s322 + $0xc] sm:$0xf] %v2564
      %2597 = vst [vmem:[%s322 + $0x10] sm:$0xf] %v2565
      %2598 = vst [vmem:[%s322 + $0x14] sm:$0xf] %v2566
      %2599 = vst [vmem:[%s322 + $0x18] sm:$0xf] %v2567
      %2600 = vst [vmem:[%s322 + $0x1c] sm:$0xf] %v2568
      %2601 = vst [vmem:[%s322 + $0x20] sm:$0xf] %v2569
      %2602 = vst [vmem:[%s322 + $0x24] sm:$0xf] %v2570
      %2603 = vst [vmem:[%s322 + $0x28] sm:$0xf] %v2571
      %2604 = vst [vmem:[%s322 + $0x2c] sm:$0xf] %v2572
      %2605 = vst [vmem:[%s322 + $0x30] sm:$0xf] %v2573
      %2606 = vst [vmem:[%s322 + $0x34] sm:$0xf] %v2574
      %2607 = vst [vmem:[%s322 + $0x38] sm:$0xf] %v2575
      %2608 = vst [vmem:[%s322 + $0x3c] sm:$0xf] %v2576
      %s2609 = smul.u32 8, %s23
      %p2610 = scmp.lt.s32.totalorder %s21, 1
      %s2611 = scalar_select %p2610, %s21, 1
      %p2612 = scmp.lt.s32.totalorder %s2609, 15
      %s2613 = scalar_select %p2612, %s2609, 15
      %p2614 = scmp.lt.s32.totalorder %s22, 0
      %s2615 = scalar_select %p2614, %s22, 0
      %s2616 = smul.addr %s2613, 2
      %s2617 = sadd.s32 %s2615, %s2616
      %s2618 = smul.addr %s2611, 32
      %s2619 = sadd.s32 %s2617, %s2618
      %s2620 = smul.addr %s2619, 4
      %s2621 = scalar_lea.vmem %s5, %s2620
      // Predicated region
      $region41: #{wide_basic_forward.2} parent=39 // pred_check
        %p2622 = pneg %p187
      $region42: #{wide_basic_forward.2} parent=39 // pred_check_branch
        %2624 = sbr.rel (%p2622) target = $region44
      $region43: #{wide_basic_forward.2} parent=39 // pred_region
        %s2625 = smul.u32 8, %s23
      $region44: #{wide_basic_forward.2} parent=39 // pred_fallthru
        _
    $region40: #{wide_basic_forward.2} parent=5 // pred_fallthru
      _
    %p2626 = scmp.le.s32.totalorder 2, %s11
    // Predicated region
    $region45: #{wide_basic_forward.2} parent=5 // pred_check
      %p2627 = pneg %p2626
    $region46: #{wide_basic_forward.2} parent=5 // pred_check_branch
      %2629 = sbr.rel (%p2627) target = $region48
    $region47: #{wide_basic_forward.2} parent=5 // pred_region
      %s2630 = ssub.s32 %s11, 2
      // Predicated region
      $region49: #{wide_basic_forward.2} parent=47 // pred_check
        %p2631 = pneg %p193
      $region50: #{wide_basic_forward.2} parent=47 // pred_check_branch
        %2633 = sbr.rel (%p2631) target = $region52
      $region51: #{wide_basic_forward.2} parent=47 // pred_region
        %s2634 = smul.u32 8, %s26
        %p2635 = scmp.lt.s32.totalorder %s24, 1
        %s2636 = scalar_select %p2635, %s24, 1
        %p2637 = scmp.lt.s32.totalorder %s2634, 15
        %s2638 = scalar_select %p2637, %s2634, 15
        %p2639 = scmp.lt.s32.totalorder %s25, 0
        %s2640 = scalar_select %p2639, %s25, 0
        %s2641 = smul.addr %s2638, 2
        %s2642 = sadd.s32 %s2640, %s2641
        %s2643 = smul.addr %s2636, 32
        %s2644 = sadd.s32 %s2642, %s2643
        %s2645 = smul.addr %s2644, 4
        %s2646 = scalar_lea.vmem %s5, %s2645
      $region52: #{wide_basic_forward.2} parent=47 // pred_fallthru
        _
    $region48: #{wide_basic_forward.2} parent=5 // pred_fallthru
      _
  $region6: #{wide_basic_forward.2} parent=0 // loop_footer
    %s15 = sadd.s32 1, %s11
  $region7: #{wide_basic_forward.2} parent=0 // loop_footer_branch
    %10 = sbr.rel target = $region3
  $region8: #{wide_basic_forward.2} parent=0 // loop_exit
    _

// kernel: wide_basic_forward.3
$region0: #{wide_basic_forward.3}
  #allocation0 [shape = 'u32[]', space=smem, size = 0x4, offset = 0x4, fixed_abs, tag = 'smem constant byte address 0x4 - core index']
  #allocation1 [shape = 'u32[144,128]{1,0:T(1,128)}', space=vmem, size = 0x12000, scoped, tag = 'internal scratch']
  %s0 = inlined_call_operand.vmem [shape: bf16[2,18,18,128], index: 0, kind: input, shape index: {}]
  %s1 = inlined_call_operand.vmem [shape: bf16[2,16,16,128], index: 1, kind: input, shape index: {}]
  %s2 = inlined_call_operand.vmem [shape: bf16[3,3,128,128], index: 2, kind: input, shape index: {}]
  %s3 = inlined_call_operand.vmem [shape: bf16[128,128], index: 3, kind: input, shape index: {}]
  %s4 = inlined_call_operand.vmem [shape: f32[1,128], index: 4, kind: input, shape index: {}]
  %s5 = inlined_call_operand.vmem [shape: f32[1,128], index: 5, kind: input, shape index: {}]
  %s6 = inlined_call_operand.vmem [shape: f32[2,16,16,128], index: 6, kind: output, shape index: {}]
  %s7 = sld [smem:[#allocation0]]
  $region57: #{wide_basic_forward.3} parent=0
    _
  %s9 = ssub.s32 1, %s7
  %s10 = scalar_select 0, %s9, %s7
  loop: start=0, step=1, limit=6
  $region2: #{wide_basic_forward.3} parent=0 // loop_pre_header
    _
  $region3: #{wide_basic_forward.3} parent=0 // loop_header
    %s12 = sphi 0, %s16
    %p13 = scmp.ge.s32.totalorder %s12, 6
    %s19 = sphi 0, %s38
    %s20 = sphi 0, %s34
    %s21 = sphi 0, %s30
    %s22 = sphi 0, %s19
    %s23 = sphi 0, %s20
    %s24 = sphi 0, %s21
    %s25 = sphi 0, %s22
    %s26 = sphi 0, %s23
    %s27 = sphi 0, %s24
    %s41 = sphi 0, %s43
    %s44 = sphi 0, %s41
    %s45 = sphi 0, %s44
    %s61 = sphi 0, %s45
    %s69 = sphi 0, %s71
    %s72 = sphi 0, %s69
    %s73 = sphi 0, %s72
    %s89 = sphi 0, %s73
    %s95 = sphi 0, %s97
    %s98 = sphi 0, %s95
    %s99 = sphi 0, %s98
    %s115 = sphi 0, %s99
    %s121 = sphi 0, %s123
    %s124 = sphi 0, %s121
    %s125 = sphi 0, %s124
    %s141 = sphi 0, %s125
    %s147 = sphi 0, %s149
    %s150 = sphi 0, %s147
    %s151 = sphi 0, %s150
    %s167 = sphi 0, %s151
    %s173 = sphi 0, %s175
    %s176 = sphi 0, %s173
    %s177 = sphi 0, %s176
    %s193 = sphi 0, %s177
    %s203 = sphi 0, %s205
    %s206 = sphi 0, %s203
    %s207 = sphi 0, %s206
    %s223 = sphi 0, %s207
  $region4: #{wide_basic_forward.3} parent=0 // loop_header_branch
    %15 = sbr.rel (%p13) target = $region8
  $region5: #{wide_basic_forward.3} parent=0 // loop_body
    %s17 = ssub.s32 %s12, 1
    %s18 = ssub.s32 %s12, 2
    %s28 = sadd.s32 1, %s21
    %p29 = scmp.ge.s32.totalorder %s28, 2
    %s30 = scalar_select %p29, 0, %s28
    %s31 = sadd.s32 1, %s20
    %s32 = scalar_select %p29, %s31, %s20
    %p33 = scmp.ge.s32.totalorder %s32, 1
    %s34 = scalar_select %p33, 0, %s32
    %s35 = sadd.s32 1, %s19
    %s36 = scalar_select %p33, %s35, %s19
    %p37 = scmp.ge.s32.totalorder %s36, 2
    %s38 = scalar_select %p37, 0, %s36
    %s39 = ssub.s32 %s19, %s38
    %p40 = scmp.eq.s32.totalorder %s39, 0
    %s42 = sadd.s32 %s41, 1
    %s43 = scalar_select %p40, %s41, %s42
    %p46 = pneg %p40
    %p47 = scmp.eq.s32.totalorder %s12, 3
    %p48 = por %p46, %p47
    %p49 = scmp.ne.s32.totalorder %s41, %s44
    %p50 = scmp.eq.s32.totalorder %s12, 0
    %p51 = por %p49, %p50
    %p52 = scmp.ne.s32.totalorder %s41, %s44
    %p53 = scmp.eq.s32.totalorder %s17, 3
    %p54 = por %p52, %p53
    %p55 = scmp.ne.s32.totalorder %s44, %s45
    %p56 = scmp.eq.s32.totalorder %s17, 0
    %p57 = por %p55, %p56
    %p58 = scmp.ne.s32.totalorder %s44, %s45
    %p59 = scmp.eq.s32.totalorder %s18, 3
    %p60 = por %p58, %p59
    %p62 = scmp.ne.s32.totalorder %s45, %s61
    %p63 = scmp.eq.s32.totalorder %s18, 0
    %p64 = por %p62, %p63
    %s65 = ssub.s32 %s19, %s38
    %s66 = ssub.s32 %s21, %s30
    %s67 = sor.u32 %s65, %s66
    %p68 = scmp.eq.s32.totalorder %s67, 0
    %s70 = sadd.s32 %s69, 1
    %s71 = scalar_select %p68, %s69, %s70
    %p74 = pneg %p68
    %p75 = scmp.eq.s32.totalorder %s12, 3
    %p76 = por %p74, %p75
    %p77 = scmp.ne.s32.totalorder %s69, %s72
    %p78 = scmp.eq.s32.totalorder %s12, 0
    %p79 = por %p77, %p78
    %p80 = scmp.ne.s32.totalorder %s69, %s72
    %p81 = scmp.eq.s32.totalorder %s17, 3
    %p82 = por %p80, %p81
    %p83 = scmp.ne.s32.totalorder %s72, %s73
    %p84 = scmp.eq.s32.totalorder %s17, 0
    %p85 = por %p83, %p84
    %p86 = scmp.ne.s32.totalorder %s72, %s73
    %p87 = scmp.eq.s32.totalorder %s18, 3
    %p88 = por %p86, %p87
    %p90 = scmp.ne.s32.totalorder %s73, %s89
    %p91 = scmp.eq.s32.totalorder %s18, 0
    %p92 = por %p90, %p91
    %s93 = ssub.s32 %s20, %s34
    %p94 = scmp.eq.s32.totalorder %s93, 0
    %s96 = sadd.s32 %s95, 1
    %s97 = scalar_select %p94, %s95, %s96
    %p100 = pneg %p94
    %p101 = scmp.eq.s32.totalorder %s12, 3
    %p102 = por %p100, %p101
    %p103 = scmp.ne.s32.totalorder %s95, %s98
    %p104 = scmp.eq.s32.totalorder %s12, 0
    %p105 = por %p103, %p104
    %p106 = scmp.ne.s32.totalorder %s95, %s98
    %p107 = scmp.eq.s32.totalorder %s17, 3
    %p108 = por %p106, %p107
    %p109 = scmp.ne.s32.totalorder %s98, %s99
    %p110 = scmp.eq.s32.totalorder %s17, 0
    %p111 = por %p109, %p110
    %p112 = scmp.ne.s32.totalorder %s98, %s99
    %p113 = scmp.eq.s32.totalorder %s18, 3
    %p114 = por %p112, %p113
    %p116 = scmp.ne.s32.totalorder %s99, %s115
    %p117 = scmp.eq.s32.totalorder %s18, 0
    %p118 = por %p116, %p117
    %s119 = ssub.s32 %s20, %s34
    %p120 = scmp.eq.s32.totalorder %s119, 0
    %s122 = sadd.s32 %s121, 1
    %s123 = scalar_select %p120, %s121, %s122
    %p126 = pneg %p120
    %p127 = scmp.eq.s32.totalorder %s12, 3
    %p128 = por %p126, %p127
    %p129 = scmp.ne.s32.totalorder %s121, %s124
    %p130 = scmp.eq.s32.totalorder %s12, 0
    %p131 = por %p129, %p130
    %p132 = scmp.ne.s32.totalorder %s121, %s124
    %p133 = scmp.eq.s32.totalorder %s17, 3
    %p134 = por %p132, %p133
    %p135 = scmp.ne.s32.totalorder %s124, %s125
    %p136 = scmp.eq.s32.totalorder %s17, 0
    %p137 = por %p135, %p136
    %p138 = scmp.ne.s32.totalorder %s124, %s125
    %p139 = scmp.eq.s32.totalorder %s18, 3
    %p140 = por %p138, %p139
    %p142 = scmp.ne.s32.totalorder %s125, %s141
    %p143 = scmp.eq.s32.totalorder %s18, 0
    %p144 = por %p142, %p143
    %s145 = ssub.s32 %s20, %s34
    %p146 = scmp.eq.s32.totalorder %s145, 0
    %s148 = sadd.s32 %s147, 1
    %s149 = scalar_select %p146, %s147, %s148
    %p152 = pneg %p146
    %p153 = scmp.eq.s32.totalorder %s12, 3
    %p154 = por %p152, %p153
    %p155 = scmp.ne.s32.totalorder %s147, %s150
    %p156 = scmp.eq.s32.totalorder %s12, 0
    %p157 = por %p155, %p156
    %p158 = scmp.ne.s32.totalorder %s147, %s150
    %p159 = scmp.eq.s32.totalorder %s17, 3
    %p160 = por %p158, %p159
    %p161 = scmp.ne.s32.totalorder %s150, %s151
    %p162 = scmp.eq.s32.totalorder %s17, 0
    %p163 = por %p161, %p162
    %p164 = scmp.ne.s32.totalorder %s150, %s151
    %p165 = scmp.eq.s32.totalorder %s18, 3
    %p166 = por %p164, %p165
    %p168 = scmp.ne.s32.totalorder %s151, %s167
    %p169 = scmp.eq.s32.totalorder %s18, 0
    %p170 = por %p168, %p169
    %s171 = ssub.s32 %s20, %s34
    %p172 = scmp.eq.s32.totalorder %s171, 0
    %s174 = sadd.s32 %s173, 1
    %s175 = scalar_select %p172, %s173, %s174
    %p178 = pneg %p172
    %p179 = scmp.eq.s32.totalorder %s12, 3
    %p180 = por %p178, %p179
    %p181 = scmp.ne.s32.totalorder %s173, %s176
    %p182 = scmp.eq.s32.totalorder %s12, 0
    %p183 = por %p181, %p182
    %p184 = scmp.ne.s32.totalorder %s173, %s176
    %p185 = scmp.eq.s32.totalorder %s17, 3
    %p186 = por %p184, %p185
    %p187 = scmp.ne.s32.totalorder %s176, %s177
    %p188 = scmp.eq.s32.totalorder %s17, 0
    %p189 = por %p187, %p188
    %p190 = scmp.ne.s32.totalorder %s176, %s177
    %p191 = scmp.eq.s32.totalorder %s18, 3
    %p192 = por %p190, %p191
    %p194 = scmp.ne.s32.totalorder %s177, %s193
    %p195 = scmp.eq.s32.totalorder %s18, 0
    %p196 = por %p194, %p195
    %s197 = ssub.s32 %s19, %s38
    %s198 = ssub.s32 %s21, %s30
    %s199 = sor.u32 %s197, %s198
    %s200 = ssub.s32 %s20, %s34
    %s201 = sor.u32 %s199, %s200
    %p202 = scmp.eq.s32.totalorder %s201, 0
    %s204 = sadd.s32 %s203, 1
    %s205 = scalar_select %p202, %s203, %s204
    %p208 = pneg %p202
    %p209 = scmp.eq.s32.totalorder %s12, 3
    %p210 = por %p208, %p209
    %p211 = scmp.ne.s32.totalorder %s203, %s206
    %p212 = scmp.eq.s32.totalorder %s12, 0
    %p213 = por %p211, %p212
    %p214 = scmp.ne.s32.totalorder %s203, %s206
    %p215 = scmp.eq.s32.totalorder %s17, 3
    %p216 = por %p214, %p215
    %p217 = scmp.ne.s32.totalorder %s206, %s207
    %p218 = scmp.eq.s32.totalorder %s17, 0
    %p219 = por %p217, %p218
    %p220 = scmp.ne.s32.totalorder %s206, %s207
    %p221 = scmp.eq.s32.totalorder %s18, 3
    %p222 = por %p220, %p221
    %p224 = scmp.ne.s32.totalorder %s207, %s223
    %p225 = scmp.eq.s32.totalorder %s18, 0
    %p226 = por %p224, %p225
    %p227 = scmp.le.s32.totalorder 1, %s12
    %p228 = scmp.lt.s32.totalorder %s12, 5
    %p229 = pnand %p227, %p228
    %p230 = pneg %p229
    // Predicated region
    $region9: #{wide_basic_forward.3} parent=5 // pred_check
      _
    $region10: #{wide_basic_forward.3} parent=5 // pred_check_branch
      %232 = sbr.rel (%p229) target = $region12
    $region11: #{wide_basic_forward.3} parent=5 // pred_region
      %s233 = ssub.s32 %s12, 1
      // Predicated region
      $region13: #{wide_basic_forward.3} parent=11 // pred_check
        %p234 = pneg %p111
      $region14: #{wide_basic_forward.3} parent=11 // pred_check_branch
        %236 = sbr.rel (%p234) target = $region16
      $region15: #{wide_basic_forward.3} parent=11 // pred_region
        %p237 = scmp.lt.s32.totalorder %s23, 0
        %s238 = scalar_select %p237, %s23, 0
        %s239 = smul.addr %s238, 4
        %s240 = scalar_lea.vmem %s2, %s239
      $region16: #{wide_basic_forward.3} parent=11 // pred_fallthru
        _
      // Predicated region
      $region17: #{wide_basic_forward.3} parent=11 // pred_check
        %p241 = pneg %p137
      $region18: #{wide_basic_forward.3} parent=11 // pred_check_branch
        %243 = sbr.rel (%p241) target = $region20
      $region19: #{wide_basic_forward.3} parent=11 // pred_region
        %p244 = scmp.lt.s32.totalorder %s23, 0
        %s245 = scalar_select %p244, %s23, 0
        %s246 = smul.addr %s245, 4
        %s247 = scalar_lea.vmem %s3, %s246
      $region20: #{wide_basic_forward.3} parent=11 // pred_fallthru
        _
      // Predicated region
      $region21: #{wide_basic_forward.3} parent=11 // pred_check
        %p248 = pneg %p163
      $region22: #{wide_basic_forward.3} parent=11 // pred_check_branch
        %250 = sbr.rel (%p248) target = $region24
      $region23: #{wide_basic_forward.3} parent=11 // pred_region
        %p251 = scmp.lt.s32.totalorder %s23, 0
        %s252 = scalar_select %p251, %s23, 0
        %s253 = scalar_lea.vmem %s4, %s252
      $region24: #{wide_basic_forward.3} parent=11 // pred_fallthru
        _
      // Predicated region
      $region25: #{wide_basic_forward.3} parent=11 // pred_check
        %p254 = pneg %p189
      $region26: #{wide_basic_forward.3} parent=11 // pred_check_branch
        %256 = sbr.rel (%p254) target = $region28
      $region27: #{wide_basic_forward.3} parent=11 // pred_region
        %p257 = scmp.lt.s32.totalorder %s23, 0
        %s258 = scalar_select %p257, %s23, 0
        %s259 = scalar_lea.vmem %s5, %s258
      $region28: #{wide_basic_forward.3} parent=11 // pred_fallthru
        _
    $region12: #{wide_basic_forward.3} parent=5 // pred_fallthru
      _
    %p260 = scmp.lt.s32.totalorder %s12, 4
    // Predicated region
    $region29: #{wide_basic_forward.3} parent=5 // pred_check
      %p261 = pneg %p260
    $region30: #{wide_basic_forward.3} parent=5 // pred_check_branch
      %263 = sbr.rel (%p261) target = $region32
    $region31: #{wide_basic_forward.3} parent=5 // pred_region
      // Predicated region
      $region33: #{wide_basic_forward.3} parent=31 // pred_check
        %p264 = pneg %p51
      $region34: #{wide_basic_forward.3} parent=31 // pred_check_branch
        %266 = sbr.rel (%p264) target = $region36
      $region35: #{wide_basic_forward.3} parent=31 // pred_region
        %p267 = scmp.lt.s32.totalorder %s19, 1
        %s268 = scalar_select %p267, %s19, 1
        %s269 = smul.addr %s268, 54
        %s270 = smul.addr %s269, 4
        %s271 = scalar_lea.vmem %s0, %s270
      $region36: #{wide_basic_forward.3} parent=31 // pred_fallthru
        _
      // Predicated region
      $region37: #{wide_basic_forward.3} parent=31 // pred_check
        %p272 = pneg %p79
      $region38: #{wide_basic_forward.3} parent=31 // pred_check_branch
        %274 = sbr.rel (%p272) target = $region40
      $region39: #{wide_basic_forward.3} parent=31 // pred_region
        %s275 = smul.u32 8, %s21
        %p276 = scmp.lt.s32.totalorder %s19, 1
        %s277 = scalar_select %p276, %s19, 1
        %p278 = scmp.lt.s32.totalorder %s275, 15
        %s279 = scalar_select %p278, %s275, 15
        %s280 = smul.addr %s279, 2
        %s281 = smul.addr %s277, 32
        %s282 = sadd.s32 %s280, %s281
        %s283 = smul.addr %s282, 4
        %s284 = scalar_lea.vmem %s1, %s283
        %s285 = smul.u32 8, %s21
      $region40: #{wide_basic_forward.3} parent=31 // pred_fallthru
        _
    $region32: #{wide_basic_forward.3} parent=5 // pred_fallthru
      _
    %p286 = scmp.le.s32.totalorder 1, %s12
    %p287 = scmp.lt.s32.totalorder %s12, 5
    %p288 = pnand %p286, %p287
    %p289 = pneg %p288
    // Predicated region
    $region41: #{wide_basic_forward.3} parent=5 // pred_check
      _
    $region42: #{wide_basic_forward.3} parent=5 // pred_check_branch
      %291 = sbr.rel (%p288) target = $region44
    $region43: #{wide_basic_forward.3} parent=5 // pred_region
      %s292 = ssub.s32 %s12, 1
      %p293 = scmp.lt.s32.totalorder %s22, 1
      %s294 = scalar_select %p293, %s22, 1
      %s295 = smul.addr %s294, 54
      %s296 = smul.addr %s295, 4
      %s297 = scalar_lea.vmem %s0, %s296
      %p298 = pneg %p57
      %p299 = pneg %p54
      %s300 = smul.u32 8, %s24
      %p301 = scmp.lt.s32.totalorder %s22, 1
      %s302 = scalar_select %p301, %s22, 1
      %p303 = scmp.lt.s32.totalorder %s300, 15
      %s304 = scalar_select %p303, %s300, 15
      %s305 = smul.addr %s304, 2
      %s306 = smul.addr %s302, 32
      %s307 = sadd.s32 %s305, %s306
      %s308 = smul.addr %s307, 4
      %s309 = scalar_lea.vmem %s1, %s308
      %p310 = pneg %p85
      %p311 = pneg %p82
      %p312 = scmp.lt.s32.totalorder %s23, 0
      %s313 = scalar_select %p312, %s23, 0
      %s314 = smul.addr %s313, 4
      %s315 = scalar_lea.vmem %s2, %s314
      %p316 = pneg %p111
      %p317 = pneg %p108
      %p318 = scmp.lt.s32.totalorder %s23, 0
      %s319 = scalar_select %p318, %s23, 0
      %s320 = smul.addr %s319, 4
      %s321 = scalar_lea.vmem %s3, %s320
      %p322 = pneg %p137
      %p323 = pneg %p134
      %p324 = scmp.lt.s32.totalorder %s23, 0
      %s325 = scalar_select %p324, %s23, 0
      %s326 = scalar_lea.vmem %s4, %s325
      %p327 = pneg %p163
      %p328 = pneg %p160
      %p329 = scmp.lt.s32.totalorder %s23, 0
      %s330 = scalar_select %p329, %s23, 0
      %s331 = scalar_lea.vmem %s5, %s330
      %p332 = pneg %p189
      %p333 = pneg %p186
      %p334 = pneg %p219
      %p335 = pneg %p216
      %s336 = smul.u32 8, %s24
      %p337 = scmp.lt.s32.totalorder %s22, 1
      %s338 = scalar_select %p337, %s22, 1
      %p339 = scmp.lt.s32.totalorder %s336, 15
      %s340 = scalar_select %p339, %s336, 15
      %p341 = scmp.lt.s32.totalorder %s23, 0
      %s342 = scalar_select %p341, %s23, 0
      %s343 = smul.addr %s340, 2
      %s344 = sadd.s32 %s342, %s343
      %s345 = smul.addr %s338, 32
      %s346 = sadd.s32 %s344, %s345
      %s347 = smul.addr %s346, 8
      %s348 = scalar_lea.vmem %s6, %s347
      %p349 = scmp.lt.s32.totalorder %s22, 1
      %s350 = scalar_select %p349, %s22, 1
      %s351 = smul.addr %s350, 54
      %s352 = smul.addr %s351, 4
      %s353 = scalar_lea.vmem %s0, %s352
      %s354 = smul.u32 8, %s24
      %p355 = scmp.lt.s32.totalorder %s22, 1
      %s356 = scalar_select %p355, %s22, 1
      %p357 = scmp.lt.s32.totalorder %s354, 15
      %s358 = scalar_select %p357, %s354, 15
      %s359 = smul.addr %s358, 2
      %s360 = smul.addr %s356, 32
      %s361 = sadd.s32 %s359, %s360
      %s362 = smul.addr %s361, 4
      %s363 = scalar_lea.vmem %s1, %s362
      %s364 = smul.u32 8, %s24
      %p365 = scmp.lt.s32.totalorder %s23, 0
      %s366 = scalar_select %p365, %s23, 0
      %s367 = smul.addr %s366, 4
      %s368 = scalar_lea.vmem %s2, %s367
      %p369 = scmp.lt.s32.totalorder %s23, 0
      %s370 = scalar_select %p369, %s23, 0
      %s371 = smul.addr %s370, 4
      %s372 = scalar_lea.vmem %s3, %s371
      %p373 = scmp.lt.s32.totalorder %s23, 0
      %s374 = scalar_select %p373, %s23, 0
      %s375 = scalar_lea.vmem %s4, %s374
      %p376 = scmp.lt.s32.totalorder %s23, 0
      %s377 = scalar_select %p376, %s23, 0
      %s378 = scalar_lea.vmem %s5, %s377
      %s379 = smul.u32 8, %s24
      %p380 = scmp.lt.s32.totalorder %s22, 1
      %s381 = scalar_select %p380, %s22, 1
      %p382 = scmp.lt.s32.totalorder %s379, 15
      %s383 = scalar_select %p382, %s379, 15
      %p384 = scmp.lt.s32.totalorder %s23, 0
      %s385 = scalar_select %p384, %s23, 0
      %s386 = smul.addr %s383, 2
      %s387 = sadd.s32 %s385, %s386
      %s388 = smul.addr %s381, 32
      %s389 = sadd.s32 %s387, %s388
      %s390 = smul.addr %s389, 8
      %s391 = scalar_lea.vmem %s6, %s390
      %s392 = smul.u32 8, %s24
      %s394 = smul.u32 %s24, 8
      %s395 = smul.u32 %s394, 3
      %s396 = smul.addr %s395, 4
      %s397 = scalar_lea.vmem %s353, %s396
      %v398 = vld [vmem:[%s397] sm:$0xf]
      %v399 = vld [vmem:[%s397 + $0x4] sm:$0xf]
      %v400 = vld [vmem:[%s397 + $0xc] sm:$0xf]
      %v401 = vld [vmem:[%s397 + $0x10] sm:$0xf]
      %v402 = vld [vmem:[%s397 + $0x18] sm:$0xf]
      %v403 = vld [vmem:[%s397 + $0x1c] sm:$0xf]
      %v404 = vld [vmem:[%s397 + $0x24] sm:$0xf]
      %v405 = vld [vmem:[%s397 + $0x28] sm:$0xf]
      %v406 = vld [vmem:[%s397 + $0x30] sm:$0xf]
      %v407 = vld [vmem:[%s397 + $0x34] sm:$0xf]
      %v408 = vld [vmem:[%s397 + $0x3c] sm:$0xf]
      %v409 = vld [vmem:[%s397 + $0x40] sm:$0xf]
      %v410 = vld [vmem:[%s397 + $0x48] sm:$0xf]
      %v411 = vld [vmem:[%s397 + $0x4c] sm:$0xf]
      %v412 = vld [vmem:[%s397 + $0x54] sm:$0xf]
      %v413 = vld [vmem:[%s397 + $0x58] sm:$0xf]
      %v414 = vld [vmem:[%s397 + $0x60] sm:$0xf]
      %v415 = vld [vmem:[%s397 + $0x64] sm:$0xf]
      %v416 = vld [vmem:[%s397 + $0x6c] sm:$0xf]
      %v417 = vld [vmem:[%s397 + $0x70] sm:$0xf]
      %v418 = vld [vmem:[%s368] sm:$0xf]
      %v419 = vld [vmem:[%s368 + $0x4] sm:$0xf]
      %v420 = vld [vmem:[%s368 + $0x8] sm:$0xf]
      %v421 = vld [vmem:[%s368 + $0xc] sm:$0xf]
      %v422 = vld [vmem:[%s368 + $0x10] sm:$0xf]
      %v423 = vld [vmem:[%s368 + $0x14] sm:$0xf]
      %v424 = vld [vmem:[%s368 + $0x18] sm:$0xf]
      %v425 = vld [vmem:[%s368 + $0x1c] sm:$0xf]
      %v426 = vld [vmem:[%s368 + $0x20] sm:$0xf]
      %v427 = vld [vmem:[%s368 + $0x24] sm:$0xf]
      %v428 = vld [vmem:[%s368 + $0x28] sm:$0xf]
      %v429 = vld [vmem:[%s368 + $0x2c] sm:$0xf]
      %v430 = vld [vmem:[%s368 + $0x30] sm:$0xf]
      %v431 = vld [vmem:[%s368 + $0x34] sm:$0xf]
      %v432 = vld [vmem:[%s368 + $0x38] sm:$0xf]
      %v433 = vld [vmem:[%s368 + $0x3c] sm:$0xf]
      %s434 = scalar_lea.vmem %s368, 192
      %v435 = vld [vmem:[%s434] sm:$0xf]
      %v436 = vld [vmem:[%s434 + $0x4] sm:$0xf]
      %v437 = vld [vmem:[%s434 + $0x8] sm:$0xf]
      %v438 = vld [vmem:[%s434 + $0xc] sm:$0xf]
      %v439 = vld [vmem:[%s434 + $0x10] sm:$0xf]
      %v440 = vld [vmem:[%s434 + $0x14] sm:$0xf]
      %v441 = vld [vmem:[%s434 + $0x18] sm:$0xf]
      %v442 = vld [vmem:[%s434 + $0x1c] sm:$0xf]
      %v443 = vld [vmem:[%s434 + $0x20] sm:$0xf]
      %v444 = vld [vmem:[%s434 + $0x24] sm:$0xf]
      %v445 = vld [vmem:[%s434 + $0x28] sm:$0xf]
      %v446 = vld [vmem:[%s434 + $0x2c] sm:$0xf]
      %v447 = vld [vmem:[%s434 + $0x30] sm:$0xf]
      %v448 = vld [vmem:[%s434 + $0x34] sm:$0xf]
      %v449 = vld [vmem:[%s434 + $0x38] sm:$0xf]
      %v450 = vld [vmem:[%s434 + $0x3c] sm:$0xf]
      %v467 = vunpack.c.l.b16 %v400
      %v468 = vunpack.c.l.b16 %v401
      %v469 = vunpack.c.l.b16 %v402
      %v470 = vunpack.c.l.b16 %v403
      %v471 = vunpack.c.l.b16 %v404
      %v472 = vunpack.c.l.b16 %v405
      %v473 = vunpack.c.l.b16 %v406
      %v474 = vunpack.c.l.b16 %v407
      %v475 = vunpack.c.l.b16 %v408
      %v476 = vunpack.c.l.b16 %v409
      %v477 = vunpack.c.l.b16 %v410
      %v478 = vunpack.c.l.b16 %v411
      %v479 = vunpack.c.l.b16 %v412
      %v480 = vunpack.c.l.b16 %v413
      %v481 = vunpack.c.l.b16 %v414
      %v482 = vunpack.c.l.b16 %v415
      %v483 = vpack.c.b16 %v468, %v467
      %v484 = vpack.c.b16 %v470, %v469
      %v485 = vpack.c.b16 %v472, %v471
      %v486 = vpack.c.b16 %v474, %v473
      %v487 = vpack.c.b16 %v476, %v475
      %v488 = vpack.c.b16 %v478, %v477
      %v489 = vpack.c.b16 %v480, %v479
      %v490 = vpack.c.b16 %v482, %v481
      %v515 = vunpack.c.l.b16 %v435
      %v516 = vunpack.c.l.b16 %v436
      %v517 = vunpack.c.l.b16 %v437
      %v518 = vunpack.c.l.b16 %v438
      %v519 = vunpack.c.l.b16 %v439
      %v520 = vunpack.c.l.b16 %v440
      %v521 = vunpack.c.l.b16 %v441
      %v522 = vunpack.c.l.b16 %v442
      %v523 = vunpack.c.l.b16 %v443
      %v524 = vunpack.c.l.b16 %v444
      %v525 = vunpack.c.l.b16 %v445
      %v526 = vunpack.c.l.b16 %v446
      %v527 = vunpack.c.l.b16 %v447
      %v528 = vunpack.c.l.b16 %v448
      %v529 = vunpack.c.l.b16 %v449
      %v530 = vunpack.c.l.b16 %v450
      %v531 = vpack.c.b16 %v516, %v515
      %v532 = vpack.c.b16 %v518, %v517
      %v533 = vpack.c.b16 %v520, %v519
      %v534 = vpack.c.b16 %v522, %v521
      %v535 = vpack.c.b16 %v524, %v523
      %v536 = vpack.c.b16 %v526, %v525
      %v537 = vpack.c.b16 %v528, %v527
      %v538 = vpack.c.b16 %v530, %v529
      %547 = vmatprep.subr.bf16.mxu0 0
      %548 = vmatpush1.bf16.msra.mxu0 %v531
      %549 = vmatprep.subr.bf16.mxu0 0
      %550 = vmatpush1.bf16.msra.mxu0 %v532
      %551 = vmatprep.subr.bf16.mxu0 0
      %552 = vmatpush1.bf16.msra.mxu0 %v533
      %553 = vmatprep.subr.bf16.mxu0 0
      %554 = vmatpush1.bf16.msra.mxu0 %v534
      %555 = vmatprep.subr.bf16.mxu0 0
      %556 = vmatpush1.bf16.msra.mxu0 %v535
      %557 = vmatprep.subr.bf16.mxu0 0
      %558 = vmatpush1.bf16.msra.mxu0 %v536
      %559 = vmatprep.subr.bf16.mxu0 0
      %560 = vmatpush1.bf16.msra.mxu0 %v537
      %561 = vmatprep.subr.bf16.mxu0 0
      %562 = vmatpush1.bf16.msra.mxu0 %v538
      %563 = vmatprep.subr.bf16.mxu0 0
      %564 = vmatpush1.bf16.msra.mxu0 0
      %565 = vmatprep.subr.bf16.mxu0 0
      %566 = vmatpush1.bf16.msra.mxu0 0
      %567 = vmatprep.subr.bf16.mxu0 0
      %568 = vmatpush1.bf16.msra.mxu0 0
      %569 = vmatprep.subr.bf16.mxu0 0
      %570 = vmatpush1.bf16.msra.mxu0 0
      %571 = vmatprep.subr.bf16.mxu0 0
      %572 = vmatpush1.bf16.msra.mxu0 0
      %573 = vmatprep.subr.bf16.mxu0 0
      %574 = vmatpush1.bf16.msra.mxu0 0
      %575 = vmatprep.subr.bf16.mxu0 0
      %576 = vmatpush1.bf16.msra.mxu0 0
      %577 = vmatprep.subr.bf16.mxu0 0
      %578 = vmatpush1.bf16.msra.mxu0 0
      %579 = vmatprep.mubr.bf16.mxu0 0
      %580 = vmatmul.mubr.bf16.gmra.mrb[0].mxu0 %v483
      %v581 = vpop.f32.mrb[0].mxu0
      %v582 = vadd.f32 0.0, %v581
      %v583 = vpop.f32.mrb[0].mxu0
      %v584 = vpop.f32.mrb[0].mxu0
      %v585 = vadd.f32 0.0, %v584
      %v586 = vpop.f32.mrb[0].mxu0
      %587 = vmatprep.mubr.bf16.mxu0 0
      %588 = vmatmul.mubr.bf16.gmra.mrb[0].mxu0 %v484
      %v589 = vpop.f32.mrb[0].mxu0
      %v590 = vadd.f32 0.0, %v589
      %v591 = vpop.f32.mrb[0].mxu0
      %v592 = vpop.f32.mrb[0].mxu0
      %v593 = vadd.f32 0.0, %v592
      %v594 = vpop.f32.mrb[0].mxu0
      %595 = vmatprep.mubr.bf16.mxu0 0
      %596 = vmatmul.mubr.bf16.gmra.mrb[0].mxu0 %v485
      %v597 = vpop.f32.mrb[0].mxu0
      %v598 = vadd.f32 0.0, %v597
      %v599 = vpop.f32.mrb[0].mxu0
      %v600 = vpop.f32.mrb[0].mxu0
      %v601 = vadd.f32 0.0, %v600
      %v602 = vpop.f32.mrb[0].mxu0
      %603 = vmatprep.mubr.bf16.mxu0 0
      %604 = vmatmul.mubr.bf16.gmra.mrb[0].mxu0 %v486
      %v605 = vpop.f32.mrb[0].mxu0
      %v606 = vadd.f32 0.0, %v605
      %v607 = vpop.f32.mrb[0].mxu0
      %v608 = vpop.f32.mrb[0].mxu0
      %v609 = vadd.f32 0.0, %v608
      %v610 = vpop.f32.mrb[0].mxu0
      %611 = vmatprep.mubr.bf16.mxu0 0
      %612 = vmatmul.mubr.bf16.gmra.mrb[0].mxu0 %v487
      %v613 = vpop.f32.mrb[0].mxu0
      %v614 = vadd.f32 0.0, %v613
      %v615 = vpop.f32.mrb[0].mxu0
      %v616 = vpop.f32.mrb[0].mxu0
      %v617 = vadd.f32 0.0, %v616
      %v618 = vpop.f32.mrb[0].mxu0
      %619 = vmatprep.mubr.bf16.mxu0 0
      %620 = vmatmul.mubr.bf16.gmra.mrb[0].mxu0 %v488
      %v621 = vpop.f32.mrb[0].mxu0
      %v622 = vadd.f32 0.0, %v621
      %v623 = vpop.f32.mrb[0].mxu0
      %v624 = vpop.f32.mrb[0].mxu0
      %v625 = vadd.f32 0.0, %v624
      %v626 = vpop.f32.mrb[0].mxu0
      %627 = vmatprep.mubr.bf16.mxu0 0
      %628 = vmatmul.mubr.bf16.gmra.mrb[0].mxu0 %v489
      %v629 = vpop.f32.mrb[0].mxu0
      %v630 = vadd.f32 0.0, %v629
      %v631 = vpop.f32.mrb[0].mxu0
      %v632 = vpop.f32.mrb[0].mxu0
      %v633 = vadd.f32 0.0, %v632
      %v634 = vpop.f32.mrb[0].mxu0
      %635 = vmatprep.mubr.bf16.mxu0 0
      %636 = vmatmul.mubr.bf16.gmra.mrb[0].mxu0 %v490
      %v637 = vpop.f32.mrb[0].mxu0
      %v638 = vadd.f32 0.0, %v637
      %v639 = vpop.f32.mrb[0].mxu0
      %v640 = vpop.f32.mrb[0].mxu0
      %v641 = vadd.f32 0.0, %v640
      %v642 = vpop.f32.mrb[0].mxu0
      %643 = vdwg.mxu0
      %v646 = vunpack.c.l.b16 %v398
      %v647 = vunpack.c.l.b16 %v399
      %v648 = vpack.c.b16 %v647, %v646
      %v666 = vunpack.c.l.b16 %v418
      %v667 = vunpack.c.l.b16 %v419
      %v668 = vunpack.c.l.b16 %v420
      %v669 = vunpack.c.l.b16 %v421
      %v670 = vunpack.c.l.b16 %v422
      %v671 = vunpack.c.l.b16 %v423
      %v672 = vunpack.c.l.b16 %v424
      %v673 = vunpack.c.l.b16 %v425
      %v674 = vunpack.c.l.b16 %v426
      %v675 = vunpack.c.l.b16 %v427
      %v676 = vunpack.c.l.b16 %v428
      %v677 = vunpack.c.l.b16 %v429
      %v678 = vunpack.c.l.b16 %v430
      %v679 = vunpack.c.l.b16 %v431
      %v680 = vunpack.c.l.b16 %v432
      %v681 = vunpack.c.l.b16 %v433
      %v682 = vpack.c.b16 %v667, %v666
      %v683 = vpack.c.b16 %v669, %v668
      %v684 = vpack.c.b16 %v671, %v670
      %v685 = vpack.c.b16 %v673, %v672
      %v686 = vpack.c.b16 %v675, %v674
      %v687 = vpack.c.b16 %v677, %v676
      %v688 = vpack.c.b16 %v679, %v678
      %v689 = vpack.c.b16 %v681, %v680
      %698 = vmatprep.subr.bf16.mxu0 0
      %699 = vmatpush1.bf16.msra.mxu0 %v682
      %700 = vmatprep.subr.bf16.mxu0 0
      %701 = vmatpush1.bf16.msra.mxu0 %v683
      %702 = vmatprep.subr.bf16.mxu0 0
      %703 = vmatpush1.bf16.msra.mxu0 %v684
      %704 = vmatprep.subr.bf16.mxu0 0
      %705 = vmatpush1.bf16.msra.mxu0 %v685
      %706 = vmatprep.subr.bf16.mxu0 0
      %707 = vmatpush1.bf16.msra.mxu0 %v686
      %708 = vmatprep.subr.bf16.mxu0 0
      %709 = vmatpush1.bf16.msra.mxu0 %v687
      %710 = vmatprep.subr.bf16.mxu0 0
      %711 = vmatpush1.bf16.msra.mxu0 %v688
      %712 = vmatprep.subr.bf16.mxu0 0
      %713 = vmatpush1.bf16.msra.mxu0 %v689
      %714 = vmatprep.subr.bf16.mxu0 0
      %715 = vmatpush1.bf16.msra.mxu0 0
      %716 = vmatprep.subr.bf16.mxu0 0
      %717 = vmatpush1.bf16.msra.mxu0 0
      %718 = vmatprep.subr.bf16.mxu0 0
      %719 = vmatpush1.bf16.msra.mxu0 0
      %720 = vmatprep.subr.bf16.mxu0 0
      %721 = vmatpush1.bf16.msra.mxu0 0
      %722 = vmatprep.subr.bf16.mxu0 0
      %723 = vmatpush1.bf16.msra.mxu0 0
      %724 = vmatprep.subr.bf16.mxu0 0
      %725 = vmatpush1.bf16.msra.mxu0 0
      %726 = vmatprep.subr.bf16.mxu0 0
      %727 = vmatpush1.bf16.msra.mxu0 0
      %728 = vmatprep.subr.bf16.mxu0 0
      %729 = vmatpush1.bf16.msra.mxu0 0
      %730 = vmatprep.mubr.bf16.mxu0 0
      %731 = vmatmul.mubr.bf16.gmra.mrb[0].mxu0 %v648
      %v732 = vpop.f32.mrb[0].mxu0
      %v733 = vadd.f32 %v582, %v732
      %v734 = vpop.f32.mrb[0].mxu0
      %v735 = vpop.f32.mrb[0].mxu0
      %v736 = vadd.f32 %v585, %v735
      %v737 = vpop.f32.mrb[0].mxu0
      %738 = vmatprep.mubr.bf16.mxu0 0
      %739 = vmatmul.mubr.bf16.gmra.mrb[0].mxu0 %v483
      %v740 = vpop.f32.mrb[0].mxu0
      %v741 = vadd.f32 %v590, %v740
      %v742 = vpop.f32.mrb[0].mxu0
      %v743 = vpop.f32.mrb[0].mxu0
      %v744 = vadd.f32 %v593, %v743
      %v745 = vpop.f32.mrb[0].mxu0
      %746 = vmatprep.mubr.bf16.mxu0 0
      %747 = vmatmul.mubr.bf16.gmra.mrb[0].mxu0 %v484
      %v748 = vpop.f32.mrb[0].mxu0
      %v749 = vadd.f32 %v598, %v748
      %v750 = vpop.f32.mrb[0].mxu0
      %v751 = vpop.f32.mrb[0].mxu0
      %v752 = vadd.f32 %v601, %v751
      %v753 = vpop.f32.mrb[0].mxu0
      %754 = vmatprep.mubr.bf16.mxu0 0
      %755 = vmatmul.mubr.bf16.gmra.mrb[0].mxu0 %v485
      %v756 = vpop.f32.mrb[0].mxu0
      %v757 = vadd.f32 %v606, %v756
      %v758 = vpop.f32.mrb[0].mxu0
      %v759 = vpop.f32.mrb[0].mxu0
      %v760 = vadd.f32 %v609, %v759
      %v761 = vpop.f32.mrb[0].mxu0
      %762 = vmatprep.mubr.bf16.mxu0 0
      %763 = vmatmul.mubr.bf16.gmra.mrb[0].mxu0 %v486
      %v764 = vpop.f32.mrb[0].mxu0
      %v765 = vadd.f32 %v614, %v764
      %v766 = vpop.f32.mrb[0].mxu0
      %v767 = vpop.f32.mrb[0].mxu0
      %v768 = vadd.f32 %v617, %v767
      %v769 = vpop.f32.mrb[0].mxu0
      %770 = vmatprep.mubr.bf16.mxu0 0
      %771 = vmatmul.mubr.bf16.gmra.mrb[0].mxu0 %v487
      %v772 = vpop.f32.mrb[0].mxu0
      %v773 = vadd.f32 %v622, %v772
      %v774 = vpop.f32.mrb[0].mxu0
      %v775 = vpop.f32.mrb[0].mxu0
      %v776 = vadd.f32 %v625, %v775
      %v777 = vpop.f32.mrb[0].mxu0
      %778 = vmatprep.mubr.bf16.mxu0 0
      %779 = vmatmul.mubr.bf16.gmra.mrb[0].mxu0 %v488
      %v780 = vpop.f32.mrb[0].mxu0
      %v781 = vadd.f32 %v630, %v780
      %v782 = vpop.f32.mrb[0].mxu0
      %v783 = vpop.f32.mrb[0].mxu0
      %v784 = vadd.f32 %v633, %v783
      %v785 = vpop.f32.mrb[0].mxu0
      %786 = vmatprep.mubr.bf16.mxu0 0
      %787 = vmatmul.mubr.bf16.gmra.mrb[0].mxu0 %v489
      %v788 = vpop.f32.mrb[0].mxu0
      %v789 = vadd.f32 %v638, %v788
      %v790 = vpop.f32.mrb[0].mxu0
      %v791 = vpop.f32.mrb[0].mxu0
      %v792 = vadd.f32 %v641, %v791
      %v793 = vpop.f32.mrb[0].mxu0
      %794 = vdwg.mxu0
      %s795 = scalar_lea.vmem %s368, 384
      %v796 = vld [vmem:[%s795] sm:$0xf]
      %v797 = vld [vmem:[%s795 + $0x4] sm:$0xf]
      %v798 = vld [vmem:[%s795 + $0x8] sm:$0xf]
      %v799 = vld [vmem:[%s795 + $0xc] sm:$0xf]
      %v800 = vld [vmem:[%s795 + $0x10] sm:$0xf]
      %v801 = vld [vmem:[%s795 + $0x14] sm:$0xf]
      %v802 = vld [vmem:[%s795 + $0x18] sm:$0xf]
      %v803 = vld [vmem:[%s795 + $0x1c] sm:$0xf]
      %v804 = vld [vmem:[%s795 + $0x20] sm:$0xf]
      %v805 = vld [vmem:[%s795 + $0x24] sm:$0xf]
      %v806 = vld [vmem:[%s795 + $0x28] sm:$0xf]
      %v807 = vld [vmem:[%s795 + $0x2c] sm:$0xf]
      %v808 = vld [vmem:[%s795 + $0x30] sm:$0xf]
      %v809 = vld [vmem:[%s795 + $0x34] sm:$0xf]
      %v810 = vld [vmem:[%s795 + $0x38] sm:$0xf]
      %v811 = vld [vmem:[%s795 + $0x3c] sm:$0xf]
      %v814 = vunpack.c.l.b16 %v416
      %v815 = vunpack.c.l.b16 %v417
      %v816 = vpack.c.b16 %v815, %v814
      %v834 = vunpack.c.l.b16 %v796
      %v835 = vunpack.c.l.b16 %v797
      %v836 = vunpack.c.l.b16 %v798
      %v837 = vunpack.c.l.b16 %v799
      %v838 = vunpack.c.l.b16 %v800
      %v839 = vunpack.c.l.b16 %v801
      %v840 = vunpack.c.l.b16 %v802
      %v841 = vunpack.c.l.b16 %v803
      %v842 = vunpack.c.l.b16 %v804
      %v843 = vunpack.c.l.b16 %v805
      %v844 = vunpack.c.l.b16 %v806
      %v845 = vunpack.c.l.b16 %v807
      %v846 = vunpack.c.l.b16 %v808
      %v847 = vunpack.c.l.b16 %v809
      %v848 = vunpack.c.l.b16 %v810
      %v849 = vunpack.c.l.b16 %v811
      %v850 = vpack.c.b16 %v835, %v834
      %v851 = vpack.c.b16 %v837, %v836
      %v852 = vpack.c.b16 %v839, %v838
      %v853 = vpack.c.b16 %v841, %v840
      %v854 = vpack.c.b16 %v843, %v842
      %v855 = vpack.c.b16 %v845, %v844
      %v856 = vpack.c.b16 %v847, %v846
      %v857 = vpack.c.b16 %v849, %v848
      %866 = vmatprep.subr.bf16.mxu0 0
      %867 = vmatpush1.bf16.msra.mxu0 %v850
      %868 = vmatprep.subr.bf16.mxu0 0
      %869 = vmatpush1.bf16.msra.mxu0 %v851
      %870 = vmatprep.subr.bf16.mxu0 0
      %871 = vmatpush1.bf16.msra.mxu0 %v852
      %872 = vmatprep.subr.bf16.mxu0 0
      %873 = vmatpush1.bf16.msra.mxu0 %v853
      %874 = vmatprep.subr.bf16.mxu0 0
      %875 = vmatpush1.bf16.msra.mxu0 %v854
      %876 = vmatprep.subr.bf16.mxu0 0
      %877 = vmatpush1.bf16.msra.mxu0 %v855
      %878 = vmatprep.subr.bf16.mxu0 0
      %879 = vmatpush1.bf16.msra.mxu0 %v856
      %880 = vmatprep.subr.bf16.mxu0 0
      %881 = vmatpush1.bf16.msra.mxu0 %v857
      %882 = vmatprep.subr.bf16.mxu0 0
      %883 = vmatpush1.bf16.msra.mxu0 0
      %884 = vmatprep.subr.bf16.mxu0 0
      %885 = vmatpush1.bf16.msra.mxu0 0
      %886 = vmatprep.subr.bf16.mxu0 0
      %887 = vmatpush1.bf16.msra.mxu0 0
      %888 = vmatprep.subr.bf16.mxu0 0
      %889 = vmatpush1.bf16.msra.mxu0 0
      %890 = vmatprep.subr.bf16.mxu0 0
      %891 = vmatpush1.bf16.msra.mxu0 0
      %892 = vmatprep.subr.bf16.mxu0 0
      %893 = vmatpush1.bf16.msra.mxu0 0
      %894 = vmatprep.subr.bf16.mxu0 0
      %895 = vmatpush1.bf16.msra.mxu0 0
      %896 = vmatprep.subr.bf16.mxu0 0
      %897 = vmatpush1.bf16.msra.mxu0 0
      %898 = vmatprep.mubr.bf16.mxu0 0
      %899 = vmatmul.mubr.bf16.gmra.mrb[0].mxu0 %v484
      %v900 = vpop.f32.mrb[0].mxu0
      %v901 = vadd.f32 0.0, %v900
      %v902 = vpop.f32.mrb[0].mxu0
      %v903 = vpop.f32.mrb[0].mxu0
      %v904 = vadd.f32 0.0, %v903
      %v905 = vpop.f32.mrb[0].mxu0
      %906 = vmatprep.mubr.bf16.mxu0 0
      %907 = vmatmul.mubr.bf16.gmra.mrb[0].mxu0 %v485
      %v908 = vpop.f32.mrb[0].mxu0
      %v909 = vadd.f32 0.0, %v908
      %v910 = vpop.f32.mrb[0].mxu0
      %v911 = vpop.f32.mrb[0].mxu0
      %v912 = vadd.f32 0.0, %v911
      %v913 = vpop.f32.mrb[0].mxu0
      %914 = vmatprep.mubr.bf16.mxu0 0
      %915 = vmatmul.mubr.bf16.gmra.mrb[0].mxu0 %v486
      %v916 = vpop.f32.mrb[0].mxu0
      %v917 = vadd.f32 0.0, %v916
      %v918 = vpop.f32.mrb[0].mxu0
      %v919 = vpop.f32.mrb[0].mxu0
      %v920 = vadd.f32 0.0, %v919
      %v921 = vpop.f32.mrb[0].mxu0
      %922 = vmatprep.mubr.bf16.mxu0 0
      %923 = vmatmul.mubr.bf16.gmra.mrb[0].mxu0 %v487
      %v924 = vpop.f32.mrb[0].mxu0
      %v925 = vadd.f32 0.0, %v924
      %v926 = vpop.f32.mrb[0].mxu0
      %v927 = vpop.f32.mrb[0].mxu0
      %v928 = vadd.f32 0.0, %v927
      %v929 = vpop.f32.mrb[0].mxu0
      %930 = vmatprep.mubr.bf16.mxu0 0
      %931 = vmatmul.mubr.bf16.gmra.mrb[0].mxu0 %v488
      %v932 = vpop.f32.mrb[0].mxu0
      %v933 = vadd.f32 0.0, %v932
      %v934 = vpop.f32.mrb[0].mxu0
      %v935 = vpop.f32.mrb[0].mxu0
      %v936 = vadd.f32 0.0, %v935
      %v937 = vpop.f32.mrb[0].mxu0
      %938 = vmatprep.mubr.bf16.mxu0 0
      %939 = vmatmul.mubr.bf16.gmra.mrb[0].mxu0 %v489
      %v940 = vpop.f32.mrb[0].mxu0
      %v941 = vadd.f32 0.0, %v940
      %v942 = vpop.f32.mrb[0].mxu0
      %v943 = vpop.f32.mrb[0].mxu0
      %v944 = vadd.f32 0.0, %v943
      %v945 = vpop.f32.mrb[0].mxu0
      %946 = vmatprep.mubr.bf16.mxu0 0
      %947 = vmatmul.mubr.bf16.gmra.mrb[0].mxu0 %v490
      %v948 = vpop.f32.mrb[0].mxu0
      %v949 = vadd.f32 0.0, %v948
      %v950 = vpop.f32.mrb[0].mxu0
      %v951 = vpop.f32.mrb[0].mxu0
      %v952 = vadd.f32 0.0, %v951
      %v953 = vpop.f32.mrb[0].mxu0
      %954 = vmatprep.mubr.bf16.mxu0 0
      %955 = vmatmul.mubr.bf16.gmra.mrb[0].mxu0 %v816
      %v956 = vpop.f32.mrb[0].mxu0
      %v957 = vadd.f32 0.0, %v956
      %v958 = vpop.f32.mrb[0].mxu0
      %v959 = vpop.f32.mrb[0].mxu0
      %v960 = vadd.f32 0.0, %v959
      %v961 = vpop.f32.mrb[0].mxu0
      %962 = vdwg.mxu0
      %v963 = vadd.f32 %v733, %v901
      %v964 = vadd.f32 %v736, %v904
      %v965 = vadd.f32 %v741, %v909
      %v966 = vadd.f32 %v744, %v912
      %v967 = vadd.f32 %v749, %v917
      %v968 = vadd.f32 %v752, %v920
      %v969 = vadd.f32 %v757, %v925
      %v970 = vadd.f32 %v760, %v928
      %v971 = vadd.f32 %v765, %v933
      %v972 = vadd.f32 %v768, %v936
      %v973 = vadd.f32 %v773, %v941
      %v974 = vadd.f32 %v776, %v944
      %v975 = vadd.f32 %v781, %v949
      %v976 = vadd.f32 %v784, %v952
      %v977 = vadd.f32 %v789, %v957
      %v978 = vadd.f32 %v792, %v960
      %v979 = vld [vmem:[%s397] sm:$0xf]
      %v980 = vld [vmem:[%s397 + $0x4] sm:$0xf]
      %v981 = vld [vmem:[%s397 + $0x8] sm:$0x1]
      %v982 = vld [vmem:[%s397 + $0xc] sm:$0xf]
      %v983 = vld [vmem:[%s397 + $0x10] sm:$0xf]
      %v984 = vld [vmem:[%s397 + $0x14] sm:$0x1]
      %v985 = vld [vmem:[%s397 + $0x18] sm:$0xf]
      %v986 = vld [vmem:[%s397 + $0x1c] sm:$0xf]
      %v987 = vld [vmem:[%s397 + $0x20] sm:$0x1]
      %v988 = vld [vmem:[%s397 + $0x24] sm:$0xf]
      %v989 = vld [vmem:[%s397 + $0x28] sm:$0xf]
      %v990 = vld [vmem:[%s397 + $0x2c] sm:$0x1]
      %v991 = vld [vmem:[%s397 + $0x30] sm:$0xf]
      %v992 = vld [vmem:[%s397 + $0x34] sm:$0xf]
      %v993 = vld [vmem:[%s397 + $0x38] sm:$0x1]
      %v994 = vld [vmem:[%s397 + $0x3c] sm:$0xf]
      %v995 = vld [vmem:[%s397 + $0x40] sm:$0xf]
      %v996 = vld [vmem:[%s397 + $0x44] sm:$0x1]
      %v997 = vld [vmem:[%s397 + $0x48] sm:$0xf]
      %v998 = vld [vmem:[%s397 + $0x4c] sm:$0xf]
      %v999 = vld [vmem:[%s397 + $0x50] sm:$0x1]
      %v1000 = vld [vmem:[%s397 + $0x54] sm:$0xf]
      %v1001 = vld [vmem:[%s397 + $0x58] sm:$0xf]
      %v1002 = vld [vmem:[%s397 + $0x5c] sm:$0x1]
      %v1003 = vld [vmem:[%s397 + $0x60] sm:$0xf]
      %v1004 = vld [vmem:[%s397 + $0x64] sm:$0xf]
      %v1005 = vld [vmem:[%s397 + $0x68] sm:$0x1]
      %v1006 = vld [vmem:[%s397 + $0x6c] sm:$0xf]
      %v1007 = vld [vmem:[%s397 + $0x70] sm:$0xf]
      %v1008 = vld [vmem:[%s397 + $0x74] sm:$0x1]
      %vm1009 = vsmask.f32 3328
      %vm1010 = vsmask.f32 7440
      %vm1011 = vmor %vm1009, %vm1010
      %v1013 = vshrl.u32 %v979, 16
      %v1015 = vrot.slane %v1013, 4
      %v1016 = vshll.u32 %v979, 16
      %v1018 = vrot.slane %v1016, 5
      %v1019 = vor.u32 %v1015, %v1018
      %v1020 = vrot.slane %v1019, 4
      %v1022 = vshll.u32 %v980, 16
      %v1024 = vrot.slane %v1022, 5
      %v1025 = vsel %vm1011, %v1020, %v1024
      %v1026 = vshrl.u32 %v980, 16
      %v1028 = vrot.slane %v1026, 4
      %v1029 = vor.u32 %v1028, %v1024
      %v1030 = vrot.slane %v1029, 4
      %v1032 = vshll.u32 %v981, 16
      %v1034 = vrot.slane %v1032, 5
      %v1035 = vsel %vm1011, %v1030, %v1034
      %v1037 = vshrl.u32 %v982, 16
      %v1039 = vrot.slane %v1037, 4
      %v1040 = vshll.u32 %v982, 16
      %v1042 = vrot.slane %v1040, 5
      %v1043 = vor.u32 %v1039, %v1042
      %v1044 = vrot.slane %v1043, 4
      %v1046 = vshll.u32 %v983, 16
      %v1048 = vrot.slane %v1046, 5
      %v1049 = vsel %vm1011, %v1044, %v1048
      %v1050 = vshrl.u32 %v983, 16
      %v1052 = vrot.slane %v1050, 4
      %v1053 = vor.u32 %v1052, %v1048
      %v1054 = vrot.slane %v1053, 4
      %v1056 = vshll.u32 %v984, 16
      %v1058 = vrot.slane %v1056, 5
      %v1059 = vsel %vm1011, %v1054, %v1058
      %v1061 = vshrl.u32 %v985, 16
      %v1063 = vrot.slane %v1061, 4
      %v1064 = vshll.u32 %v985, 16
      %v1066 = vrot.slane %v1064, 5
      %v1067 = vor.u32 %v1063, %v1066
      %v1068 = vrot.slane %v1067, 4
      %v1070 = vshll.u32 %v986, 16
      %v1072 = vrot.slane %v1070, 5
      %v1073 = vsel %vm1011, %v1068, %v1072
      %v1074 = vshrl.u32 %v986, 16
      %v1076 = vrot.slane %v1074, 4
      %v1077 = vor.u32 %v1076, %v1072
      %v1078 = vrot.slane %v1077, 4
      %v1080 = vshll.u32 %v987, 16
      %v1082 = vrot.slane %v1080, 5
      %v1083 = vsel %vm1011, %v1078, %v1082
      %v1085 = vshrl.u32 %v988, 16
      %v1087 = vrot.slane %v1085, 4
      %v1088 = vshll.u32 %v988, 16
      %v1090 = vrot.slane %v1088, 5
      %v1091 = vor.u32 %v1087, %v1090
      %v1092 = vrot.slane %v1091, 4
      %v1094 = vshll.u32 %v989, 16
      %v1096 = vrot.slane %v1094, 5
      %v1097 = vsel %vm1011, %v1092, %v1096
      %v1098 = vshrl.u32 %v989, 16
      %v1100 = vrot.slane %v1098, 4
      %v1101 = vor.u32 %v1100, %v1096
      %v1102 = vrot.slane %v1101, 4
      %v1104 = vshll.u32 %v990, 16
      %v1106 = vrot.slane %v1104, 5
      %v1107 = vsel %vm1011, %v1102, %v1106
      %v1109 = vshrl.u32 %v991, 16
      %v1111 = vrot.slane %v1109, 4
      %v1112 = vshll.u32 %v991, 16
      %v1114 = vrot.slane %v1112, 5
      %v1115 = vor.u32 %v1111, %v1114
      %v1116 = vrot.slane %v1115, 4
      %v1118 = vshll.u32 %v992, 16
      %v1120 = vrot.slane %v1118, 5
      %v1121 = vsel %vm1011, %v1116, %v1120
      %v1122 = vshrl.u32 %v992, 16
      %v1124 = vrot.slane %v1122, 4
      %v1125 = vor.u32 %v1124, %v1120
      %v1126 = vrot.slane %v1125, 4
      %v1128 = vshll.u32 %v993, 16
      %v1130 = vrot.slane %v1128, 5
      %v1131 = vsel %vm1011, %v1126, %v1130
      %v1133 = vshrl.u32 %v994, 16
      %v1135 = vrot.slane %v1133, 4
      %v1136 = vshll.u32 %v994, 16
      %v1138 = vrot.slane %v1136, 5
      %v1139 = vor.u32 %v1135, %v1138
      %v1140 = vrot.slane %v1139, 4
      %v1142 = vshll.u32 %v995, 16
      %v1144 = vrot.slane %v1142, 5
      %v1145 = vsel %vm1011, %v1140, %v1144
      %v1146 = vshrl.u32 %v995, 16
      %v1148 = vrot.slane %v1146, 4
      %v1149 = vor.u32 %v1148, %v1144
      %v1150 = vrot.slane %v1149, 4
      %v1152 = vshll.u32 %v996, 16
      %v1154 = vrot.slane %v1152, 5
      %v1155 = vsel %vm1011, %v1150, %v1154
      %v1157 = vshrl.u32 %v997, 16
      %v1159 = vrot.slane %v1157, 4
      %v1160 = vshll.u32 %v997, 16
      %v1162 = vrot.slane %v1160, 5
      %v1163 = vor.u32 %v1159, %v1162
      %v1164 = vrot.slane %v1163, 4
      %v1166 = vshll.u32 %v998, 16
      %v1168 = vrot.slane %v1166, 5
      %v1169 = vsel %vm1011, %v1164, %v1168
      %v1170 = vshrl.u32 %v998, 16
      %v1172 = vrot.slane %v1170, 4
      %v1173 = vor.u32 %v1172, %v1168
      %v1174 = vrot.slane %v1173, 4
      %v1176 = vshll.u32 %v999, 16
      %v1178 = vrot.slane %v1176, 5
      %v1179 = vsel %vm1011, %v1174, %v1178
      %v1181 = vshrl.u32 %v1000, 16
      %v1183 = vrot.slane %v1181, 4
      %v1184 = vshll.u32 %v1000, 16
      %v1186 = vrot.slane %v1184, 5
      %v1187 = vor.u32 %v1183, %v1186
      %v1188 = vrot.slane %v1187, 4
      %v1190 = vshll.u32 %v1001, 16
      %v1192 = vrot.slane %v1190, 5
      %v1193 = vsel %vm1011, %v1188, %v1192
      %v1194 = vshrl.u32 %v1001, 16
      %v1196 = vrot.slane %v1194, 4
      %v1197 = vor.u32 %v1196, %v1192
      %v1198 = vrot.slane %v1197, 4
      %v1200 = vshll.u32 %v1002, 16
      %v1202 = vrot.slane %v1200, 5
      %v1203 = vsel %vm1011, %v1198, %v1202
      %s1204 = scalar_lea.vmem %s368, 64
      %v1205 = vld [vmem:[%s1204] sm:$0xf]
      %v1206 = vld [vmem:[%s1204 + $0x4] sm:$0xf]
      %v1207 = vld [vmem:[%s1204 + $0x8] sm:$0xf]
      %v1208 = vld [vmem:[%s1204 + $0xc] sm:$0xf]
      %v1209 = vld [vmem:[%s1204 + $0x10] sm:$0xf]
      %v1210 = vld [vmem:[%s1204 + $0x14] sm:$0xf]
      %v1211 = vld [vmem:[%s1204 + $0x18] sm:$0xf]
      %v1212 = vld [vmem:[%s1204 + $0x1c] sm:$0xf]
      %v1213 = vld [vmem:[%s1204 + $0x20] sm:$0xf]
      %v1214 = vld [vmem:[%s1204 + $0x24] sm:$0xf]
      %v1215 = vld [vmem:[%s1204 + $0x28] sm:$0xf]
      %v1216 = vld [vmem:[%s1204 + $0x2c] sm:$0xf]
      %v1217 = vld [vmem:[%s1204 + $0x30] sm:$0xf]
      %v1218 = vld [vmem:[%s1204 + $0x34] sm:$0xf]
      %v1219 = vld [vmem:[%s1204 + $0x38] sm:$0xf]
      %v1220 = vld [vmem:[%s1204 + $0x3c] sm:$0xf]
      %v1221 = vunpack.c.l.b16 %v1025
      %v1222 = vunpack.c.l.b16 %v1035
      %v1223 = vunpack.c.l.b16 %v1049
      %v1224 = vunpack.c.l.b16 %v1059
      %v1225 = vunpack.c.l.b16 %v1073
      %v1226 = vunpack.c.l.b16 %v1083
      %v1227 = vunpack.c.l.b16 %v1097
      %v1228 = vunpack.c.l.b16 %v1107
      %v1229 = vunpack.c.l.b16 %v1121
      %v1230 = vunpack.c.l.b16 %v1131
      %v1231 = vunpack.c.l.b16 %v1145
      %v1232 = vunpack.c.l.b16 %v1155
      %v1233 = vunpack.c.l.b16 %v1169
      %v1234 = vunpack.c.l.b16 %v1179
      %v1235 = vunpack.c.l.b16 %v1193
      %v1236 = vunpack.c.l.b16 %v1203
      %v1237 = vpack.c.b16 %v1222, %v1221
      %v1238 = vpack.c.b16 %v1224, %v1223
      %v1239 = vpack.c.b16 %v1226, %v1225
      %v1240 = vpack.c.b16 %v1228, %v1227
      %v1241 = vpack.c.b16 %v1230, %v1229
      %v1242 = vpack.c.b16 %v1232, %v1231
      %v1243 = vpack.c.b16 %v1234, %v1233
      %v1244 = vpack.c.b16 %v1236, %v1235
      %v1269 = vunpack.c.l.b16 %v1205
      %v1270 = vunpack.c.l.b16 %v1206
      %v1271 = vunpack.c.l.b16 %v1207
      %v1272 = vunpack.c.l.b16 %v1208
      %v1273 = vunpack.c.l.b16 %v1209
      %v1274 = vunpack.c.l.b16 %v1210
      %v1275 = vunpack.c.l.b16 %v1211
      %v1276 = vunpack.c.l.b16 %v1212
      %v1277 = vunpack.c.l.b16 %v1213
      %v1278 = vunpack.c.l.b16 %v1214
      %v1279 = vunpack.c.l.b16 %v1215
      %v1280 = vunpack.c.l.b16 %v1216
      %v1281 = vunpack.c.l.b16 %v1217
      %v1282 = vunpack.c.l.b16 %v1218
      %v1283 = vunpack.c.l.b16 %v1219
      %v1284 = vunpack.c.l.b16 %v1220
      %v1285 = vpack.c.b16 %v1270, %v1269
      %v1286 = vpack.c.b16 %v1272, %v1271
      %v1287 = vpack.c.b16 %v1274, %v1273
      %v1288 = vpack.c.b16 %v1276, %v1275
      %v1289 = vpack.c.b16 %v1278, %v1277
      %v1290 = vpack.c.b16 %v1280, %v1279
      %v1291 = vpack.c.b16 %v1282, %v1281
      %v1292 = vpack.c.b16 %v1284, %v1283
      %1301 = vmatprep.subr.bf16.mxu0 0
      %1302 = vmatpush1.bf16.msra.mxu0 %v1285
      %1303 = vmatprep.subr.bf16.mxu0 0
      %1304 = vmatpush1.bf16.msra.mxu0 %v1286
      %1305 = vmatprep.subr.bf16.mxu0 0
      %1306 = vmatpush1.bf16.msra.mxu0 %v1287
      %1307 = vmatprep.subr.bf16.mxu0 0
      %1308 = vmatpush1.bf16.msra.mxu0 %v1288
      %1309 = vmatprep.subr.bf16.mxu0 0
      %1310 = vmatpush1.bf16.msra.mxu0 %v1289
      %1311 = vmatprep.subr.bf16.mxu0 0
      %1312 = vmatpush1.bf16.msra.mxu0 %v1290
      %1313 = vmatprep.subr.bf16.mxu0 0
      %1314 = vmatpush1.bf16.msra.mxu0 %v1291
      %1315 = vmatprep.subr.bf16.mxu0 0
      %1316 = vmatpush1.bf16.msra.mxu0 %v1292
      %1317 = vmatprep.subr.bf16.mxu0 0
      %1318 = vmatpush1.bf16.msra.mxu0 0
      %1319 = vmatprep.subr.bf16.mxu0 0
      %1320 = vmatpush1.bf16.msra.mxu0 0
      %1321 = vmatprep.subr.bf16.mxu0 0
      %1322 = vmatpush1.bf16.msra.mxu0 0
      %1323 = vmatprep.subr.bf16.mxu0 0
      %1324 = vmatpush1.bf16.msra.mxu0 0
      %1325 = vmatprep.subr.bf16.mxu0 0
      %1326 = vmatpush1.bf16.msra.mxu0 0
      %1327 = vmatprep.subr.bf16.mxu0 0
      %1328 = vmatpush1.bf16.msra.mxu0 0
      %1329 = vmatprep.subr.bf16.mxu0 0
      %1330 = vmatpush1.bf16.msra.mxu0 0
      %1331 = vmatprep.subr.bf16.mxu0 0
      %1332 = vmatpush1.bf16.msra.mxu0 0
      %1333 = vmatprep.mubr.bf16.mxu0 0
      %1334 = vmatmul.mubr.bf16.gmra.mrb[0].mxu0 %v1237
      %v1335 = vpop.f32.mrb[0].mxu0
      %v1336 = vadd.f32 0.0, %v1335
      %v1337 = vpop.f32.mrb[0].mxu0
      %v1338 = vpop.f32.mrb[0].mxu0
      %v1339 = vadd.f32 0.0, %v1338
      %v1340 = vpop.f32.mrb[0].mxu0
      %1341 = vmatprep.mubr.bf16.mxu0 0
      %1342 = vmatmul.mubr.bf16.gmra.mrb[0].mxu0 %v1238
      %v1343 = vpop.f32.mrb[0].mxu0
      %v1344 = vadd.f32 0.0, %v1343
      %v1345 = vpop.f32.mrb[0].mxu0
      %v1346 = vpop.f32.mrb[0].mxu0
      %v1347 = vadd.f32 0.0, %v1346
      %v1348 = vpop.f32.mrb[0].mxu0
      %1349 = vmatprep.mubr.bf16.mxu0 0
      %1350 = vmatmul.mubr.bf16.gmra.mrb[0].mxu0 %v1239
      %v1351 = vpop.f32.mrb[0].mxu0
      %v1352 = vadd.f32 0.0, %v1351
      %v1353 = vpop.f32.mrb[0].mxu0
      %v1354 = vpop.f32.mrb[0].mxu0
      %v1355 = vadd.f32 0.0, %v1354
      %v1356 = vpop.f32.mrb[0].mxu0
      %1357 = vmatprep.mubr.bf16.mxu0 0
      %1358 = vmatmul.mubr.bf16.gmra.mrb[0].mxu0 %v1240
      %v1359 = vpop.f32.mrb[0].mxu0
      %v1360 = vadd.f32 0.0, %v1359
      %v1361 = vpop.f32.mrb[0].mxu0
      %v1362 = vpop.f32.mrb[0].mxu0
      %v1363 = vadd.f32 0.0, %v1362
      %v1364 = vpop.f32.mrb[0].mxu0
      %1365 = vmatprep.mubr.bf16.mxu0 0
      %1366 = vmatmul.mubr.bf16.gmra.mrb[0].mxu0 %v1241
      %v1367 = vpop.f32.mrb[0].mxu0
      %v1368 = vadd.f32 0.0, %v1367
      %v1369 = vpop.f32.mrb[0].mxu0
      %v1370 = vpop.f32.mrb[0].mxu0
      %v1371 = vadd.f32 0.0, %v1370
      %v1372 = vpop.f32.mrb[0].mxu0
      %1373 = vmatprep.mubr.bf16.mxu0 0
      %1374 = vmatmul.mubr.bf16.gmra.mrb[0].mxu0 %v1242
      %v1375 = vpop.f32.mrb[0].mxu0
      %v1376 = vadd.f32 0.0, %v1375
      %v1377 = vpop.f32.mrb[0].mxu0
      %v1378 = vpop.f32.mrb[0].mxu0
      %v1379 = vadd.f32 0.0, %v1378
      %v1380 = vpop.f32.mrb[0].mxu0
      %1381 = vmatprep.mubr.bf16.mxu0 0
      %1382 = vmatmul.mubr.bf16.gmra.mrb[0].mxu0 %v1243
      %v1383 = vpop.f32.mrb[0].mxu0
      %v1384 = vadd.f32 0.0, %v1383
      %v1385 = vpop.f32.mrb[0].mxu0
      %v1386 = vpop.f32.mrb[0].mxu0
      %v1387 = vadd.f32 0.0, %v1386
      %v1388 = vpop.f32.mrb[0].mxu0
      %1389 = vmatprep.mubr.bf16.mxu0 0
      %1390 = vmatmul.mubr.bf16.gmra.mrb[0].mxu0 %v1244
      %v1391 = vpop.f32.mrb[0].mxu0
      %v1392 = vadd.f32 0.0, %v1391
      %v1393 = vpop.f32.mrb[0].mxu0
      %v1394 = vpop.f32.mrb[0].mxu0
      %v1395 = vadd.f32 0.0, %v1394
      %v1396 = vpop.f32.mrb[0].mxu0
      %1397 = vdwg.mxu0
      %v1398 = vadd.f32 %v963, %v1336
      %v1399 = vadd.f32 %v964, %v1339
      %v1400 = vadd.f32 %v965, %v1344
      %v1401 = vadd.f32 %v966, %v1347
      %v1402 = vadd.f32 %v967, %v1352
      %v1403 = vadd.f32 %v968, %v1355
      %v1404 = vadd.f32 %v969, %v1360
      %v1405 = vadd.f32 %v970, %v1363
      %v1406 = vadd.f32 %v971, %v1368
      %v1407 = vadd.f32 %v972, %v1371
      %v1408 = vadd.f32 %v973, %v1376
      %v1409 = vadd.f32 %v974, %v1379
      %v1410 = vadd.f32 %v975, %v1384
      %v1411 = vadd.f32 %v976, %v1387
      %v1412 = vadd.f32 %v977, %v1392
      %v1413 = vadd.f32 %v978, %v1395
      %v1415 = vshrl.u32 %v1003, 16
      %v1417 = vrot.slane %v1415, 4
      %v1418 = vshll.u32 %v1003, 16
      %v1420 = vrot.slane %v1418, 5
      %v1421 = vor.u32 %v1417, %v1420
      %v1422 = vrot.slane %v1421, 4
      %v1424 = vshll.u32 %v1004, 16
      %v1426 = vrot.slane %v1424, 5
      %v1427 = vsel %vm1011, %v1422, %v1426
      %v1428 = vshrl.u32 %v1004, 16
      %v1430 = vrot.slane %v1428, 4
      %v1431 = vor.u32 %v1430, %v1426
      %v1432 = vrot.slane %v1431, 4
      %v1434 = vshll.u32 %v1005, 16
      %v1436 = vrot.slane %v1434, 5
      %v1437 = vsel %vm1011, %v1432, %v1436
      %s1438 = scalar_lea.vmem %s368, 256
      %v1439 = vld [vmem:[%s1438] sm:$0xf]
      %v1440 = vld [vmem:[%s1438 + $0x4] sm:$0xf]
      %v1441 = vld [vmem:[%s1438 + $0x8] sm:$0xf]
      %v1442 = vld [vmem:[%s1438 + $0xc] sm:$0xf]
      %v1443 = vld [vmem:[%s1438 + $0x10] sm:$0xf]
      %v1444 = vld [vmem:[%s1438 + $0x14] sm:$0xf]
      %v1445 = vld [vmem:[%s1438 + $0x18] sm:$0xf]
      %v1446 = vld [vmem:[%s1438 + $0x1c] sm:$0xf]
      %v1447 = vld [vmem:[%s1438 + $0x20] sm:$0xf]
      %v1448 = vld [vmem:[%s1438 + $0x24] sm:$0xf]
      %v1449 = vld [vmem:[%s1438 + $0x28] sm:$0xf]
      %v1450 = vld [vmem:[%s1438 + $0x2c] sm:$0xf]
      %v1451 = vld [vmem:[%s1438 + $0x30] sm:$0xf]
      %v1452 = vld [vmem:[%s1438 + $0x34] sm:$0xf]
      %v1453 = vld [vmem:[%s1438 + $0x38] sm:$0xf]
      %v1454 = vld [vmem:[%s1438 + $0x3c] sm:$0xf]
      %v1455 = vunpack.c.l.b16 %v1427
      %v1456 = vunpack.c.l.b16 %v1437
      %v1457 = vpack.c.b16 %v1456, %v1455
      %v1475 = vunpack.c.l.b16 %v1439
      %v1476 = vunpack.c.l.b16 %v1440
      %v1477 = vunpack.c.l.b16 %v1441
      %v1478 = vunpack.c.l.b16 %v1442
      %v1479 = vunpack.c.l.b16 %v1443
      %v1480 = vunpack.c.l.b16 %v1444
      %v1481 = vunpack.c.l.b16 %v1445
      %v1482 = vunpack.c.l.b16 %v1446
      %v1483 = vunpack.c.l.b16 %v1447
      %v1484 = vunpack.c.l.b16 %v1448
      %v1485 = vunpack.c.l.b16 %v1449
      %v1486 = vunpack.c.l.b16 %v1450
      %v1487 = vunpack.c.l.b16 %v1451
      %v1488 = vunpack.c.l.b16 %v1452
      %v1489 = vunpack.c.l.b16 %v1453
      %v1490 = vunpack.c.l.b16 %v1454
      %v1491 = vpack.c.b16 %v1476, %v1475
      %v1492 = vpack.c.b16 %v1478, %v1477
      %v1493 = vpack.c.b16 %v1480, %v1479
      %v1494 = vpack.c.b16 %v1482, %v1481
      %v1495 = vpack.c.b16 %v1484, %v1483
      %v1496 = vpack.c.b16 %v1486, %v1485
      %v1497 = vpack.c.b16 %v1488, %v1487
      %v1498 = vpack.c.b16 %v1490, %v1489
      %1507 = vmatprep.subr.bf16.mxu0 0
      %1508 = vmatpush1.bf16.msra.mxu0 %v1491
      %1509 = vmatprep.subr.bf16.mxu0 0
      %1510 = vmatpush1.bf16.msra.mxu0 %v1492
      %1511 = vmatprep.subr.bf16.mxu0 0
      %1512 = vmatpush1.bf16.msra.mxu0 %v1493
      %1513 = vmatprep.subr.bf16.mxu0 0
      %1514 = vmatpush1.bf16.msra.mxu0 %v1494
      %1515 = vmatprep.subr.bf16.mxu0 0
      %1516 = vmatpush1.bf16.msra.mxu0 %v1495
      %1517 = vmatprep.subr.bf16.mxu0 0
      %1518 = vmatpush1.bf16.msra.mxu0 %v1496
      %1519 = vmatprep.subr.bf16.mxu0 0
      %1520 = vmatpush1.bf16.msra.mxu0 %v1497
      %1521 = vmatprep.subr.bf16.mxu0 0
      %1522 = vmatpush1.bf16.msra.mxu0 %v1498
      %1523 = vmatprep.subr.bf16.mxu0 0
      %1524 = vmatpush1.bf16.msra.mxu0 0
      %1525 = vmatprep.subr.bf16.mxu0 0
      %1526 = vmatpush1.bf16.msra.mxu0 0
      %1527 = vmatprep.subr.bf16.mxu0 0
      %1528 = vmatpush1.bf16.msra.mxu0 0
      %1529 = vmatprep.subr.bf16.mxu0 0
      %1530 = vmatpush1.bf16.msra.mxu0 0
      %1531 = vmatprep.subr.bf16.mxu0 0
      %1532 = vmatpush1.bf16.msra.mxu0 0
      %1533 = vmatprep.subr.bf16.mxu0 0
      %1534 = vmatpush1.bf16.msra.mxu0 0
      %1535 = vmatprep.subr.bf16.mxu0 0
      %1536 = vmatpush1.bf16.msra.mxu0 0
      %1537 = vmatprep.subr.bf16.mxu0 0
      %1538 = vmatpush1.bf16.msra.mxu0 0
      %1539 = vmatprep.mubr.bf16.mxu0 0
      %1540 = vmatmul.mubr.bf16.gmra.mrb[0].mxu0 %v1238
      %v1541 = vpop.f32.mrb[0].mxu0
      %v1542 = vadd.f32 0.0, %v1541
      %v1543 = vpop.f32.mrb[0].mxu0
      %v1544 = vpop.f32.mrb[0].mxu0
      %v1545 = vadd.f32 0.0, %v1544
      %v1546 = vpop.f32.mrb[0].mxu0
      %1547 = vmatprep.mubr.bf16.mxu0 0
      %1548 = vmatmul.mubr.bf16.gmra.mrb[0].mxu0 %v1239
      %v1549 = vpop.f32.mrb[0].mxu0
      %v1550 = vadd.f32 0.0, %v1549
      %v1551 = vpop.f32.mrb[0].mxu0
      %v1552 = vpop.f32.mrb[0].mxu0
      %v1553 = vadd.f32 0.0, %v1552
      %v1554 = vpop.f32.mrb[0].mxu0
      %1555 = vmatprep.mubr.bf16.mxu0 0
      %1556 = vmatmul.mubr.bf16.gmra.mrb[0].mxu0 %v1240
      %v1557 = vpop.f32.mrb[0].mxu0
      %v1558 = vadd.f32 0.0, %v1557
      %v1559 = vpop.f32.mrb[0].mxu0
      %v1560 = vpop.f32.mrb[0].mxu0
      %v1561 = vadd.f32 0.0, %v1560
      %v1562 = vpop.f32.mrb[0].mxu0
      %1563 = vmatprep.mubr.bf16.mxu0 0
      %1564 = vmatmul.mubr.bf16.gmra.mrb[0].mxu0 %v1241
      %v1565 = vpop.f32.mrb[0].mxu0
      %v1566 = vadd.f32 0.0, %v1565
      %v1567 = vpop.f32.mrb[0].mxu0
      %v1568 = vpop.f32.mrb[0].mxu0
      %v1569 = vadd.f32 0.0, %v1568
      %v1570 = vpop.f32.mrb[0].mxu0
      %1571 = vmatprep.mubr.bf16.mxu0 0
      %1572 = vmatmul.mubr.bf16.gmra.mrb[0].mxu0 %v1242
      %v1573 = vpop.f32.mrb[0].mxu0
      %v1574 = vadd.f32 0.0, %v1573
      %v1575 = vpop.f32.mrb[0].mxu0
      %v1576 = vpop.f32.mrb[0].mxu0
      %v1577 = vadd.f32 0.0, %v1576
      %v1578 = vpop.f32.mrb[0].mxu0
      %1579 = vmatprep.mubr.bf16.mxu0 0
      %1580 = vmatmul.mubr.bf16.gmra.mrb[0].mxu0 %v1243
      %v1581 = vpop.f32.mrb[0].mxu0
      %v1582 = vadd.f32 0.0, %v1581
      %v1583 = vpop.f32.mrb[0].mxu0
      %v1584 = vpop.f32.mrb[0].mxu0
      %v1585 = vadd.f32 0.0, %v1584
      %v1586 = vpop.f32.mrb[0].mxu0
      %1587 = vmatprep.mubr.bf16.mxu0 0
      %1588 = vmatmul.mubr.bf16.gmra.mrb[0].mxu0 %v1244
      %v1589 = vpop.f32.mrb[0].mxu0
      %v1590 = vadd.f32 0.0, %v1589
      %v1591 = vpop.f32.mrb[0].mxu0
      %v1592 = vpop.f32.mrb[0].mxu0
      %v1593 = vadd.f32 0.0, %v1592
      %v1594 = vpop.f32.mrb[0].mxu0
      %1595 = vmatprep.mubr.bf16.mxu0 0
      %1596 = vmatmul.mubr.bf16.gmra.mrb[0].mxu0 %v1457
      %v1597 = vpop.f32.mrb[0].mxu0
      %v1598 = vadd.f32 0.0, %v1597
      %v1599 = vpop.f32.mrb[0].mxu0
      %v1600 = vpop.f32.mrb[0].mxu0
      %v1601 = vadd.f32 0.0, %v1600
      %v1602 = vpop.f32.mrb[0].mxu0
      %1603 = vdwg.mxu0
      %v1604 = vadd.f32 %v1398, %v1542
      %v1605 = vadd.f32 %v1399, %v1545
      %v1606 = vadd.f32 %v1400, %v1550
      %v1607 = vadd.f32 %v1401, %v1553
      %v1608 = vadd.f32 %v1402, %v1558
      %v1609 = vadd.f32 %v1403, %v1561
      %v1610 = vadd.f32 %v1404, %v1566
      %v1611 = vadd.f32 %v1405, %v1569
      %v1612 = vadd.f32 %v1406, %v1574
      %v1613 = vadd.f32 %v1407, %v1577
      %v1614 = vadd.f32 %v1408, %v1582
      %v1615 = vadd.f32 %v1409, %v1585
      %v1616 = vadd.f32 %v1410, %v1590
      %v1617 = vadd.f32 %v1411, %v1593
      %v1618 = vadd.f32 %v1412, %v1598
      %v1619 = vadd.f32 %v1413, %v1601
      %v1621 = vshrl.u32 %v1006, 16
      %v1623 = vrot.slane %v1621, 4
      %v1624 = vshll.u32 %v1006, 16
      %v1626 = vrot.slane %v1624, 5
      %v1627 = vor.u32 %v1623, %v1626
      %v1628 = vrot.slane %v1627, 4
      %v1630 = vshll.u32 %v1007, 16
      %v1632 = vrot.slane %v1630, 5
      %v1633 = vsel %vm1011, %v1628, %v1632
      %v1634 = vshrl.u32 %v1007, 16
      %v1636 = vrot.slane %v1634, 4
      %v1637 = vor.u32 %v1636, %v1632
      %v1638 = vrot.slane %v1637, 4
      %v1640 = vshll.u32 %v1008, 16
      %v1642 = vrot.slane %v1640, 5
      %v1643 = vsel %vm1011, %v1638, %v1642
      %s1644 = scalar_lea.vmem %s368, 448
      %v1645 = vld [vmem:[%s1644] sm:$0xf]
      %v1646 = vld [vmem:[%s1644 + $0x4] sm:$0xf]
      %v1647 = vld [vmem:[%s1644 + $0x8] sm:$0xf]
      %v1648 = vld [vmem:[%s1644 + $0xc] sm:$0xf]
      %v1649 = vld [vmem:[%s1644 + $0x10] sm:$0xf]
      %v1650 = vld [vmem:[%s1644 + $0x14] sm:$0xf]
      %v1651 = vld [vmem:[%s1644 + $0x18] sm:$0xf]
      %v1652 = vld [vmem:[%s1644 + $0x1c] sm:$0xf]
      %v1653 = vld [vmem:[%s1644 + $0x20] sm:$0xf]
      %v1654 = vld [vmem:[%s1644 + $0x24] sm:$0xf]
      %v1655 = vld [vmem:[%s1644 + $0x28] sm:$0xf]
      %v1656 = vld [vmem:[%s1644 + $0x2c] sm:$0xf]
      %v1657 = vld [vmem:[%s1644 + $0x30] sm:$0xf]
      %v1658 = vld [vmem:[%s1644 + $0x34] sm:$0xf]
      %v1659 = vld [vmem:[%s1644 + $0x38] sm:$0xf]
      %v1660 = vld [vmem:[%s1644 + $0x3c] sm:$0xf]
      %v1661 = vunpack.c.l.b16 %v1633
      %v1662 = vunpack.c.l.b16 %v1643
      %v1663 = vpack.c.b16 %v1662, %v1661
      %v1681 = vunpack.c.l.b16 %v1645
      %v1682 = vunpack.c.l.b16 %v1646
      %v1683 = vunpack.c.l.b16 %v1647
      %v1684 = vunpack.c.l.b16 %v1648
      %v1685 = vunpack.c.l.b16 %v1649
      %v1686 = vunpack.c.l.b16 %v1650
      %v1687 = vunpack.c.l.b16 %v1651
      %v1688 = vunpack.c.l.b16 %v1652
      %v1689 = vunpack.c.l.b16 %v1653
      %v1690 = vunpack.c.l.b16 %v1654
      %v1691 = vunpack.c.l.b16 %v1655
      %v1692 = vunpack.c.l.b16 %v1656
      %v1693 = vunpack.c.l.b16 %v1657
      %v1694 = vunpack.c.l.b16 %v1658
      %v1695 = vunpack.c.l.b16 %v1659
      %v1696 = vunpack.c.l.b16 %v1660
      %v1697 = vpack.c.b16 %v1682, %v1681
      %v1698 = vpack.c.b16 %v1684, %v1683
      %v1699 = vpack.c.b16 %v1686, %v1685
      %v1700 = vpack.c.b16 %v1688, %v1687
      %v1701 = vpack.c.b16 %v1690, %v1689
      %v1702 = vpack.c.b16 %v1692, %v1691
      %v1703 = vpack.c.b16 %v1694, %v1693
      %v1704 = vpack.c.b16 %v1696, %v1695
      %1713 = vmatprep.subr.bf16.mxu0 0
      %1714 = vmatpush1.bf16.msra.mxu0 %v1697
      %1715 = vmatprep.subr.bf16.mxu0 0
      %1716 = vmatpush1.bf16.msra.mxu0 %v1698
      %1717 = vmatprep.subr.bf16.mxu0 0
      %1718 = vmatpush1.bf16.msra.mxu0 %v1699
      %1719 = vmatprep.subr.bf16.mxu0 0
      %1720 = vmatpush1.bf16.msra.mxu0 %v1700
      %1721 = vmatprep.subr.bf16.mxu0 0
      %1722 = vmatpush1.bf16.msra.mxu0 %v1701
      %1723 = vmatprep.subr.bf16.mxu0 0
      %1724 = vmatpush1.bf16.msra.mxu0 %v1702
      %1725 = vmatprep.subr.bf16.mxu0 0
      %1726 = vmatpush1.bf16.msra.mxu0 %v1703
      %1727 = vmatprep.subr.bf16.mxu0 0
      %1728 = vmatpush1.bf16.msra.mxu0 %v1704
      %1729 = vmatprep.subr.bf16.mxu0 0
      %1730 = vmatpush1.bf16.msra.mxu0 0
      %1731 = vmatprep.subr.bf16.mxu0 0
      %1732 = vmatpush1.bf16.msra.mxu0 0
      %1733 = vmatprep.subr.bf16.mxu0 0
      %1734 = vmatpush1.bf16.msra.mxu0 0
      %1735 = vmatprep.subr.bf16.mxu0 0
      %1736 = vmatpush1.bf16.msra.mxu0 0
      %1737 = vmatprep.subr.bf16.mxu0 0
      %1738 = vmatpush1.bf16.msra.mxu0 0
      %1739 = vmatprep.subr.bf16.mxu0 0
      %1740 = vmatpush1.bf16.msra.mxu0 0
      %1741 = vmatprep.subr.bf16.mxu0 0
      %1742 = vmatpush1.bf16.msra.mxu0 0
      %1743 = vmatprep.subr.bf16.mxu0 0
      %1744 = vmatpush1.bf16.msra.mxu0 0
      %1745 = vmatprep.mubr.bf16.mxu0 0
      %1746 = vmatmul.mubr.bf16.gmra.mrb[0].mxu0 %v1239
      %v1747 = vpop.f32.mrb[0].mxu0
      %v1748 = vadd.f32 0.0, %v1747
      %v1749 = vpop.f32.mrb[0].mxu0
      %v1750 = vpop.f32.mrb[0].mxu0
      %v1751 = vadd.f32 0.0, %v1750
      %v1752 = vpop.f32.mrb[0].mxu0
      %1753 = vmatprep.mubr.bf16.mxu0 0
      %1754 = vmatmul.mubr.bf16.gmra.mrb[0].mxu0 %v1240
      %v1755 = vpop.f32.mrb[0].mxu0
      %v1756 = vadd.f32 0.0, %v1755
      %v1757 = vpop.f32.mrb[0].mxu0
      %v1758 = vpop.f32.mrb[0].mxu0
      %v1759 = vadd.f32 0.0, %v1758
      %v1760 = vpop.f32.mrb[0].mxu0
      %1761 = vmatprep.mubr.bf16.mxu0 0
      %1762 = vmatmul.mubr.bf16.gmra.mrb[0].mxu0 %v1241
      %v1763 = vpop.f32.mrb[0].mxu0
      %v1764 = vadd.f32 0.0, %v1763
      %v1765 = vpop.f32.mrb[0].mxu0
      %v1766 = vpop.f32.mrb[0].mxu0
      %v1767 = vadd.f32 0.0, %v1766
      %v1768 = vpop.f32.mrb[0].mxu0
      %1769 = vmatprep.mubr.bf16.mxu0 0
      %1770 = vmatmul.mubr.bf16.gmra.mrb[0].mxu0 %v1242
      %v1771 = vpop.f32.mrb[0].mxu0
      %v1772 = vadd.f32 0.0, %v1771
      %v1773 = vpop.f32.mrb[0].mxu0
      %v1774 = vpop.f32.mrb[0].mxu0
      %v1775 = vadd.f32 0.0, %v1774
      %v1776 = vpop.f32.mrb[0].mxu0
      %1777 = vmatprep.mubr.bf16.mxu0 0
      %1778 = vmatmul.mubr.bf16.gmra.mrb[0].mxu0 %v1243
      %v1779 = vpop.f32.mrb[0].mxu0
      %v1780 = vadd.f32 0.0, %v1779
      %v1781 = vpop.f32.mrb[0].mxu0
      %v1782 = vpop.f32.mrb[0].mxu0
      %v1783 = vadd.f32 0.0, %v1782
      %v1784 = vpop.f32.mrb[0].mxu0
      %1785 = vmatprep.mubr.bf16.mxu0 0
      %1786 = vmatmul.mubr.bf16.gmra.mrb[0].mxu0 %v1244
      %v1787 = vpop.f32.mrb[0].mxu0
      %v1788 = vadd.f32 0.0, %v1787
      %v1789 = vpop.f32.mrb[0].mxu0
      %v1790 = vpop.f32.mrb[0].mxu0
      %v1791 = vadd.f32 0.0, %v1790
      %v1792 = vpop.f32.mrb[0].mxu0
      %1793 = vmatprep.mubr.bf16.mxu0 0
      %1794 = vmatmul.mubr.bf16.gmra.mrb[0].mxu0 %v1457
      %v1795 = vpop.f32.mrb[0].mxu0
      %v1796 = vadd.f32 0.0, %v1795
      %v1797 = vpop.f32.mrb[0].mxu0
      %v1798 = vpop.f32.mrb[0].mxu0
      %v1799 = vadd.f32 0.0, %v1798
      %v1800 = vpop.f32.mrb[0].mxu0
      %1801 = vmatprep.mubr.bf16.mxu0 0
      %1802 = vmatmul.mubr.bf16.gmra.mrb[0].mxu0 %v1663
      %v1803 = vpop.f32.mrb[0].mxu0
      %v1804 = vadd.f32 0.0, %v1803
      %v1805 = vpop.f32.mrb[0].mxu0
      %v1806 = vpop.f32.mrb[0].mxu0
      %v1807 = vadd.f32 0.0, %v1806
      %v1808 = vpop.f32.mrb[0].mxu0
      %1809 = vdwg.mxu0
      %v1810 = vadd.f32 %v1604, %v1748
      %v1811 = vadd.f32 %v1605, %v1751
      %v1812 = vadd.f32 %v1606, %v1756
      %v1813 = vadd.f32 %v1607, %v1759
      %v1814 = vadd.f32 %v1608, %v1764
      %v1815 = vadd.f32 %v1609, %v1767
      %v1816 = vadd.f32 %v1610, %v1772
      %v1817 = vadd.f32 %v1611, %v1775
      %v1818 = vadd.f32 %v1612, %v1780
      %v1819 = vadd.f32 %v1613, %v1783
      %v1820 = vadd.f32 %v1614, %v1788
      %v1821 = vadd.f32 %v1615, %v1791
      %v1822 = vadd.f32 %v1616, %v1796
      %v1823 = vadd.f32 %v1617, %v1799
      %v1824 = vadd.f32 %v1618, %v1804
      %v1825 = vadd.f32 %v1619, %v1807
      %v1826 = vld [vmem:[%s397] sm:$0xe]
      %v1827 = vld [vmem:[%s397 + $0xc] sm:$0xe]
      %v1828 = vld [vmem:[%s397 + $0x18] sm:$0xe]
      %v1829 = vld [vmem:[%s397 + $0x24] sm:$0xe]
      %v1830 = vld [vmem:[%s397 + $0x30] sm:$0xe]
      %v1831 = vld [vmem:[%s397 + $0x3c] sm:$0xe]
      %v1832 = vld [vmem:[%s397 + $0x48] sm:$0xe]
      %v1833 = vld [vmem:[%s397 + $0x54] sm:$0xe]
      %v1834 = vld [vmem:[%s397 + $0x60] sm:$0xe]
      %v1835 = vld [vmem:[%s397 + $0x6c] sm:$0xe]
      %vm1860 = vcmask 1042432
      %vm1861 = vcmask 1046532
      %vm1862 = vmor %vm1860, %vm1861
      %v1863 = vrot.slane %v1826, 5
      %v1864 = vrot.slane %v1863, 4
      %v1865 = vrot.slane %v980, 5
      %v1866 = vsel %vm1862, %v1864, %v1865
      %v1867 = vrot.slane %v1865, 4
      %v1868 = vrot.slane %v981, 5
      %v1869 = vsel %vm1862, %v1867, %v1868
      %v1870 = vrot.slane %v1827, 5
      %v1871 = vrot.slane %v1870, 4
      %v1872 = vrot.slane %v983, 5
      %v1873 = vsel %vm1862, %v1871, %v1872
      %v1874 = vrot.slane %v1872, 4
      %v1875 = vrot.slane %v984, 5
      %v1876 = vsel %vm1862, %v1874, %v1875
      %v1877 = vrot.slane %v1828, 5
      %v1878 = vrot.slane %v1877, 4
      %v1879 = vrot.slane %v986, 5
      %v1880 = vsel %vm1862, %v1878, %v1879
      %v1881 = vrot.slane %v1879, 4
      %v1882 = vrot.slane %v987, 5
      %v1883 = vsel %vm1862, %v1881, %v1882
      %v1884 = vrot.slane %v1829, 5
      %v1885 = vrot.slane %v1884, 4
      %v1886 = vrot.slane %v989, 5
      %v1887 = vsel %vm1862, %v1885, %v1886
      %v1888 = vrot.slane %v1886, 4
      %v1889 = vrot.slane %v990, 5
      %v1890 = vsel %vm1862, %v1888, %v1889
      %v1891 = vrot.slane %v1830, 5
      %v1892 = vrot.slane %v1891, 4
      %v1893 = vrot.slane %v992, 5
      %v1894 = vsel %vm1862, %v1892, %v1893
      %v1895 = vrot.slane %v1893, 4
      %v1896 = vrot.slane %v993, 5
      %v1897 = vsel %vm1862, %v1895, %v1896
      %v1898 = vrot.slane %v1831, 5
      %v1899 = vrot.slane %v1898, 4
      %v1900 = vrot.slane %v995, 5
      %v1901 = vsel %vm1862, %v1899, %v1900
      %v1902 = vrot.slane %v1900, 4
      %v1903 = vrot.slane %v996, 5
      %v1904 = vsel %vm1862, %v1902, %v1903
      %v1905 = vrot.slane %v1832, 5
      %v1906 = vrot.slane %v1905, 4
      %v1907 = vrot.slane %v998, 5
      %v1908 = vsel %vm1862, %v1906, %v1907
      %v1909 = vrot.slane %v1907, 4
      %v1910 = vrot.slane %v999, 5
      %v1911 = vsel %vm1862, %v1909, %v1910
      %v1912 = vrot.slane %v1833, 5
      %v1913 = vrot.slane %v1912, 4
      %v1914 = vrot.slane %v1001, 5
      %v1915 = vsel %vm1862, %v1913, %v1914
      %v1916 = vrot.slane %v1914, 4
      %v1917 = vrot.slane %v1002, 5
      %v1918 = vsel %vm1862, %v1916, %v1917
      %s1919 = scalar_lea.vmem %s368, 128
      %v1920 = vld [vmem:[%s1919] sm:$0xf]
      %v1921 = vld [vmem:[%s1919 + $0x4] sm:$0xf]
      %v1922 = vld [vmem:[%s1919 + $0x8] sm:$0xf]
      %v1923 = vld [vmem:[%s1919 + $0xc] sm:$0xf]
      %v1924 = vld [vmem:[%s1919 + $0x10] sm:$0xf]
      %v1925 = vld [vmem:[%s1919 + $0x14] sm:$0xf]
      %v1926 = vld [vmem:[%s1919 + $0x18] sm:$0xf]
      %v1927 = vld [vmem:[%s1919 + $0x1c] sm:$0xf]
      %v1928 = vld [vmem:[%s1919 + $0x20] sm:$0xf]
      %v1929 = vld [vmem:[%s1919 + $0x24] sm:$0xf]
      %v1930 = vld [vmem:[%s1919 + $0x28] sm:$0xf]
      %v1931 = vld [vmem:[%s1919 + $0x2c] sm:$0xf]
      %v1932 = vld [vmem:[%s1919 + $0x30] sm:$0xf]
      %v1933 = vld [vmem:[%s1919 + $0x34] sm:$0xf]
      %v1934 = vld [vmem:[%s1919 + $0x38] sm:$0xf]
      %v1935 = vld [vmem:[%s1919 + $0x3c] sm:$0xf]
      %v1936 = vunpack.c.l.b16 %v1866
      %v1937 = vunpack.c.l.b16 %v1869
      %v1938 = vunpack.c.l.b16 %v1873
      %v1939 = vunpack.c.l.b16 %v1876
      %v1940 = vunpack.c.l.b16 %v1880
      %v1941 = vunpack.c.l.b16 %v1883
      %v1942 = vunpack.c.l.b16 %v1887
      %v1943 = vunpack.c.l.b16 %v1890
      %v1944 = vunpack.c.l.b16 %v1894
      %v1945 = vunpack.c.l.b16 %v1897
      %v1946 = vunpack.c.l.b16 %v1901
      %v1947 = vunpack.c.l.b16 %v1904
      %v1948 = vunpack.c.l.b16 %v1908
      %v1949 = vunpack.c.l.b16 %v1911
      %v1950 = vunpack.c.l.b16 %v1915
      %v1951 = vunpack.c.l.b16 %v1918
      %v1952 = vpack.c.b16 %v1937, %v1936
      %v1953 = vpack.c.b16 %v1939, %v1938
      %v1954 = vpack.c.b16 %v1941, %v1940
      %v1955 = vpack.c.b16 %v1943, %v1942
      %v1956 = vpack.c.b16 %v1945, %v1944
      %v1957 = vpack.c.b16 %v1947, %v1946
      %v1958 = vpack.c.b16 %v1949, %v1948
      %v1959 = vpack.c.b16 %v1951, %v1950
      %v1984 = vunpack.c.l.b16 %v1920
      %v1985 = vunpack.c.l.b16 %v1921
      %v1986 = vunpack.c.l.b16 %v1922
      %v1987 = vunpack.c.l.b16 %v1923
      %v1988 = vunpack.c.l.b16 %v1924
      %v1989 = vunpack.c.l.b16 %v1925
      %v1990 = vunpack.c.l.b16 %v1926
      %v1991 = vunpack.c.l.b16 %v1927
      %v1992 = vunpack.c.l.b16 %v1928
      %v1993 = vunpack.c.l.b16 %v1929
      %v1994 = vunpack.c.l.b16 %v1930
      %v1995 = vunpack.c.l.b16 %v1931
      %v1996 = vunpack.c.l.b16 %v1932
      %v1997 = vunpack.c.l.b16 %v1933
      %v1998 = vunpack.c.l.b16 %v1934
      %v1999 = vunpack.c.l.b16 %v1935
      %v2000 = vpack.c.b16 %v1985, %v1984
      %v2001 = vpack.c.b16 %v1987, %v1986
      %v2002 = vpack.c.b16 %v1989, %v1988
      %v2003 = vpack.c.b16 %v1991, %v1990
      %v2004 = vpack.c.b16 %v1993, %v1992
      %v2005 = vpack.c.b16 %v1995, %v1994
      %v2006 = vpack.c.b16 %v1997, %v1996
      %v2007 = vpack.c.b16 %v1999, %v1998
      %2016 = vmatprep.subr.bf16.mxu0 0
      %2017 = vmatpush1.bf16.msra.mxu0 %v2000
      %2018 = vmatprep.subr.bf16.mxu0 0
      %2019 = vmatpush1.bf16.msra.mxu0 %v2001
      %2020 = vmatprep.subr.bf16.mxu0 0
      %2021 = vmatpush1.bf16.msra.mxu0 %v2002
      %2022 = vmatprep.subr.bf16.mxu0 0
      %2023 = vmatpush1.bf16.msra.mxu0 %v2003
      %2024 = vmatprep.subr.bf16.mxu0 0
      %2025 = vmatpush1.bf16.msra.mxu0 %v2004
      %2026 = vmatprep.subr.bf16.mxu0 0
      %2027 = vmatpush1.bf16.msra.mxu0 %v2005
      %2028 = vmatprep.subr.bf16.mxu0 0
      %2029 = vmatpush1.bf16.msra.mxu0 %v2006
      %2030 = vmatprep.subr.bf16.mxu0 0
      %2031 = vmatpush1.bf16.msra.mxu0 %v2007
      %2032 = vmatprep.subr.bf16.mxu0 0
      %2033 = vmatpush1.bf16.msra.mxu0 0
      %2034 = vmatprep.subr.bf16.mxu0 0
      %2035 = vmatpush1.bf16.msra.mxu0 0
      %2036 = vmatprep.subr.bf16.mxu0 0
      %2037 = vmatpush1.bf16.msra.mxu0 0
      %2038 = vmatprep.subr.bf16.mxu0 0
      %2039 = vmatpush1.bf16.msra.mxu0 0
      %2040 = vmatprep.subr.bf16.mxu0 0
      %2041 = vmatpush1.bf16.msra.mxu0 0
      %2042 = vmatprep.subr.bf16.mxu0 0
      %2043 = vmatpush1.bf16.msra.mxu0 0
      %2044 = vmatprep.subr.bf16.mxu0 0
      %2045 = vmatpush1.bf16.msra.mxu0 0
      %2046 = vmatprep.subr.bf16.mxu0 0
      %2047 = vmatpush1.bf16.msra.mxu0 0
      %2048 = vmatprep.mubr.bf16.mxu0 0
      %2049 = vmatmul.mubr.bf16.gmra.mrb[0].mxu0 %v1952
      %v2050 = vpop.f32.mrb[0].mxu0
      %v2051 = vadd.f32 0.0, %v2050
      %v2052 = vpop.f32.mrb[0].mxu0
      %v2053 = vpop.f32.mrb[0].mxu0
      %v2054 = vadd.f32 0.0, %v2053
      %v2055 = vpop.f32.mrb[0].mxu0
      %2056 = vmatprep.mubr.bf16.mxu0 0
      %2057 = vmatmul.mubr.bf16.gmra.mrb[0].mxu0 %v1953
      %v2058 = vpop.f32.mrb[0].mxu0
      %v2059 = vadd.f32 0.0, %v2058
      %v2060 = vpop.f32.mrb[0].mxu0
      %v2061 = vpop.f32.mrb[0].mxu0
      %v2062 = vadd.f32 0.0, %v2061
      %v2063 = vpop.f32.mrb[0].mxu0
      %2064 = vmatprep.mubr.bf16.mxu0 0
      %2065 = vmatmul.mubr.bf16.gmra.mrb[0].mxu0 %v1954
      %v2066 = vpop.f32.mrb[0].mxu0
      %v2067 = vadd.f32 0.0, %v2066
      %v2068 = vpop.f32.mrb[0].mxu0
      %v2069 = vpop.f32.mrb[0].mxu0
      %v2070 = vadd.f32 0.0, %v2069
      %v2071 = vpop.f32.mrb[0].mxu0
      %2072 = vmatprep.mubr.bf16.mxu0 0
      %2073 = vmatmul.mubr.bf16.gmra.mrb[0].mxu0 %v1955
      %v2074 = vpop.f32.mrb[0].mxu0
      %v2075 = vadd.f32 0.0, %v2074
      %v2076 = vpop.f32.mrb[0].mxu0
      %v2077 = vpop.f32.mrb[0].mxu0
      %v2078 = vadd.f32 0.0, %v2077
      %v2079 = vpop.f32.mrb[0].mxu0
      %2080 = vmatprep.mubr.bf16.mxu0 0
      %2081 = vmatmul.mubr.bf16.gmra.mrb[0].mxu0 %v1956
      %v2082 = vpop.f32.mrb[0].mxu0
      %v2083 = vadd.f32 0.0, %v2082
      %v2084 = vpop.f32.mrb[0].mxu0
      %v2085 = vpop.f32.mrb[0].mxu0
      %v2086 = vadd.f32 0.0, %v2085
      %v2087 = vpop.f32.mrb[0].mxu0
      %2088 = vmatprep.mubr.bf16.mxu0 0
      %2089 = vmatmul.mubr.bf16.gmra.mrb[0].mxu0 %v1957
      %v2090 = vpop.f32.mrb[0].mxu0
      %v2091 = vadd.f32 0.0, %v2090
      %v2092 = vpop.f32.mrb[0].mxu0
      %v2093 = vpop.f32.mrb[0].mxu0
      %v2094 = vadd.f32 0.0, %v2093
      %v2095 = vpop.f32.mrb[0].mxu0
      %2096 = vmatprep.mubr.bf16.mxu0 0
      %2097 = vmatmul.mubr.bf16.gmra.mrb[0].mxu0 %v1958
      %v2098 = vpop.f32.mrb[0].mxu0
      %v2099 = vadd.f32 0.0, %v2098
      %v2100 = vpop.f32.mrb[0].mxu0
      %v2101 = vpop.f32.mrb[0].mxu0
      %v2102 = vadd.f32 0.0, %v2101
      %v2103 = vpop.f32.mrb[0].mxu0
      %2104 = vmatprep.mubr.bf16.mxu0 0
      %2105 = vmatmul.mubr.bf16.gmra.mrb[0].mxu0 %v1959
      %v2106 = vpop.f32.mrb[0].mxu0
      %v2107 = vadd.f32 0.0, %v2106
      %v2108 = vpop.f32.mrb[0].mxu0
      %v2109 = vpop.f32.mrb[0].mxu0
      %v2110 = vadd.f32 0.0, %v2109
      %v2111 = vpop.f32.mrb[0].mxu0
      %2112 = vdwg.mxu0
      %v2113 = vadd.f32 %v1810, %v2051
      %v2114 = vadd.f32 %v1811, %v2054
      %v2115 = vadd.f32 %v1812, %v2059
      %v2116 = vadd.f32 %v1813, %v2062
      %v2117 = vadd.f32 %v1814, %v2067
      %v2118 = vadd.f32 %v1815, %v2070
      %v2119 = vadd.f32 %v1816, %v2075
      %v2120 = vadd.f32 %v1817, %v2078
      %v2121 = vadd.f32 %v1818, %v2083
      %v2122 = vadd.f32 %v1819, %v2086
      %v2123 = vadd.f32 %v1820, %v2091
      %v2124 = vadd.f32 %v1821, %v2094
      %v2125 = vadd.f32 %v1822, %v2099
      %v2126 = vadd.f32 %v1823, %v2102
      %v2127 = vadd.f32 %v1824, %v2107
      %v2128 = vadd.f32 %v1825, %v2110
      %v2132 = vrot.slane %v1834, 5
      %v2133 = vrot.slane %v2132, 4
      %v2134 = vrot.slane %v1004, 5
      %v2135 = vsel %vm1862, %v2133, %v2134
      %v2136 = vrot.slane %v2134, 4
      %v2137 = vrot.slane %v1005, 5
      %v2138 = vsel %vm1862, %v2136, %v2137
      %s2139 = scalar_lea.vmem %s368, 320
      %v2140 = vld [vmem:[%s2139] sm:$0xf]
      %v2141 = vld [vmem:[%s2139 + $0x4] sm:$0xf]
      %v2142 = vld [vmem:[%s2139 + $0x8] sm:$0xf]
      %v2143 = vld [vmem:[%s2139 + $0xc] sm:$0xf]
      %v2144 = vld [vmem:[%s2139 + $0x10] sm:$0xf]
      %v2145 = vld [vmem:[%s2139 + $0x14] sm:$0xf]
      %v2146 = vld [vmem:[%s2139 + $0x18] sm:$0xf]
      %v2147 = vld [vmem:[%s2139 + $0x1c] sm:$0xf]
      %v2148 = vld [vmem:[%s2139 + $0x20] sm:$0xf]
      %v2149 = vld [vmem:[%s2139 + $0x24] sm:$0xf]
      %v2150 = vld [vmem:[%s2139 + $0x28] sm:$0xf]
      %v2151 = vld [vmem:[%s2139 + $0x2c] sm:$0xf]
      %v2152 = vld [vmem:[%s2139 + $0x30] sm:$0xf]
      %v2153 = vld [vmem:[%s2139 + $0x34] sm:$0xf]
      %v2154 = vld [vmem:[%s2139 + $0x38] sm:$0xf]
      %v2155 = vld [vmem:[%s2139 + $0x3c] sm:$0xf]
      %v2156 = vunpack.c.l.b16 %v2135
      %v2157 = vunpack.c.l.b16 %v2138
      %v2158 = vpack.c.b16 %v2157, %v2156
      %v2176 = vunpack.c.l.b16 %v2140
      %v2177 = vunpack.c.l.b16 %v2141
      %v2178 = vunpack.c.l.b16 %v2142
      %v2179 = vunpack.c.l.b16 %v2143
      %v2180 = vunpack.c.l.b16 %v2144
      %v2181 = vunpack.c.l.b16 %v2145
      %v2182 = vunpack.c.l.b16 %v2146
      %v2183 = vunpack.c.l.b16 %v2147
      %v2184 = vunpack.c.l.b16 %v2148
      %v2185 = vunpack.c.l.b16 %v2149
      %v2186 = vunpack.c.l.b16 %v2150
      %v2187 = vunpack.c.l.b16 %v2151
      %v2188 = vunpack.c.l.b16 %v2152
      %v2189 = vunpack.c.l.b16 %v2153
      %v2190 = vunpack.c.l.b16 %v2154
      %v2191 = vunpack.c.l.b16 %v2155
      %v2192 = vpack.c.b16 %v2177, %v2176
      %v2193 = vpack.c.b16 %v2179, %v2178
      %v2194 = vpack.c.b16 %v2181, %v2180
      %v2195 = vpack.c.b16 %v2183, %v2182
      %v2196 = vpack.c.b16 %v2185, %v2184
      %v2197 = vpack.c.b16 %v2187, %v2186
      %v2198 = vpack.c.b16 %v2189, %v2188
      %v2199 = vpack.c.b16 %v2191, %v2190
      %2208 = vmatprep.subr.bf16.mxu0 0
      %2209 = vmatpush1.bf16.msra.mxu0 %v2192
      %2210 = vmatprep.subr.bf16.mxu0 0
      %2211 = vmatpush1.bf16.msra.mxu0 %v2193
      %2212 = vmatprep.subr.bf16.mxu0 0
      %2213 = vmatpush1.bf16.msra.mxu0 %v2194
      %2214 = vmatprep.subr.bf16.mxu0 0
      %2215 = vmatpush1.bf16.msra.mxu0 %v2195
      %2216 = vmatprep.subr.bf16.mxu0 0
      %2217 = vmatpush1.bf16.msra.mxu0 %v2196
      %2218 = vmatprep.subr.bf16.mxu0 0
      %2219 = vmatpush1.bf16.msra.mxu0 %v2197
      %2220 = vmatprep.subr.bf16.mxu0 0
      %2221 = vmatpush1.bf16.msra.mxu0 %v2198
      %2222 = vmatprep.subr.bf16.mxu0 0
      %2223 = vmatpush1.bf16.msra.mxu0 %v2199
      %2224 = vmatprep.subr.bf16.mxu0 0
      %2225 = vmatpush1.bf16.msra.mxu0 0
      %2226 = vmatprep.subr.bf16.mxu0 0
      %2227 = vmatpush1.bf16.msra.mxu0 0
      %2228 = vmatprep.subr.bf16.mxu0 0
      %2229 = vmatpush1.bf16.msra.mxu0 0
      %2230 = vmatprep.subr.bf16.mxu0 0
      %2231 = vmatpush1.bf16.msra.mxu0 0
      %2232 = vmatprep.subr.bf16.mxu0 0
      %2233 = vmatpush1.bf16.msra.mxu0 0
      %2234 = vmatprep.subr.bf16.mxu0 0
      %2235 = vmatpush1.bf16.msra.mxu0 0
      %2236 = vmatprep.subr.bf16.mxu0 0
      %2237 = vmatpush1.bf16.msra.mxu0 0
      %2238 = vmatprep.subr.bf16.mxu0 0
      %2239 = vmatpush1.bf16.msra.mxu0 0
      %2240 = vmatprep.mubr.bf16.mxu0 0
      %2241 = vmatmul.mubr.bf16.gmra.mrb[0].mxu0 %v1953
      %v2242 = vpop.f32.mrb[0].mxu0
      %v2243 = vadd.f32 0.0, %v2242
      %v2244 = vpop.f32.mrb[0].mxu0
      %v2245 = vpop.f32.mrb[0].mxu0
      %v2246 = vadd.f32 0.0, %v2245
      %v2247 = vpop.f32.mrb[0].mxu0
      %2248 = vmatprep.mubr.bf16.mxu0 0
      %2249 = vmatmul.mubr.bf16.gmra.mrb[0].mxu0 %v1954
      %v2250 = vpop.f32.mrb[0].mxu0
      %v2251 = vadd.f32 0.0, %v2250
      %v2252 = vpop.f32.mrb[0].mxu0
      %v2253 = vpop.f32.mrb[0].mxu0
      %v2254 = vadd.f32 0.0, %v2253
      %v2255 = vpop.f32.mrb[0].mxu0
      %2256 = vmatprep.mubr.bf16.mxu0 0
      %2257 = vmatmul.mubr.bf16.gmra.mrb[0].mxu0 %v1955
      %v2258 = vpop.f32.mrb[0].mxu0
      %v2259 = vadd.f32 0.0, %v2258
      %v2260 = vpop.f32.mrb[0].mxu0
      %v2261 = vpop.f32.mrb[0].mxu0
      %v2262 = vadd.f32 0.0, %v2261
      %v2263 = vpop.f32.mrb[0].mxu0
      %2264 = vmatprep.mubr.bf16.mxu0 0
      %2265 = vmatmul.mubr.bf16.gmra.mrb[0].mxu0 %v1956
      %v2266 = vpop.f32.mrb[0].mxu0
      %v2267 = vadd.f32 0.0, %v2266
      %v2268 = vpop.f32.mrb[0].mxu0
      %v2269 = vpop.f32.mrb[0].mxu0
      %v2270 = vadd.f32 0.0, %v2269
      %v2271 = vpop.f32.mrb[0].mxu0
      %2272 = vmatprep.mubr.bf16.mxu0 0
      %2273 = vmatmul.mubr.bf16.gmra.mrb[0].mxu0 %v1957
      %v2274 = vpop.f32.mrb[0].mxu0
      %v2275 = vadd.f32 0.0, %v2274
      %v2276 = vpop.f32.mrb[0].mxu0
      %v2277 = vpop.f32.mrb[0].mxu0
      %v2278 = vadd.f32 0.0, %v2277
      %v2279 = vpop.f32.mrb[0].mxu0
      %2280 = vmatprep.mubr.bf16.mxu0 0
      %2281 = vmatmul.mubr.bf16.gmra.mrb[0].mxu0 %v1958
      %v2282 = vpop.f32.mrb[0].mxu0
      %v2283 = vadd.f32 0.0, %v2282
      %v2284 = vpop.f32.mrb[0].mxu0
      %v2285 = vpop.f32.mrb[0].mxu0
      %v2286 = vadd.f32 0.0, %v2285
      %v2287 = vpop.f32.mrb[0].mxu0
      %2288 = vmatprep.mubr.bf16.mxu0 0
      %2289 = vmatmul.mubr.bf16.gmra.mrb[0].mxu0 %v1959
      %v2290 = vpop.f32.mrb[0].mxu0
      %v2291 = vadd.f32 0.0, %v2290
      %v2292 = vpop.f32.mrb[0].mxu0
      %v2293 = vpop.f32.mrb[0].mxu0
      %v2294 = vadd.f32 0.0, %v2293
      %v2295 = vpop.f32.mrb[0].mxu0
      %2296 = vmatprep.mubr.bf16.mxu0 0
      %2297 = vmatmul.mubr.bf16.gmra.mrb[0].mxu0 %v2158
      %v2298 = vpop.f32.mrb[0].mxu0
      %v2299 = vadd.f32 0.0, %v2298
      %v2300 = vpop.f32.mrb[0].mxu0
      %v2301 = vpop.f32.mrb[0].mxu0
      %v2302 = vadd.f32 0.0, %v2301
      %v2303 = vpop.f32.mrb[0].mxu0
      %2304 = vdwg.mxu0
      %v2305 = vadd.f32 %v2113, %v2243
      %v2306 = vadd.f32 %v2114, %v2246
      %v2307 = vadd.f32 %v2115, %v2251
      %v2308 = vadd.f32 %v2116, %v2254
      %v2309 = vadd.f32 %v2117, %v2259
      %v2310 = vadd.f32 %v2118, %v2262
      %v2311 = vadd.f32 %v2119, %v2267
      %v2312 = vadd.f32 %v2120, %v2270
      %v2313 = vadd.f32 %v2121, %v2275
      %v2314 = vadd.f32 %v2122, %v2278
      %v2315 = vadd.f32 %v2123, %v2283
      %v2316 = vadd.f32 %v2124, %v2286
      %v2317 = vadd.f32 %v2125, %v2291
      %v2318 = vadd.f32 %v2126, %v2294
      %v2319 = vadd.f32 %v2127, %v2299
      %v2320 = vadd.f32 %v2128, %v2302
      %v2324 = vrot.slane %v1835, 5
      %v2325 = vrot.slane %v2324, 4
      %v2326 = vrot.slane %v1007, 5
      %v2327 = vsel %vm1862, %v2325, %v2326
      %v2328 = vrot.slane %v2326, 4
      %v2329 = vrot.slane %v1008, 5
      %v2330 = vsel %vm1862, %v2328, %v2329
      %s2331 = scalar_lea.vmem %s368, 512
      %v2332 = vld [vmem:[%s2331] sm:$0xf]
      %v2333 = vld [vmem:[%s2331 + $0x4] sm:$0xf]
      %v2334 = vld [vmem:[%s2331 + $0x8] sm:$0xf]
      %v2335 = vld [vmem:[%s2331 + $0xc] sm:$0xf]
      %v2336 = vld [vmem:[%s2331 + $0x10] sm:$0xf]
      %v2337 = vld [vmem:[%s2331 + $0x14] sm:$0xf]
      %v2338 = vld [vmem:[%s2331 + $0x18] sm:$0xf]
      %v2339 = vld [vmem:[%s2331 + $0x1c] sm:$0xf]
      %v2340 = vld [vmem:[%s2331 + $0x20] sm:$0xf]
      %v2341 = vld [vmem:[%s2331 + $0x24] sm:$0xf]
      %v2342 = vld [vmem:[%s2331 + $0x28] sm:$0xf]
      %v2343 = vld [vmem:[%s2331 + $0x2c] sm:$0xf]
      %v2344 = vld [vmem:[%s2331 + $0x30] sm:$0xf]
      %v2345 = vld [vmem:[%s2331 + $0x34] sm:$0xf]
      %v2346 = vld [vmem:[%s2331 + $0x38] sm:$0xf]
      %v2347 = vld [vmem:[%s2331 + $0x3c] sm:$0xf]
      %v2348 = vunpack.c.l.b16 %v2327
      %v2349 = vunpack.c.l.b16 %v2330
      %v2350 = vpack.c.b16 %v2349, %v2348
      %v2368 = vunpack.c.l.b16 %v2332
      %v2369 = vunpack.c.l.b16 %v2333
      %v2370 = vunpack.c.l.b16 %v2334
      %v2371 = vunpack.c.l.b16 %v2335
      %v2372 = vunpack.c.l.b16 %v2336
      %v2373 = vunpack.c.l.b16 %v2337
      %v2374 = vunpack.c.l.b16 %v2338
      %v2375 = vunpack.c.l.b16 %v2339
      %v2376 = vunpack.c.l.b16 %v2340
      %v2377 = vunpack.c.l.b16 %v2341
      %v2378 = vunpack.c.l.b16 %v2342
      %v2379 = vunpack.c.l.b16 %v2343
      %v2380 = vunpack.c.l.b16 %v2344
      %v2381 = vunpack.c.l.b16 %v2345
      %v2382 = vunpack.c.l.b16 %v2346
      %v2383 = vunpack.c.l.b16 %v2347
      %v2384 = vpack.c.b16 %v2369, %v2368
      %v2385 = vpack.c.b16 %v2371, %v2370
      %v2386 = vpack.c.b16 %v2373, %v2372
      %v2387 = vpack.c.b16 %v2375, %v2374
      %v2388 = vpack.c.b16 %v2377, %v2376
      %v2389 = vpack.c.b16 %v2379, %v2378
      %v2390 = vpack.c.b16 %v2381, %v2380
      %v2391 = vpack.c.b16 %v2383, %v2382
      %2400 = vmatprep.subr.bf16.mxu0 0
      %2401 = vmatpush1.bf16.msra.mxu0 %v2384
      %2402 = vmatprep.subr.bf16.mxu0 0
      %2403 = vmatpush1.bf16.msra.mxu0 %v2385
      %2404 = vmatprep.subr.bf16.mxu0 0
      %2405 = vmatpush1.bf16.msra.mxu0 %v2386
      %2406 = vmatprep.subr.bf16.mxu0 0
      %2407 = vmatpush1.bf16.msra.mxu0 %v2387
      %2408 = vmatprep.subr.bf16.mxu0 0
      %2409 = vmatpush1.bf16.msra.mxu0 %v2388
      %2410 = vmatprep.subr.bf16.mxu0 0
      %2411 = vmatpush1.bf16.msra.mxu0 %v2389
      %2412 = vmatprep.subr.bf16.mxu0 0
      %2413 = vmatpush1.bf16.msra.mxu0 %v2390
      %2414 = vmatprep.subr.bf16.mxu0 0
      %2415 = vmatpush1.bf16.msra.mxu0 %v2391
      %2416 = vmatprep.subr.bf16.mxu0 0
      %2417 = vmatpush1.bf16.msra.mxu0 0
      %2418 = vmatprep.subr.bf16.mxu0 0
      %2419 = vmatpush1.bf16.msra.mxu0 0
      %2420 = vmatprep.subr.bf16.mxu0 0
      %2421 = vmatpush1.bf16.msra.mxu0 0
      %2422 = vmatprep.subr.bf16.mxu0 0
      %2423 = vmatpush1.bf16.msra.mxu0 0
      %2424 = vmatprep.subr.bf16.mxu0 0
      %2425 = vmatpush1.bf16.msra.mxu0 0
      %2426 = vmatprep.subr.bf16.mxu0 0
      %2427 = vmatpush1.bf16.msra.mxu0 0
      %2428 = vmatprep.subr.bf16.mxu0 0
      %2429 = vmatpush1.bf16.msra.mxu0 0
      %2430 = vmatprep.subr.bf16.mxu0 0
      %2431 = vmatpush1.bf16.msra.mxu0 0
      %2432 = vmatprep.mubr.bf16.mxu0 0
      %2433 = vmatmul.mubr.bf16.gmra.mrb[0].mxu0 %v1954
      %v2434 = vpop.f32.mrb[0].mxu0
      %v2435 = vadd.f32 0.0, %v2434
      %v2436 = vpop.f32.mrb[0].mxu0
      %v2437 = vpop.f32.mrb[0].mxu0
      %v2438 = vadd.f32 0.0, %v2437
      %v2439 = vpop.f32.mrb[0].mxu0
      %2440 = vmatprep.mubr.bf16.mxu0 0
      %2441 = vmatmul.mubr.bf16.gmra.mrb[0].mxu0 %v1955
      %v2442 = vpop.f32.mrb[0].mxu0
      %v2443 = vadd.f32 0.0, %v2442
      %v2444 = vpop.f32.mrb[0].mxu0
      %v2445 = vpop.f32.mrb[0].mxu0
      %v2446 = vadd.f32 0.0, %v2445
      %v2447 = vpop.f32.mrb[0].mxu0
      %2448 = vmatprep.mubr.bf16.mxu0 0
      %2449 = vmatmul.mubr.bf16.gmra.mrb[0].mxu0 %v1956
      %v2450 = vpop.f32.mrb[0].mxu0
      %v2451 = vadd.f32 0.0, %v2450
      %v2452 = vpop.f32.mrb[0].mxu0
      %v2453 = vpop.f32.mrb[0].mxu0
      %v2454 = vadd.f32 0.0, %v2453
      %v2455 = vpop.f32.mrb[0].mxu0
      %2456 = vmatprep.mubr.bf16.mxu0 0
      %2457 = vmatmul.mubr.bf16.gmra.mrb[0].mxu0 %v1957
      %v2458 = vpop.f32.mrb[0].mxu0
      %v2459 = vadd.f32 0.0, %v2458
      %v2460 = vpop.f32.mrb[0].mxu0
      %v2461 = vpop.f32.mrb[0].mxu0
      %v2462 = vadd.f32 0.0, %v2461
      %v2463 = vpop.f32.mrb[0].mxu0
      %2464 = vmatprep.mubr.bf16.mxu0 0
      %2465 = vmatmul.mubr.bf16.gmra.mrb[0].mxu0 %v1958
      %v2466 = vpop.f32.mrb[0].mxu0
      %v2467 = vadd.f32 0.0, %v2466
      %v2468 = vpop.f32.mrb[0].mxu0
      %v2469 = vpop.f32.mrb[0].mxu0
      %v2470 = vadd.f32 0.0, %v2469
      %v2471 = vpop.f32.mrb[0].mxu0
      %2472 = vmatprep.mubr.bf16.mxu0 0
      %2473 = vmatmul.mubr.bf16.gmra.mrb[0].mxu0 %v1959
      %v2474 = vpop.f32.mrb[0].mxu0
      %v2475 = vadd.f32 0.0, %v2474
      %v2476 = vpop.f32.mrb[0].mxu0
      %v2477 = vpop.f32.mrb[0].mxu0
      %v2478 = vadd.f32 0.0, %v2477
      %v2479 = vpop.f32.mrb[0].mxu0
      %2480 = vmatprep.mubr.bf16.mxu0 0
      %2481 = vmatmul.mubr.bf16.gmra.mrb[0].mxu0 %v2158
      %v2482 = vpop.f32.mrb[0].mxu0
      %v2483 = vadd.f32 0.0, %v2482
      %v2484 = vpop.f32.mrb[0].mxu0
      %v2485 = vpop.f32.mrb[0].mxu0
      %v2486 = vadd.f32 0.0, %v2485
      %v2487 = vpop.f32.mrb[0].mxu0
      %2488 = vmatprep.mubr.bf16.mxu0 0
      %2489 = vmatmul.mubr.bf16.gmra.mrb[0].mxu0 %v2350
      %v2490 = vpop.f32.mrb[0].mxu0
      %v2491 = vadd.f32 0.0, %v2490
      %v2492 = vpop.f32.mrb[0].mxu0
      %v2493 = vpop.f32.mrb[0].mxu0
      %v2494 = vadd.f32 0.0, %v2493
      %v2495 = vpop.f32.mrb[0].mxu0
      %2496 = vdwg.mxu0
      %v2497 = vadd.f32 %v2305, %v2435
      %v2498 = vadd.f32 %v2306, %v2438
      %v2499 = vadd.f32 %v2307, %v2443
      %v2500 = vadd.f32 %v2308, %v2446
      %v2501 = vadd.f32 %v2309, %v2451
      %v2502 = vadd.f32 %v2310, %v2454
      %v2503 = vadd.f32 %v2311, %v2459
      %v2504 = vadd.f32 %v2312, %v2462
      %v2505 = vadd.f32 %v2313, %v2467
      %v2506 = vadd.f32 %v2314, %v2470
      %v2507 = vadd.f32 %v2315, %v2475
      %v2508 = vadd.f32 %v2316, %v2478
      %v2509 = vadd.f32 %v2317, %v2483
      %v2510 = vadd.f32 %v2318, %v2486
      %v2511 = vadd.f32 %v2319, %v2491
      %v2512 = vadd.f32 %v2320, %v2494
      %v2513 = vld [vmem:[%s363] sm:$0xf]
      %v2514 = vld [vmem:[%s363 + $0x4] sm:$0xf]
      %v2515 = vld [vmem:[%s363 + $0x8] sm:$0xf]
      %v2516 = vld [vmem:[%s363 + $0xc] sm:$0xf]
      %v2517 = vld [vmem:[%s363 + $0x10] sm:$0xf]
      %v2518 = vld [vmem:[%s363 + $0x14] sm:$0xf]
      %v2519 = vld [vmem:[%s363 + $0x18] sm:$0xf]
      %v2520 = vld [vmem:[%s363 + $0x1c] sm:$0xf]
      %v2521 = vld [vmem:[%s363 + $0x20] sm:$0xf]
      %v2522 = vld [vmem:[%s363 + $0x24] sm:$0xf]
      %v2523 = vld [vmem:[%s363 + $0x28] sm:$0xf]
      %v2524 = vld [vmem:[%s363 + $0x2c] sm:$0xf]
      %v2525 = vld [vmem:[%s363 + $0x30] sm:$0xf]
      %v2526 = vld [vmem:[%s363 + $0x34] sm:$0xf]
      %v2527 = vld [vmem:[%s363 + $0x38] sm:$0xf]
      %v2528 = vld [vmem:[%s363 + $0x3c] sm:$0xf]
      %v2529 = vld [vmem:[%s372] sm:$0xf]
      %v2530 = vld [vmem:[%s372 + $0x4] sm:$0xf]
      %v2531 = vld [vmem:[%s372 + $0x8] sm:$0xf]
      %v2532 = vld [vmem:[%s372 + $0xc] sm:$0xf]
      %v2533 = vld [vmem:[%s372 + $0x10] sm:$0xf]
      %v2534 = vld [vmem:[%s372 + $0x14] sm:$0xf]
      %v2535 = vld [vmem:[%s372 + $0x18] sm:$0xf]
      %v2536 = vld [vmem:[%s372 + $0x1c] sm:$0xf]
      %v2537 = vld [vmem:[%s372 + $0x20] sm:$0xf]
      %v2538 = vld [vmem:[%s372 + $0x24] sm:$0xf]
      %v2539 = vld [vmem:[%s372 + $0x28] sm:$0xf]
      %v2540 = vld [vmem:[%s372 + $0x2c] sm:$0xf]
      %v2541 = vld [vmem:[%s372 + $0x30] sm:$0xf]
      %v2542 = vld [vmem:[%s372 + $0x34] sm:$0xf]
      %v2543 = vld [vmem:[%s372 + $0x38] sm:$0xf]
      %v2544 = vld [vmem:[%s372 + $0x3c] sm:$0xf]
      %v2561 = vunpack.c.l.b16 %v2513
      %v2562 = vunpack.c.l.b16 %v2514
      %v2563 = vunpack.c.l.b16 %v2515
      %v2564 = vunpack.c.l.b16 %v2516
      %v2565 = vunpack.c.l.b16 %v2517
      %v2566 = vunpack.c.l.b16 %v2518
      %v2567 = vunpack.c.l.b16 %v2519
      %v2568 = vunpack.c.l.b16 %v2520
      %v2569 = vunpack.c.l.b16 %v2521
      %v2570 = vunpack.c.l.b16 %v2522
      %v2571 = vunpack.c.l.b16 %v2523
      %v2572 = vunpack.c.l.b16 %v2524
      %v2573 = vunpack.c.l.b16 %v2525
      %v2574 = vunpack.c.l.b16 %v2526
      %v2575 = vunpack.c.l.b16 %v2527
      %v2576 = vunpack.c.l.b16 %v2528
      %v2577 = vpack.c.b16 %v2562, %v2561
      %v2578 = vpack.c.b16 %v2564, %v2563
      %v2579 = vpack.c.b16 %v2566, %v2565
      %v2580 = vpack.c.b16 %v2568, %v2567
      %v2581 = vpack.c.b16 %v2570, %v2569
      %v2582 = vpack.c.b16 %v2572, %v2571
      %v2583 = vpack.c.b16 %v2574, %v2573
      %v2584 = vpack.c.b16 %v2576, %v2575
      %v2609 = vunpack.c.l.b16 %v2529
      %v2610 = vunpack.c.l.b16 %v2530
      %v2611 = vunpack.c.l.b16 %v2531
      %v2612 = vunpack.c.l.b16 %v2532
      %v2613 = vunpack.c.l.b16 %v2533
      %v2614 = vunpack.c.l.b16 %v2534
      %v2615 = vunpack.c.l.b16 %v2535
      %v2616 = vunpack.c.l.b16 %v2536
      %v2617 = vunpack.c.l.b16 %v2537
      %v2618 = vunpack.c.l.b16 %v2538
      %v2619 = vunpack.c.l.b16 %v2539
      %v2620 = vunpack.c.l.b16 %v2540
      %v2621 = vunpack.c.l.b16 %v2541
      %v2622 = vunpack.c.l.b16 %v2542
      %v2623 = vunpack.c.l.b16 %v2543
      %v2624 = vunpack.c.l.b16 %v2544
      %v2625 = vpack.c.b16 %v2610, %v2609
      %v2626 = vpack.c.b16 %v2612, %v2611
      %v2627 = vpack.c.b16 %v2614, %v2613
      %v2628 = vpack.c.b16 %v2616, %v2615
      %v2629 = vpack.c.b16 %v2618, %v2617
      %v2630 = vpack.c.b16 %v2620, %v2619
      %v2631 = vpack.c.b16 %v2622, %v2621
      %v2632 = vpack.c.b16 %v2624, %v2623
      %2641 = vmatprep.subr.bf16.mxu0 0
      %2642 = vmatpush1.bf16.msra.mxu0 %v2625
      %2643 = vmatprep.subr.bf16.mxu0 0
      %2644 = vmatpush1.bf16.msra.mxu0 %v2626
      %2645 = vmatprep.subr.bf16.mxu0 0
      %2646 = vmatpush1.bf16.msra.mxu0 %v2627
      %2647 = vmatprep.subr.bf16.mxu0 0
      %2648 = vmatpush1.bf16.msra.mxu0 %v2628
      %2649 = vmatprep.subr.bf16.mxu0 0
      %2650 = vmatpush1.bf16.msra.mxu0 %v2629
      %2651 = vmatprep.subr.bf16.mxu0 0
      %2652 = vmatpush1.bf16.msra.mxu0 %v2630
      %2653 = vmatprep.subr.bf16.mxu0 0
      %2654 = vmatpush1.bf16.msra.mxu0 %v2631
      %2655 = vmatprep.subr.bf16.mxu0 0
      %2656 = vmatpush1.bf16.msra.mxu0 %v2632
      %2657 = vmatprep.subr.bf16.mxu0 0
      %2658 = vmatpush1.bf16.msra.mxu0 0
      %2659 = vmatprep.subr.bf16.mxu0 0
      %2660 = vmatpush1.bf16.msra.mxu0 0
      %2661 = vmatprep.subr.bf16.mxu0 0
      %2662 = vmatpush1.bf16.msra.mxu0 0
      %2663 = vmatprep.subr.bf16.mxu0 0
      %2664 = vmatpush1.bf16.msra.mxu0 0
      %2665 = vmatprep.subr.bf16.mxu0 0
      %2666 = vmatpush1.bf16.msra.mxu0 0
      %2667 = vmatprep.subr.bf16.mxu0 0
      %2668 = vmatpush1.bf16.msra.mxu0 0
      %2669 = vmatprep.subr.bf16.mxu0 0
      %2670 = vmatpush1.bf16.msra.mxu0 0
      %2671 = vmatprep.subr.bf16.mxu0 0
      %2672 = vmatpush1.bf16.msra.mxu0 0
      %2673 = vmatprep.mubr.bf16.mxu0 0
      %2674 = vmatmul.mubr.bf16.gmra.mrb[0].mxu0 %v2577
      %v2675 = vpop.f32.mrb[0].mxu0
      %v2676 = vadd.f32 0.0, %v2675
      %v2677 = vpop.f32.mrb[0].mxu0
      %v2678 = vpop.f32.mrb[0].mxu0
      %v2679 = vadd.f32 0.0, %v2678
      %v2680 = vpop.f32.mrb[0].mxu0
      %2681 = vmatprep.mubr.bf16.mxu0 0
      %2682 = vmatmul.mubr.bf16.gmra.mrb[0].mxu0 %v2578
      %v2683 = vpop.f32.mrb[0].mxu0
      %v2684 = vadd.f32 0.0, %v2683
      %v2685 = vpop.f32.mrb[0].mxu0
      %v2686 = vpop.f32.mrb[0].mxu0
      %v2687 = vadd.f32 0.0, %v2686
      %v2688 = vpop.f32.mrb[0].mxu0
      %2689 = vmatprep.mubr.bf16.mxu0 0
      %2690 = vmatmul.mubr.bf16.gmra.mrb[0].mxu0 %v2579
      %v2691 = vpop.f32.mrb[0].mxu0
      %v2692 = vadd.f32 0.0, %v2691
      %v2693 = vpop.f32.mrb[0].mxu0
      %v2694 = vpop.f32.mrb[0].mxu0
      %v2695 = vadd.f32 0.0, %v2694
      %v2696 = vpop.f32.mrb[0].mxu0
      %2697 = vmatprep.mubr.bf16.mxu0 0
      %2698 = vmatmul.mubr.bf16.gmra.mrb[0].mxu0 %v2580
      %v2699 = vpop.f32.mrb[0].mxu0
      %v2700 = vadd.f32 0.0, %v2699
      %v2701 = vpop.f32.mrb[0].mxu0
      %v2702 = vpop.f32.mrb[0].mxu0
      %v2703 = vadd.f32 0.0, %v2702
      %v2704 = vpop.f32.mrb[0].mxu0
      %2705 = vmatprep.mubr.bf16.mxu0 0
      %2706 = vmatmul.mubr.bf16.gmra.mrb[0].mxu0 %v2581
      %v2707 = vpop.f32.mrb[0].mxu0
      %v2708 = vadd.f32 0.0, %v2707
      %v2709 = vpop.f32.mrb[0].mxu0
      %v2710 = vpop.f32.mrb[0].mxu0
      %v2711 = vadd.f32 0.0, %v2710
      %v2712 = vpop.f32.mrb[0].mxu0
      %2713 = vmatprep.mubr.bf16.mxu0 0
      %2714 = vmatmul.mubr.bf16.gmra.mrb[0].mxu0 %v2582
      %v2715 = vpop.f32.mrb[0].mxu0
      %v2716 = vadd.f32 0.0, %v2715
      %v2717 = vpop.f32.mrb[0].mxu0
      %v2718 = vpop.f32.mrb[0].mxu0
      %v2719 = vadd.f32 0.0, %v2718
      %v2720 = vpop.f32.mrb[0].mxu0
      %2721 = vmatprep.mubr.bf16.mxu0 0
      %2722 = vmatmul.mubr.bf16.gmra.mrb[0].mxu0 %v2583
      %v2723 = vpop.f32.mrb[0].mxu0
      %v2724 = vadd.f32 0.0, %v2723
      %v2725 = vpop.f32.mrb[0].mxu0
      %v2726 = vpop.f32.mrb[0].mxu0
      %v2727 = vadd.f32 0.0, %v2726
      %v2728 = vpop.f32.mrb[0].mxu0
      %2729 = vmatprep.mubr.bf16.mxu0 0
      %2730 = vmatmul.mubr.bf16.gmra.mrb[0].mxu0 %v2584
      %v2731 = vpop.f32.mrb[0].mxu0
      %v2732 = vadd.f32 0.0, %v2731
      %v2733 = vpop.f32.mrb[0].mxu0
      %v2734 = vpop.f32.mrb[0].mxu0
      %v2735 = vadd.f32 0.0, %v2734
      %v2736 = vpop.f32.mrb[0].mxu0
      %2737 = vdwg.mxu0
      %v2738 = vld [vmem:[%s375] sm:$0x1]
      %v2740 = vlaneseq
      %v2741 = vshrl.u32 %v2740, 7
      %v2742 = vsub.s32 0, %v2741
      %v2743 = vrot.slane %v2738, %v2742
      %v2745 = vadd.f32 %v2497, %v2743
      %v2746 = vadd.f32 %v2498, %v2743
      %v2747 = vadd.f32 %v2499, %v2743
      %v2748 = vadd.f32 %v2500, %v2743
      %v2749 = vadd.f32 %v2501, %v2743
      %v2750 = vadd.f32 %v2502, %v2743
      %v2751 = vadd.f32 %v2503, %v2743
      %v2752 = vadd.f32 %v2504, %v2743
      %v2753 = vadd.f32 %v2505, %v2743
      %v2754 = vadd.f32 %v2506, %v2743
      %v2755 = vadd.f32 %v2507, %v2743
      %v2756 = vadd.f32 %v2508, %v2743
      %v2757 = vadd.f32 %v2509, %v2743
      %v2758 = vadd.f32 %v2510, %v2743
      %v2759 = vadd.f32 %v2511, %v2743
      %v2760 = vadd.f32 %v2512, %v2743
      %v2761 = vadd.f32 %v2745, %v2676
      %v2762 = vadd.f32 %v2746, %v2679
      %v2763 = vadd.f32 %v2747, %v2684
      %v2764 = vadd.f32 %v2748, %v2687
      %v2765 = vadd.f32 %v2749, %v2692
      %v2766 = vadd.f32 %v2750, %v2695
      %v2767 = vadd.f32 %v2751, %v2700
      %v2768 = vadd.f32 %v2752, %v2703
      %v2769 = vadd.f32 %v2753, %v2708
      %v2770 = vadd.f32 %v2754, %v2711
      %v2771 = vadd.f32 %v2755, %v2716
      %v2772 = vadd.f32 %v2756, %v2719
      %v2773 = vadd.f32 %v2757, %v2724
      %v2774 = vadd.f32 %v2758, %v2727
      %v2775 = vadd.f32 %v2759, %v2732
      %v2776 = vadd.f32 %v2760, %v2735
      %v2777 = vld [vmem:[%s378] sm:$0x1]
      %v2779 = vlaneseq
      %v2780 = vshrl.u32 %v2779, 7
      %v2781 = vsub.s32 0, %v2780
      %v2782 = vrot.slane %v2777, %v2781
      %v2784 = vadd.f32 %v2761, %v2782
      %v2785 = vadd.f32 %v2762, %v2782
      %v2786 = vadd.f32 %v2763, %v2782
      %v2787 = vadd.f32 %v2764, %v2782
      %v2788 = vadd.f32 %v2765, %v2782
      %v2789 = vadd.f32 %v2766, %v2782
      %v2790 = vadd.f32 %v2767, %v2782
      %v2791 = vadd.f32 %v2768, %v2782
      %v2792 = vadd.f32 %v2769, %v2782
      %v2793 = vadd.f32 %v2770, %v2782
      %v2794 = vadd.f32 %v2771, %v2782
      %v2795 = vadd.f32 %v2772, %v2782
      %v2796 = vadd.f32 %v2773, %v2782
      %v2797 = vadd.f32 %v2774, %v2782
      %v2798 = vadd.f32 %v2775, %v2782
      %v2799 = vadd.f32 %v2776, %v2782
      %2800 = vst [vmem:[%s391] sm:$0xff] %v2784
      %2801 = vst [vmem:[%s391 + $0x8] sm:$0xff] %v2785
      %2802 = vst [vmem:[%s391 + $0x10] sm:$0xff] %v2786
      %2803 = vst [vmem:[%s391 + $0x18] sm:$0xff] %v2787
      %2804 = vst [vmem:[%s391 + $0x20] sm:$0xff] %v2788
      %2805 = vst [vmem:[%s391 + $0x28] sm:$0xff] %v2789
      %2806 = vst [vmem:[%s391 + $0x30] sm:$0xff] %v2790
      %2807 = vst [vmem:[%s391 + $0x38] sm:$0xff] %v2791
      %2808 = vst [vmem:[%s391 + $0x40] sm:$0xff] %v2792
      %2809 = vst [vmem:[%s391 + $0x48] sm:$0xff] %v2793
      %2810 = vst [vmem:[%s391 + $0x50] sm:$0xff] %v2794
      %2811 = vst [vmem:[%s391 + $0x58] sm:$0xff] %v2795
      %2812 = vst [vmem:[%s391 + $0x60] sm:$0xff] %v2796
      %2813 = vst [vmem:[%s391 + $0x68] sm:$0xff] %v2797
      %2814 = vst [vmem:[%s391 + $0x70] sm:$0xff] %v2798
      %2815 = vst [vmem:[%s391 + $0x78] sm:$0xff] %v2799
      %s2816 = smul.u32 8, %s24
      %p2817 = scmp.lt.s32.totalorder %s22, 1
      %s2818 = scalar_select %p2817, %s22, 1
      %p2819 = scmp.lt.s32.totalorder %s2816, 15
      %s2820 = scalar_select %p2819, %s2816, 15
      %p2821 = scmp.lt.s32.totalorder %s23, 0
      %s2822 = scalar_select %p2821, %s23, 0
      %s2823 = smul.addr %s2820, 2
      %s2824 = sadd.s32 %s2822, %s2823
      %s2825 = smul.addr %s2818, 32
      %s2826 = sadd.s32 %s2824, %s2825
      %s2827 = smul.addr %s2826, 8
      %s2828 = scalar_lea.vmem %s6, %s2827
      // Predicated region
      $region45: #{wide_basic_forward.3} parent=43 // pred_check
        %p2829 = pneg %p216
      $region46: #{wide_basic_forward.3} parent=43 // pred_check_branch
        %2831 = sbr.rel (%p2829) target = $region48
      $region47: #{wide_basic_forward.3} parent=43 // pred_region
        %s2832 = smul.u32 8, %s24
      $region48: #{wide_basic_forward.3} parent=43 // pred_fallthru
        _
    $region44: #{wide_basic_forward.3} parent=5 // pred_fallthru
      _
    %p2833 = scmp.le.s32.totalorder 2, %s12
    // Predicated region
    $region49: #{wide_basic_forward.3} parent=5 // pred_check
      %p2834 = pneg %p2833
    $region50: #{wide_basic_forward.3} parent=5 // pred_check_branch
      %2836 = sbr.rel (%p2834) target = $region52
    $region51: #{wide_basic_forward.3} parent=5 // pred_region
      %s2837 = ssub.s32 %s12, 2
      // Predicated region
      $region53: #{wide_basic_forward.3} parent=51 // pred_check
        %p2838 = pneg %p222
      $region54: #{wide_basic_forward.3} parent=51 // pred_check_branch
        %2840 = sbr.rel (%p2838) target = $region56
      $region55: #{wide_basic_forward.3} parent=51 // pred_region
        %s2841 = smul.u32 8, %s27
        %p2842 = scmp.lt.s32.totalorder %s25, 1
        %s2843 = scalar_select %p2842, %s25, 1
        %p2844 = scmp.lt.s32.totalorder %s2841, 15
        %s2845 = scalar_select %p2844, %s2841, 15
        %p2846 = scmp.lt.s32.totalorder %s26, 0
        %s2847 = scalar_select %p2846, %s26, 0
        %s2848 = smul.addr %s2845, 2
        %s2849 = sadd.s32 %s2847, %s2848
        %s2850 = smul.addr %s2843, 32
        %s2851 = sadd.s32 %s2849, %s2850
        %s2852 = smul.addr %s2851, 8
        %s2853 = scalar_lea.vmem %s6, %s2852
      $region56: #{wide_basic_forward.3} parent=51 // pred_fallthru
        _
    $region52: #{wide_basic_forward.3} parent=5 // pred_fallthru
      _
  $region6: #{wide_basic_forward.3} parent=0 // loop_footer
    %s16 = sadd.s32 1, %s12
  $region7: #{wide_basic_forward.3} parent=0 // loop_footer_branch
    %11 = sbr.rel target = $region3
  $region8: #{wide_basic_forward.3} parent=0 // loop_exit
    _

</llo_original>
